<compile_context>
chip_gen: v6e
topology: v6e:2x2x1
jax: 0.10.0
libtpu: 0.0.40
codegen_flags: <defaults>
</compile_context>

<pallas_src>
import functools
import math

import jax
import jax.numpy as jnp
from jax.experimental import pallas as pl
from jax.experimental.pallas import tpu as pltpu


def _location_layer_kernel(x_ref, w_ref, o_ref, *, time_tile, kernel_size):
    """Fused Conv1d(2->F, no bias) -> transpose -> Linear(F->A, no bias).

    x_ref : [1, Tp, C]   zero-padded, time-major input for this batch
    w_ref : [K, C, A]    effective weight  W_eff[k] = Wc[k] @ Wd
    o_ref : [1, TT, A]   output tile (lane-dense, A multiple of 128)
    """
    TT, K = time_tile, kernel_size

    # Sublane-aligned start of this tile's window inside the padded input.
    t0 = pl.multiple_of(pl.program_id(1) * TT, 8)
    x_win = x_ref[0, pl.ds(t0, TT + K - 1), :]            # [TT + K - 1, C]
    w = w_ref[...]                                        # [K, C, A], VMEM-resident

    # Shift-and-matmul 1-D conv, accumulated in f32 on the MXU.
    acc = jnp.dot(x_win[0:TT, :], w[0], preferred_element_type=jnp.float32)
    for k in range(1, K):                                 # static unroll (K ~ 31)
        acc = acc + jnp.dot(x_win[k:k + TT, :], w[k],
                            preferred_element_type=jnp.float32)

    o_ref[0] = acc.astype(o_ref.dtype)


def location_layer(attention_weights_cat, conv_weight, dense_weight, *, time_tile=512):
    """attention_weights_cat: [B, 2, T]; conv_weight: [F, 2, K] (torch Conv1d
    layout); dense_weight: [A, F] (torch Linear layout). Returns [B, T, A]."""
    B, C, T = attention_weights_cat.shape
    F, C2, K = conv_weight.shape
    A, F2 = dense_weight.shape
    assert C == C2 and F == F2 and K % 2 == 1
    pad = (K - 1) // 2

    # Time tile: multiple of 8 sublanes, capped at `time_tile`.
    TT = min(time_tile, T)
    TT = max(8, ((TT + 7) // 8) * 8)
    n_tiles = -(-T // TT)
    T_ceil = n_tiles * TT
    Tp = ((T_ceil + K - 1 + 7) // 8) * 8                  # sublane-aligned padded length

    # Layout plumbing only (no per-element compute): time-major input, zero
    # padding for the conv halo and the tile rounding.
    x = jnp.transpose(attention_weights_cat, (0, 2, 1)).astype(jnp.float32)   # [B, T, C]
    x = jnp.pad(x, ((0, 0), (pad, Tp - T - pad), (0, 0)))                     # [B, Tp, C]

    # Conv and dense are both linear and bias-free -> compose once:
    #   W_eff[k, c, a] = sum_f Wc_torch[f, c, k] * Wd_torch[a, f]
    # Cost is O(K*C*F*A), independent of batch/time; removes a matmul and the
    # [TT, F] intermediate from every kernel tile.
    w_eff = jnp.einsum("fck,af->kca",
                       conv_weight.astype(jnp.float32),
                       dense_weight.astype(jnp.float32))                      # [K, C, A]

    kernel = functools.partial(_location_layer_kernel, time_tile=TT, kernel_size=K)

    flops = int(2 * B * T_ceil * K * C * A)
    bytes_accessed = int(4 * (x.size + w_eff.size + B * T_ceil * A))

    out = pl.pallas_call(
        kernel,
        out_shape=jax.ShapeDtypeStruct((B, T_ceil, A), jnp.float32),
        grid=(B, n_tiles),
        in_specs=[
            pl.BlockSpec((1, Tp, C), lambda b, t: (b, 0, 0)),   # full padded time per batch
            pl.BlockSpec((K, C, A), lambda b, t: (0, 0, 0)),    # effective weight, resident
        ],
        out_specs=pl.BlockSpec((1, TT, A), lambda b, t: (b, t, 0)),
        compiler_params=pltpu.CompilerParams(
            dimension_semantics=("parallel", "parallel")),
        cost_estimate=pl.CostEstimate(
            flops=flops, transcendentals=0, bytes_accessed=bytes_accessed),
    )(x, w_eff)

    if T_ceil != T:
        out = out[:, :T, :]
    return out


def xavier_uniform(key, shape, fan_in, fan_out, gain):
    bound = gain * math.sqrt(6.0 / (fan_in + fan_out))
    return jax.random.uniform(key, shape, jnp.float32, minval=-bound, maxval=bound)


def location_layer_ref(attention_weights_cat, conv_weight, dense_weight):
    """Pure-JAX reference matching the PyTorch module."""
    K = conv_weight.shape[-1]
    pad = (K - 1) // 2
    y = jax.lax.conv_general_dilated(
        attention_weights_cat, conv_weight, window_strides=(1,),
        padding=[(pad, pad)], dimension_numbers=("NCH", "OIH", "NCH"))  # [B, F, T]
    y = jnp.transpose(y, (0, 2, 1))                                     # [B, T, F]
    return jnp.einsum("btf,af->bta", y, dense_weight)                   # [B, T, A]


if __name__ == "__main__":
    key = jax.random.PRNGKey(0)
    k_x, k_wc, k_wd = jax.random.split(key, 3)

    # Small shapes consistent with LocationLayer: batch=2, 2 input channels,
    # seq=64, attention_n_filters=32, attention_kernel_size=31, attention_dim=128.
    B, T = 2, 64
    n_filters, kernel_size, attention_dim = 32, 31, 128

    attention_weights_cat = jax.random.normal(k_x, (B, 2, T), dtype=jnp.float32)
    # ConvNorm init: xavier_uniform, gain('linear') = 1.0, Conv1d weight [F, C, K].
    conv_w = xavier_uniform(k_wc, (n_filters, 2, kernel_size),
                            fan_in=2 * kernel_size, fan_out=n_filters * kernel_size,
                            gain=1.0)
    # LinearNorm init: xavier_uniform, gain('tanh') = 5/3, Linear weight [A, F].
    dense_w = xavier_uniform(k_wd, (attention_dim, n_filters),
                             fan_in=n_filters, fan_out=attention_dim, gain=5.0 / 3.0)

    out = location_layer(attention_weights_cat, conv_w, dense_w)
    out = jax.block_until_ready(out)

    assert out.shape == (B, T, attention_dim), out.shape
    assert bool(jnp.all(jnp.isfinite(out)))

    ref = location_layer_ref(attention_weights_cat, conv_w, dense_w)
    max_err = float(jnp.max(jnp.abs(out - ref)))
    assert jnp.allclose(out, ref, rtol=1e-4, atol=1e-4), max_err

    print("KERNEL_OK")
</pallas_src>

<mosaic_0001>
module attributes {stable_mosaic.version = 11 : i64} {
  func.func @_location_layer_kernel(%arg0: i32, %arg1: i32, %arg2: memref<1x96x2xf32, #tpu.memory_space<vmem>>, %arg3: memref<31x2x128xf32, #tpu.memory_space<vmem>>, %arg4: memref<1x64x128xf32, #tpu.memory_space<vmem>>) attributes {dimension_semantics = [#tpu.dimension_semantics<parallel>, #tpu.dimension_semantics<parallel>], iteration_bounds = array<i64: 2, 1>, scalar_prefetch = 0 : i64, scratch_operands = 0 : i64, tpu.core_type = #tpu.core_type<tc>, window_params = [{transform_indices = @transform_0, window_bounds = array<i64: 1, 96, 2>}, {pipeline_mode = #tpu.pipeline_mode<synchronous>, transform_indices = @transform_1, window_bounds = array<i64: 31, 2, 128>}, {transform_indices = @transform_2, window_bounds = array<i64: 1, 64, 128>}]} {
    %c64_i32 = arith.constant 64 : i32
    %0 = arith.muli %arg1, %c64_i32 : i32
    %1 = tpu.assume_multiple %0, 8 : i32
    %c0 = arith.constant 0 : index
    %2 = arith.index_cast %1 : i32 to index
    %c0_0 = arith.constant 0 : index
    %3 = vector.load %arg2[%c0, %2, %c0_0] : memref<1x96x2xf32, #tpu.memory_space<vmem>>, vector<1x94x2xf32>
    %4 = vector.shape_cast %3 : vector<1x94x2xf32> to vector<94x2xf32>
    %c0_1 = arith.constant 0 : index
    %c0_2 = arith.constant 0 : index
    %c0_3 = arith.constant 0 : index
    %5 = vector.load %arg3[%c0_1, %c0_2, %c0_3] : memref<31x2x128xf32, #tpu.memory_space<vmem>>, vector<31x2x128xf32>
    %6 = vector.extract_strided_slice %4 {offsets = [0, 0], sizes = [64, 2], strides = [1, 1]} : vector<94x2xf32> to vector<64x2xf32>
    %7 = vector.extract_strided_slice %5 {offsets = [0, 0, 0], sizes = [1, 2, 128], strides = [1, 1, 1]} : vector<31x2x128xf32> to vector<1x2x128xf32>
    %8 = vector.shape_cast %7 : vector<1x2x128xf32> to vector<2x128xf32>
    %cst = arith.constant dense<0.000000e+00> : vector<64x128xf32>
    %9 = tpu.matmul %6, %8, %cst {dimension_numbers = #tpu.dot_dimension_numbers<[1], [0], [0], [1], [0, 0, 1, 1], [], []>} : vector<64x2xf32>, vector<2x128xf32>, vector<64x128xf32> -> vector<64x128xf32>
    %10 = vector.extract_strided_slice %4 {offsets = [1, 0], sizes = [64, 2], strides = [1, 1]} : vector<94x2xf32> to vector<64x2xf32>
    %11 = vector.extract_strided_slice %5 {offsets = [1, 0, 0], sizes = [1, 2, 128], strides = [1, 1, 1]} : vector<31x2x128xf32> to vector<1x2x128xf32>
    %12 = vector.shape_cast %11 : vector<1x2x128xf32> to vector<2x128xf32>
    %cst_4 = arith.constant dense<0.000000e+00> : vector<64x128xf32>
    %13 = tpu.matmul %10, %12, %cst_4 {dimension_numbers = #tpu.dot_dimension_numbers<[1], [0], [0], [1], [0, 0, 1, 1], [], []>} : vector<64x2xf32>, vector<2x128xf32>, vector<64x128xf32> -> vector<64x128xf32>
    %14 = arith.addf %9, %13 : vector<64x128xf32>
    %15 = vector.extract_strided_slice %4 {offsets = [2, 0], sizes = [64, 2], strides = [1, 1]} : vector<94x2xf32> to vector<64x2xf32>
    %16 = vector.extract_strided_slice %5 {offsets = [2, 0, 0], sizes = [1, 2, 128], strides = [1, 1, 1]} : vector<31x2x128xf32> to vector<1x2x128xf32>
    %17 = vector.shape_cast %16 : vector<1x2x128xf32> to vector<2x128xf32>
    %cst_5 = arith.constant dense<0.000000e+00> : vector<64x128xf32>
    %18 = tpu.matmul %15, %17, %cst_5 {dimension_numbers = #tpu.dot_dimension_numbers<[1], [0], [0], [1], [0, 0, 1, 1], [], []>} : vector<64x2xf32>, vector<2x128xf32>, vector<64x128xf32> -> vector<64x128xf32>
    %19 = arith.addf %14, %18 : vector<64x128xf32>
    %20 = vector.extract_strided_slice %4 {offsets = [3, 0], sizes = [64, 2], strides = [1, 1]} : vector<94x2xf32> to vector<64x2xf32>
    %21 = vector.extract_strided_slice %5 {offsets = [3, 0, 0], sizes = [1, 2, 128], strides = [1, 1, 1]} : vector<31x2x128xf32> to vector<1x2x128xf32>
    %22 = vector.shape_cast %21 : vector<1x2x128xf32> to vector<2x128xf32>
    %cst_6 = arith.constant dense<0.000000e+00> : vector<64x128xf32>
    %23 = tpu.matmul %20, %22, %cst_6 {dimension_numbers = #tpu.dot_dimension_numbers<[1], [0], [0], [1], [0, 0, 1, 1], [], []>} : vector<64x2xf32>, vector<2x128xf32>, vector<64x128xf32> -> vector<64x128xf32>
    %24 = arith.addf %19, %23 : vector<64x128xf32>
    %25 = vector.extract_strided_slice %4 {offsets = [4, 0], sizes = [64, 2], strides = [1, 1]} : vector<94x2xf32> to vector<64x2xf32>
    %26 = vector.extract_strided_slice %5 {offsets = [4, 0, 0], sizes = [1, 2, 128], strides = [1, 1, 1]} : vector<31x2x128xf32> to vector<1x2x128xf32>
    %27 = vector.shape_cast %26 : vector<1x2x128xf32> to vector<2x128xf32>
    %cst_7 = arith.constant dense<0.000000e+00> : vector<64x128xf32>
    %28 = tpu.matmul %25, %27, %cst_7 {dimension_numbers = #tpu.dot_dimension_numbers<[1], [0], [0], [1], [0, 0, 1, 1], [], []>} : vector<64x2xf32>, vector<2x128xf32>, vector<64x128xf32> -> vector<64x128xf32>
    %29 = arith.addf %24, %28 : vector<64x128xf32>
    %30 = vector.extract_strided_slice %4 {offsets = [5, 0], sizes = [64, 2], strides = [1, 1]} : vector<94x2xf32> to vector<64x2xf32>
    %31 = vector.extract_strided_slice %5 {offsets = [5, 0, 0], sizes = [1, 2, 128], strides = [1, 1, 1]} : vector<31x2x128xf32> to vector<1x2x128xf32>
    %32 = vector.shape_cast %31 : vector<1x2x128xf32> to vector<2x128xf32>
    %cst_8 = arith.constant dense<0.000000e+00> : vector<64x128xf32>
    %33 = tpu.matmul %30, %32, %cst_8 {dimension_numbers = #tpu.dot_dimension_numbers<[1], [0], [0], [1], [0, 0, 1, 1], [], []>} : vector<64x2xf32>, vector<2x128xf32>, vector<64x128xf32> -> vector<64x128xf32>
    %34 = arith.addf %29, %33 : vector<64x128xf32>
    %35 = vector.extract_strided_slice %4 {offsets = [6, 0], sizes = [64, 2], strides = [1, 1]} : vector<94x2xf32> to vector<64x2xf32>
    %36 = vector.extract_strided_slice %5 {offsets = [6, 0, 0], sizes = [1, 2, 128], strides = [1, 1, 1]} : vector<31x2x128xf32> to vector<1x2x128xf32>
    %37 = vector.shape_cast %36 : vector<1x2x128xf32> to vector<2x128xf32>
    %cst_9 = arith.constant dense<0.000000e+00> : vector<64x128xf32>
    %38 = tpu.matmul %35, %37, %cst_9 {dimension_numbers = #tpu.dot_dimension_numbers<[1], [0], [0], [1], [0, 0, 1, 1], [], []>} : vector<64x2xf32>, vector<2x128xf32>, vector<64x128xf32> -> vector<64x128xf32>
    %39 = arith.addf %34, %38 : vector<64x128xf32>
    %40 = vector.extract_strided_slice %4 {offsets = [7, 0], sizes = [64, 2], strides = [1, 1]} : vector<94x2xf32> to vector<64x2xf32>
    %41 = vector.extract_strided_slice %5 {offsets = [7, 0, 0], sizes = [1, 2, 128], strides = [1, 1, 1]} : vector<31x2x128xf32> to vector<1x2x128xf32>
    %42 = vector.shape_cast %41 : vector<1x2x128xf32> to vector<2x128xf32>
    %cst_10 = arith.constant dense<0.000000e+00> : vector<64x128xf32>
    %43 = tpu.matmul %40, %42, %cst_10 {dimension_numbers = #tpu.dot_dimension_numbers<[1], [0], [0], [1], [0, 0, 1, 1], [], []>} : vector<64x2xf32>, vector<2x128xf32>, vector<64x128xf32> -> vector<64x128xf32>
    %44 = arith.addf %39, %43 : vector<64x128xf32>
    %45 = vector.extract_strided_slice %4 {offsets = [8, 0], sizes = [64, 2], strides = [1, 1]} : vector<94x2xf32> to vector<64x2xf32>
    %46 = vector.extract_strided_slice %5 {offsets = [8, 0, 0], sizes = [1, 2, 128], strides = [1, 1, 1]} : vector<31x2x128xf32> to vector<1x2x128xf32>
    %47 = vector.shape_cast %46 : vector<1x2x128xf32> to vector<2x128xf32>
    %cst_11 = arith.constant dense<0.000000e+00> : vector<64x128xf32>
    %48 = tpu.matmul %45, %47, %cst_11 {dimension_numbers = #tpu.dot_dimension_numbers<[1], [0], [0], [1], [0, 0, 1, 1], [], []>} : vector<64x2xf32>, vector<2x128xf32>, vector<64x128xf32> -> vector<64x128xf32>
    %49 = arith.addf %44, %48 : vector<64x128xf32>
    %50 = vector.extract_strided_slice %4 {offsets = [9, 0], sizes = [64, 2], strides = [1, 1]} : vector<94x2xf32> to vector<64x2xf32>
    %51 = vector.extract_strided_slice %5 {offsets = [9, 0, 0], sizes = [1, 2, 128], strides = [1, 1, 1]} : vector<31x2x128xf32> to vector<1x2x128xf32>
    %52 = vector.shape_cast %51 : vector<1x2x128xf32> to vector<2x128xf32>
    %cst_12 = arith.constant dense<0.000000e+00> : vector<64x128xf32>
    %53 = tpu.matmul %50, %52, %cst_12 {dimension_numbers = #tpu.dot_dimension_numbers<[1], [0], [0], [1], [0, 0, 1, 1], [], []>} : vector<64x2xf32>, vector<2x128xf32>, vector<64x128xf32> -> vector<64x128xf32>
    %54 = arith.addf %49, %53 : vector<64x128xf32>
    %55 = vector.extract_strided_slice %4 {offsets = [10, 0], sizes = [64, 2], strides = [1, 1]} : vector<94x2xf32> to vector<64x2xf32>
    %56 = vector.extract_strided_slice %5 {offsets = [10, 0, 0], sizes = [1, 2, 128], strides = [1, 1, 1]} : vector<31x2x128xf32> to vector<1x2x128xf32>
    %57 = vector.shape_cast %56 : vector<1x2x128xf32> to vector<2x128xf32>
    %cst_13 = arith.constant dense<0.000000e+00> : vector<64x128xf32>
    %58 = tpu.matmul %55, %57, %cst_13 {dimension_numbers = #tpu.dot_dimension_numbers<[1], [0], [0], [1], [0, 0, 1, 1], [], []>} : vector<64x2xf32>, vector<2x128xf32>, vector<64x128xf32> -> vector<64x128xf32>
    %59 = arith.addf %54, %58 : vector<64x128xf32>
    %60 = vector.extract_strided_slice %4 {offsets = [11, 0], sizes = [64, 2], strides = [1, 1]} : vector<94x2xf32> to vector<64x2xf32>
    %61 = vector.extract_strided_slice %5 {offsets = [11, 0, 0], sizes = [1, 2, 128], strides = [1, 1, 1]} : vector<31x2x128xf32> to vector<1x2x128xf32>
    %62 = vector.shape_cast %61 : vector<1x2x128xf32> to vector<2x128xf32>
    %cst_14 = arith.constant dense<0.000000e+00> : vector<64x128xf32>
    %63 = tpu.matmul %60, %62, %cst_14 {dimension_numbers = #tpu.dot_dimension_numbers<[1], [0], [0], [1], [0, 0, 1, 1], [], []>} : vector<64x2xf32>, vector<2x128xf32>, vector<64x128xf32> -> vector<64x128xf32>
    %64 = arith.addf %59, %63 : vector<64x128xf32>
    %65 = vector.extract_strided_slice %4 {offsets = [12, 0], sizes = [64, 2], strides = [1, 1]} : vector<94x2xf32> to vector<64x2xf32>
    %66 = vector.extract_strided_slice %5 {offsets = [12, 0, 0], sizes = [1, 2, 128], strides = [1, 1, 1]} : vector<31x2x128xf32> to vector<1x2x128xf32>
    %67 = vector.shape_cast %66 : vector<1x2x128xf32> to vector<2x128xf32>
    %cst_15 = arith.constant dense<0.000000e+00> : vector<64x128xf32>
    %68 = tpu.matmul %65, %67, %cst_15 {dimension_numbers = #tpu.dot_dimension_numbers<[1], [0], [0], [1], [0, 0, 1, 1], [], []>} : vector<64x2xf32>, vector<2x128xf32>, vector<64x128xf32> -> vector<64x128xf32>
    %69 = arith.addf %64, %68 : vector<64x128xf32>
    %70 = vector.extract_strided_slice %4 {offsets = [13, 0], sizes = [64, 2], strides = [1, 1]} : vector<94x2xf32> to vector<64x2xf32>
    %71 = vector.extract_strided_slice %5 {offsets = [13, 0, 0], sizes = [1, 2, 128], strides = [1, 1, 1]} : vector<31x2x128xf32> to vector<1x2x128xf32>
    %72 = vector.shape_cast %71 : vector<1x2x128xf32> to vector<2x128xf32>
    %cst_16 = arith.constant dense<0.000000e+00> : vector<64x128xf32>
    %73 = tpu.matmul %70, %72, %cst_16 {dimension_numbers = #tpu.dot_dimension_numbers<[1], [0], [0], [1], [0, 0, 1, 1], [], []>} : vector<64x2xf32>, vector<2x128xf32>, vector<64x128xf32> -> vector<64x128xf32>
    %74 = arith.addf %69, %73 : vector<64x128xf32>
    %75 = vector.extract_strided_slice %4 {offsets = [14, 0], sizes = [64, 2], strides = [1, 1]} : vector<94x2xf32> to vector<64x2xf32>
    %76 = vector.extract_strided_slice %5 {offsets = [14, 0, 0], sizes = [1, 2, 128], strides = [1, 1, 1]} : vector<31x2x128xf32> to vector<1x2x128xf32>
    %77 = vector.shape_cast %76 : vector<1x2x128xf32> to vector<2x128xf32>
    %cst_17 = arith.constant dense<0.000000e+00> : vector<64x128xf32>
    %78 = tpu.matmul %75, %77, %cst_17 {dimension_numbers = #tpu.dot_dimension_numbers<[1], [0], [0], [1], [0, 0, 1, 1], [], []>} : vector<64x2xf32>, vector<2x128xf32>, vector<64x128xf32> -> vector<64x128xf32>
    %79 = arith.addf %74, %78 : vector<64x128xf32>
    %80 = vector.extract_strided_slice %4 {offsets = [15, 0], sizes = [64, 2], strides = [1, 1]} : vector<94x2xf32> to vector<64x2xf32>
    %81 = vector.extract_strided_slice %5 {offsets = [15, 0, 0], sizes = [1, 2, 128], strides = [1, 1, 1]} : vector<31x2x128xf32> to vector<1x2x128xf32>
    %82 = vector.shape_cast %81 : vector<1x2x128xf32> to vector<2x128xf32>
    %cst_18 = arith.constant dense<0.000000e+00> : vector<64x128xf32>
    %83 = tpu.matmul %80, %82, %cst_18 {dimension_numbers = #tpu.dot_dimension_numbers<[1], [0], [0], [1], [0, 0, 1, 1], [], []>} : vector<64x2xf32>, vector<2x128xf32>, vector<64x128xf32> -> vector<64x128xf32>
    %84 = arith.addf %79, %83 : vector<64x128xf32>
    %85 = vector.extract_strided_slice %4 {offsets = [16, 0], sizes = [64, 2], strides = [1, 1]} : vector<94x2xf32> to vector<64x2xf32>
    %86 = vector.extract_strided_slice %5 {offsets = [16, 0, 0], sizes = [1, 2, 128], strides = [1, 1, 1]} : vector<31x2x128xf32> to vector<1x2x128xf32>
    %87 = vector.shape_cast %86 : vector<1x2x128xf32> to vector<2x128xf32>
    %cst_19 = arith.constant dense<0.000000e+00> : vector<64x128xf32>
    %88 = tpu.matmul %85, %87, %cst_19 {dimension_numbers = #tpu.dot_dimension_numbers<[1], [0], [0], [1], [0, 0, 1, 1], [], []>} : vector<64x2xf32>, vector<2x128xf32>, vector<64x128xf32> -> vector<64x128xf32>
    %89 = arith.addf %84, %88 : vector<64x128xf32>
    %90 = vector.extract_strided_slice %4 {offsets = [17, 0], sizes = [64, 2], strides = [1, 1]} : vector<94x2xf32> to vector<64x2xf32>
    %91 = vector.extract_strided_slice %5 {offsets = [17, 0, 0], sizes = [1, 2, 128], strides = [1, 1, 1]} : vector<31x2x128xf32> to vector<1x2x128xf32>
    %92 = vector.shape_cast %91 : vector<1x2x128xf32> to vector<2x128xf32>
    %cst_20 = arith.constant dense<0.000000e+00> : vector<64x128xf32>
    %93 = tpu.matmul %90, %92, %cst_20 {dimension_numbers = #tpu.dot_dimension_numbers<[1], [0], [0], [1], [0, 0, 1, 1], [], []>} : vector<64x2xf32>, vector<2x128xf32>, vector<64x128xf32> -> vector<64x128xf32>
    %94 = arith.addf %89, %93 : vector<64x128xf32>
    %95 = vector.extract_strided_slice %4 {offsets = [18, 0], sizes = [64, 2], strides = [1, 1]} : vector<94x2xf32> to vector<64x2xf32>
    %96 = vector.extract_strided_slice %5 {offsets = [18, 0, 0], sizes = [1, 2, 128], strides = [1, 1, 1]} : vector<31x2x128xf32> to vector<1x2x128xf32>
    %97 = vector.shape_cast %96 : vector<1x2x128xf32> to vector<2x128xf32>
    %cst_21 = arith.constant dense<0.000000e+00> : vector<64x128xf32>
    %98 = tpu.matmul %95, %97, %cst_21 {dimension_numbers = #tpu.dot_dimension_numbers<[1], [0], [0], [1], [0, 0, 1, 1], [], []>} : vector<64x2xf32>, vector<2x128xf32>, vector<64x128xf32> -> vector<64x128xf32>
    %99 = arith.addf %94, %98 : vector<64x128xf32>
    %100 = vector.extract_strided_slice %4 {offsets = [19, 0], sizes = [64, 2], strides = [1, 1]} : vector<94x2xf32> to vector<64x2xf32>
    %101 = vector.extract_strided_slice %5 {offsets = [19, 0, 0], sizes = [1, 2, 128], strides = [1, 1, 1]} : vector<31x2x128xf32> to vector<1x2x128xf32>
    %102 = vector.shape_cast %101 : vector<1x2x128xf32> to vector<2x128xf32>
    %cst_22 = arith.constant dense<0.000000e+00> : vector<64x128xf32>
    %103 = tpu.matmul %100, %102, %cst_22 {dimension_numbers = #tpu.dot_dimension_numbers<[1], [0], [0], [1], [0, 0, 1, 1], [], []>} : vector<64x2xf32>, vector<2x128xf32>, vector<64x128xf32> -> vector<64x128xf32>
    %104 = arith.addf %99, %103 : vector<64x128xf32>
    %105 = vector.extract_strided_slice %4 {offsets = [20, 0], sizes = [64, 2], strides = [1, 1]} : vector<94x2xf32> to vector<64x2xf32>
    %106 = vector.extract_strided_slice %5 {offsets = [20, 0, 0], sizes = [1, 2, 128], strides = [1, 1, 1]} : vector<31x2x128xf32> to vector<1x2x128xf32>
    %107 = vector.shape_cast %106 : vector<1x2x128xf32> to vector<2x128xf32>
    %cst_23 = arith.constant dense<0.000000e+00> : vector<64x128xf32>
    %108 = tpu.matmul %105, %107, %cst_23 {dimension_numbers = #tpu.dot_dimension_numbers<[1], [0], [0], [1], [0, 0, 1, 1], [], []>} : vector<64x2xf32>, vector<2x128xf32>, vector<64x128xf32> -> vector<64x128xf32>
    %109 = arith.addf %104, %108 : vector<64x128xf32>
    %110 = vector.extract_strided_slice %4 {offsets = [21, 0], sizes = [64, 2], strides = [1, 1]} : vector<94x2xf32> to vector<64x2xf32>
    %111 = vector.extract_strided_slice %5 {offsets = [21, 0, 0], sizes = [1, 2, 128], strides = [1, 1, 1]} : vector<31x2x128xf32> to vector<1x2x128xf32>
    %112 = vector.shape_cast %111 : vector<1x2x128xf32> to vector<2x128xf32>
    %cst_24 = arith.constant dense<0.000000e+00> : vector<64x128xf32>
    %113 = tpu.matmul %110, %112, %cst_24 {dimension_numbers = #tpu.dot_dimension_numbers<[1], [0], [0], [1], [0, 0, 1, 1], [], []>} : vector<64x2xf32>, vector<2x128xf32>, vector<64x128xf32> -> vector<64x128xf32>
    %114 = arith.addf %109, %113 : vector<64x128xf32>
    %115 = vector.extract_strided_slice %4 {offsets = [22, 0], sizes = [64, 2], strides = [1, 1]} : vector<94x2xf32> to vector<64x2xf32>
    %116 = vector.extract_strided_slice %5 {offsets = [22, 0, 0], sizes = [1, 2, 128], strides = [1, 1, 1]} : vector<31x2x128xf32> to vector<1x2x128xf32>
    %117 = vector.shape_cast %116 : vector<1x2x128xf32> to vector<2x128xf32>
    %cst_25 = arith.constant dense<0.000000e+00> : vector<64x128xf32>
    %118 = tpu.matmul %115, %117, %cst_25 {dimension_numbers = #tpu.dot_dimension_numbers<[1], [0], [0], [1], [0, 0, 1, 1], [], []>} : vector<64x2xf32>, vector<2x128xf32>, vector<64x128xf32> -> vector<64x128xf32>
    %119 = arith.addf %114, %118 : vector<64x128xf32>
    %120 = vector.extract_strided_slice %4 {offsets = [23, 0], sizes = [64, 2], strides = [1, 1]} : vector<94x2xf32> to vector<64x2xf32>
    %121 = vector.extract_strided_slice %5 {offsets = [23, 0, 0], sizes = [1, 2, 128], strides = [1, 1, 1]} : vector<31x2x128xf32> to vector<1x2x128xf32>
    %122 = vector.shape_cast %121 : vector<1x2x128xf32> to vector<2x128xf32>
    %cst_26 = arith.constant dense<0.000000e+00> : vector<64x128xf32>
    %123 = tpu.matmul %120, %122, %cst_26 {dimension_numbers = #tpu.dot_dimension_numbers<[1], [0], [0], [1], [0, 0, 1, 1], [], []>} : vector<64x2xf32>, vector<2x128xf32>, vector<64x128xf32> -> vector<64x128xf32>
    %124 = arith.addf %119, %123 : vector<64x128xf32>
    %125 = vector.extract_strided_slice %4 {offsets = [24, 0], sizes = [64, 2], strides = [1, 1]} : vector<94x2xf32> to vector<64x2xf32>
    %126 = vector.extract_strided_slice %5 {offsets = [24, 0, 0], sizes = [1, 2, 128], strides = [1, 1, 1]} : vector<31x2x128xf32> to vector<1x2x128xf32>
    %127 = vector.shape_cast %126 : vector<1x2x128xf32> to vector<2x128xf32>
    %cst_27 = arith.constant dense<0.000000e+00> : vector<64x128xf32>
    %128 = tpu.matmul %125, %127, %cst_27 {dimension_numbers = #tpu.dot_dimension_numbers<[1], [0], [0], [1], [0, 0, 1, 1], [], []>} : vector<64x2xf32>, vector<2x128xf32>, vector<64x128xf32> -> vector<64x128xf32>
    %129 = arith.addf %124, %128 : vector<64x128xf32>
    %130 = vector.extract_strided_slice %4 {offsets = [25, 0], sizes = [64, 2], strides = [1, 1]} : vector<94x2xf32> to vector<64x2xf32>
    %131 = vector.extract_strided_slice %5 {offsets = [25, 0, 0], sizes = [1, 2, 128], strides = [1, 1, 1]} : vector<31x2x128xf32> to vector<1x2x128xf32>
    %132 = vector.shape_cast %131 : vector<1x2x128xf32> to vector<2x128xf32>
    %cst_28 = arith.constant dense<0.000000e+00> : vector<64x128xf32>
    %133 = tpu.matmul %130, %132, %cst_28 {dimension_numbers = #tpu.dot_dimension_numbers<[1], [0], [0], [1], [0, 0, 1, 1], [], []>} : vector<64x2xf32>, vector<2x128xf32>, vector<64x128xf32> -> vector<64x128xf32>
    %134 = arith.addf %129, %133 : vector<64x128xf32>
    %135 = vector.extract_strided_slice %4 {offsets = [26, 0], sizes = [64, 2], strides = [1, 1]} : vector<94x2xf32> to vector<64x2xf32>
    %136 = vector.extract_strided_slice %5 {offsets = [26, 0, 0], sizes = [1, 2, 128], strides = [1, 1, 1]} : vector<31x2x128xf32> to vector<1x2x128xf32>
    %137 = vector.shape_cast %136 : vector<1x2x128xf32> to vector<2x128xf32>
    %cst_29 = arith.constant dense<0.000000e+00> : vector<64x128xf32>
    %138 = tpu.matmul %135, %137, %cst_29 {dimension_numbers = #tpu.dot_dimension_numbers<[1], [0], [0], [1], [0, 0, 1, 1], [], []>} : vector<64x2xf32>, vector<2x128xf32>, vector<64x128xf32> -> vector<64x128xf32>
    %139 = arith.addf %134, %138 : vector<64x128xf32>
    %140 = vector.extract_strided_slice %4 {offsets = [27, 0], sizes = [64, 2], strides = [1, 1]} : vector<94x2xf32> to vector<64x2xf32>
    %141 = vector.extract_strided_slice %5 {offsets = [27, 0, 0], sizes = [1, 2, 128], strides = [1, 1, 1]} : vector<31x2x128xf32> to vector<1x2x128xf32>
    %142 = vector.shape_cast %141 : vector<1x2x128xf32> to vector<2x128xf32>
    %cst_30 = arith.constant dense<0.000000e+00> : vector<64x128xf32>
    %143 = tpu.matmul %140, %142, %cst_30 {dimension_numbers = #tpu.dot_dimension_numbers<[1], [0], [0], [1], [0, 0, 1, 1], [], []>} : vector<64x2xf32>, vector<2x128xf32>, vector<64x128xf32> -> vector<64x128xf32>
    %144 = arith.addf %139, %143 : vector<64x128xf32>
    %145 = vector.extract_strided_slice %4 {offsets = [28, 0], sizes = [64, 2], strides = [1, 1]} : vector<94x2xf32> to vector<64x2xf32>
    %146 = vector.extract_strided_slice %5 {offsets = [28, 0, 0], sizes = [1, 2, 128], strides = [1, 1, 1]} : vector<31x2x128xf32> to vector<1x2x128xf32>
    %147 = vector.shape_cast %146 : vector<1x2x128xf32> to vector<2x128xf32>
    %cst_31 = arith.constant dense<0.000000e+00> : vector<64x128xf32>
    %148 = tpu.matmul %145, %147, %cst_31 {dimension_numbers = #tpu.dot_dimension_numbers<[1], [0], [0], [1], [0, 0, 1, 1], [], []>} : vector<64x2xf32>, vector<2x128xf32>, vector<64x128xf32> -> vector<64x128xf32>
    %149 = arith.addf %144, %148 : vector<64x128xf32>
    %150 = vector.extract_strided_slice %4 {offsets = [29, 0], sizes = [64, 2], strides = [1, 1]} : vector<94x2xf32> to vector<64x2xf32>
    %151 = vector.extract_strided_slice %5 {offsets = [29, 0, 0], sizes = [1, 2, 128], strides = [1, 1, 1]} : vector<31x2x128xf32> to vector<1x2x128xf32>
    %152 = vector.shape_cast %151 : vector<1x2x128xf32> to vector<2x128xf32>
    %cst_32 = arith.constant dense<0.000000e+00> : vector<64x128xf32>
    %153 = tpu.matmul %150, %152, %cst_32 {dimension_numbers = #tpu.dot_dimension_numbers<[1], [0], [0], [1], [0, 0, 1, 1], [], []>} : vector<64x2xf32>, vector<2x128xf32>, vector<64x128xf32> -> vector<64x128xf32>
    %154 = arith.addf %149, %153 : vector<64x128xf32>
    %155 = vector.extract_strided_slice %4 {offsets = [30, 0], sizes = [64, 2], strides = [1, 1]} : vector<94x2xf32> to vector<64x2xf32>
    %156 = vector.extract_strided_slice %5 {offsets = [30, 0, 0], sizes = [1, 2, 128], strides = [1, 1, 1]} : vector<31x2x128xf32> to vector<1x2x128xf32>
    %157 = vector.shape_cast %156 : vector<1x2x128xf32> to vector<2x128xf32>
    %cst_33 = arith.constant dense<0.000000e+00> : vector<64x128xf32>
    %158 = tpu.matmul %155, %157, %cst_33 {dimension_numbers = #tpu.dot_dimension_numbers<[1], [0], [0], [1], [0, 0, 1, 1], [], []>} : vector<64x2xf32>, vector<2x128xf32>, vector<64x128xf32> -> vector<64x128xf32>
    %159 = arith.addf %154, %158 : vector<64x128xf32>
    %c0_34 = arith.constant 0 : index
    %c0_35 = arith.constant 0 : index
    %c0_36 = arith.constant 0 : index
    %160 = vector.load %arg4[%c0_34, %c0_35, %c0_36] : memref<1x64x128xf32, #tpu.memory_space<vmem>>, vector<1x64x128xf32>
    %161 = vector.shape_cast %160 : vector<1x64x128xf32> to vector<64x128xf32>
    %162 = vector.shape_cast %159 : vector<64x128xf32> to vector<1x64x128xf32>
    tpu.vector_store %arg4[%c0_34, %c0_35, %c0_36], %162 {strides = array<i32>} : memref<1x64x128xf32, #tpu.memory_space<vmem>>, vector<1x64x128xf32>,
    return
  }
  func.func @transform_0(%arg0: i32, %arg1: i32) -> (i32, i32, i32) {
    %c0_i32 = arith.constant 0 : i32
    %c0_i32_0 = arith.constant 0 : i32
    %c0_i32_1 = arith.constant 0 : i32
    return %arg0, %c0_i32, %c0_i32_0 : i32, i32, i32
  }
  func.func @transform_1(%arg0: i32, %arg1: i32) -> (i32, i32, i32) {
    %c0_i32 = arith.constant 0 : i32
    %c0_i32_0 = arith.constant 0 : i32
    %c0_i32_1 = arith.constant 0 : i32
    %c0_i32_2 = arith.constant 0 : i32
    return %c0_i32, %c0_i32_0, %c0_i32_1 : i32, i32, i32
  }
  func.func @transform_2(%arg0: i32, %arg1: i32) -> (i32, i32, i32) {
    %c0_i32 = arith.constant 0 : i32
    %c0_i32_0 = arith.constant 0 : i32
    return %arg0, %arg1, %c0_i32 : i32, i32, i32
  }
}

</mosaic_0001>

<llo_original>
// kernel: tpu_custom_call.1
$region0: #{tpu_custom_call.1}
  #allocation0 [shape = 'u32[]', space=smem, size = 0x4, offset = 0x4, fixed_abs, tag = 'smem constant byte address 0x4 - core index']
  #allocation1 [shape = 'u32[144,128]{1,0:T(1,128)}', space=vmem, size = 0x12000, scoped, tag = 'internal scratch']
  %s0 = inlined_call_operand.vmem [shape: f32[2,96,2], index: 0, kind: input, shape index: {}]
  %s1 = inlined_call_operand.vmem [shape: f32[31,2,128], index: 1, kind: input, shape index: {}]
  %s2 = inlined_call_operand.hbm [shape: f32[2,64,128], index: 2, kind: output, shape index: {}]
  %s3 = sld [smem:[#allocation0]]
  $region41: #{tpu_custom_call.1} parent=0
    _
  %s5 = ssub.s32 1, %s3
  %s6 = scalar_select 0, %s5, %s3
  $region1: #{tpu_custom_call.1} parent=0
    #allocation2 [shape = 'u8[65536]{0}', space=vmem, size = 0x10000, scoped, tag = 'output window, operand 0']
    #allocation3 [shape = 's32[2]{0}', space=sflag, size = 0x8, scoped, tag = 'scoped memory for tpu_custom_call.1']
    %7 = vsyncpa [#allocation3], 0
    %s8 = scalar_lea.sflag [#allocation3], 1
    %9 = vsyncpa %s8, 0
    loop: start=0, step=1, limit=4
    $region2: #{tpu_custom_call.1} parent=1 // loop_pre_header
      _
    $region3: #{tpu_custom_call.1} parent=1 // loop_header
      %s11 = sphi 0, %s15
      %p12 = scmp.ge.s32.totalorder %s11, 4
      %s18 = sphi 0, %s30
      %s19 = sphi 0, %s26
      %s20 = sphi 0, %s18
      %s21 = sphi 0, %s19
      %s22 = sphi 0, %s20
      %s23 = sphi 0, %s21
      %s33 = sphi 0, %s35
      %s36 = sphi 0, %s33
      %s37 = sphi 0, %s36
      %s53 = sphi 0, %s37
      %s57 = sphi 0, %s57
      %s59 = sphi 0, %s57
      %s60 = sphi 0, %s59
      %s74 = sphi 0, %s60
      %s82 = sphi 0, %s84
      %s85 = sphi 0, %s82
      %s86 = sphi 0, %s85
      %s102 = sphi 0, %s86
    $region4: #{tpu_custom_call.1} parent=1 // loop_header_branch
      %14 = sbr.rel (%p12) target = $region8
    $region5: #{tpu_custom_call.1} parent=1 // loop_body
      %s16 = ssub.s32 %s11, 1
      %s17 = ssub.s32 %s11, 2
      %s24 = sadd.s32 1, %s19
      %p25 = scmp.ge.s32.totalorder %s24, 1
      %s26 = scalar_select %p25, 0, %s24
      %s27 = sadd.s32 1, %s18
      %s28 = scalar_select %p25, %s27, %s18
      %p29 = scmp.ge.s32.totalorder %s28, 2
      %s30 = scalar_select %p29, 0, %s28
      %s31 = ssub.s32 %s18, %s30
      %p32 = scmp.eq.s32.totalorder %s31, 0
      %s34 = sadd.s32 %s33, 1
      %s35 = scalar_select %p32, %s33, %s34
      %p38 = pneg %p32
      %p39 = scmp.eq.s32.totalorder %s11, 1
      %p40 = por %p38, %p39
      %p41 = scmp.ne.s32.totalorder %s33, %s36
      %p42 = scmp.eq.s32.totalorder %s11, 0
      %p43 = por %p41, %p42
      %p44 = scmp.ne.s32.totalorder %s33, %s36
      %p45 = scmp.eq.s32.totalorder %s16, 1
      %p46 = por %p44, %p45
      %p47 = scmp.ne.s32.totalorder %s36, %s37
      %p48 = scmp.eq.s32.totalorder %s16, 0
      %p49 = por %p47, %p48
      %p50 = scmp.ne.s32.totalorder %s36, %s37
      %p51 = scmp.eq.s32.totalorder %s17, 1
      %p52 = por %p50, %p51
      %p54 = scmp.ne.s32.totalorder %s37, %s53
      %p55 = scmp.eq.s32.totalorder %s17, 0
      %p56 = por %p54, %p55
      %s58 = sadd.s32 %s57, 1
      %p61 = scmp.eq.s32.totalorder %s11, 1
      %p62 = scmp.ne.s32.totalorder %s57, %s59
      %p63 = scmp.eq.s32.totalorder %s11, 0
      %p64 = por %p62, %p63
      %p65 = scmp.ne.s32.totalorder %s57, %s59
      %p66 = scmp.eq.s32.totalorder %s16, 1
      %p67 = por %p65, %p66
      %p68 = scmp.ne.s32.totalorder %s59, %s60
      %p69 = scmp.eq.s32.totalorder %s16, 0
      %p70 = por %p68, %p69
      %p71 = scmp.ne.s32.totalorder %s59, %s60
      %p72 = scmp.eq.s32.totalorder %s17, 1
      %p73 = por %p71, %p72
      %p75 = scmp.ne.s32.totalorder %s60, %s74
      %p76 = scmp.eq.s32.totalorder %s17, 0
      %p77 = por %p75, %p76
      %s78 = ssub.s32 %s18, %s30
      %s79 = ssub.s32 %s19, %s26
      %s80 = sor.u32 %s78, %s79
      %p81 = scmp.eq.s32.totalorder %s80, 0
      %s83 = sadd.s32 %s82, 1
      %s84 = scalar_select %p81, %s82, %s83
      %p87 = pneg %p81
      %p88 = scmp.eq.s32.totalorder %s11, 1
      %p89 = por %p87, %p88
      %p90 = scmp.ne.s32.totalorder %s82, %s85
      %p91 = scmp.eq.s32.totalorder %s11, 0
      %p92 = por %p90, %p91
      %p93 = scmp.ne.s32.totalorder %s82, %s85
      %p94 = scmp.eq.s32.totalorder %s16, 1
      %p95 = por %p93, %p94
      %p96 = scmp.ne.s32.totalorder %s85, %s86
      %p97 = scmp.eq.s32.totalorder %s16, 0
      %p98 = por %p96, %p97
      %p99 = scmp.ne.s32.totalorder %s85, %s86
      %p100 = scmp.eq.s32.totalorder %s17, 1
      %p101 = por %p99, %p100
      %p103 = scmp.ne.s32.totalorder %s86, %s102
      %p104 = scmp.eq.s32.totalorder %s17, 0
      %p105 = por %p103, %p104
      %p106 = scmp.le.s32.totalorder 1, %s11
      %p107 = scmp.lt.s32.totalorder %s11, 3
      %p108 = pnand %p106, %p107
      %p109 = pneg %p108
      // Predicated region
      $region9: #{tpu_custom_call.1} parent=5 // pred_check
        _
      $region10: #{tpu_custom_call.1} parent=5 // pred_check_branch
        %111 = sbr.rel (%p108) target = $region12
      $region11: #{tpu_custom_call.1} parent=5 // pred_region
        %s112 = ssub.s32 %s11, 1
        // Predicated region
        $region13: #{tpu_custom_call.1} parent=11 // pred_check
          %p113 = pneg %p70
        $region14: #{tpu_custom_call.1} parent=11 // pred_check_branch
          %115 = sbr.rel (%p113) target = $region16
        $region15: #{tpu_custom_call.1} parent=11 // pred_region
          _
        $region16: #{tpu_custom_call.1} parent=11 // pred_fallthru
          _
      $region12: #{tpu_custom_call.1} parent=5 // pred_fallthru
        _
      %p116 = scmp.lt.s32.totalorder %s11, 2
      // Predicated region
      $region17: #{tpu_custom_call.1} parent=5 // pred_check
        %p117 = pneg %p116
      $region18: #{tpu_custom_call.1} parent=5 // pred_check_branch
        %119 = sbr.rel (%p117) target = $region20
      $region19: #{tpu_custom_call.1} parent=5 // pred_region
        // Predicated region
        $region21: #{tpu_custom_call.1} parent=19 // pred_check
          %p120 = pneg %p43
        $region22: #{tpu_custom_call.1} parent=19 // pred_check_branch
          %122 = sbr.rel (%p120) target = $region24
        $region23: #{tpu_custom_call.1} parent=19 // pred_region
          %p123 = scmp.lt.s32.totalorder %s18, 1
          %s124 = scalar_select %p123, %s18, 1
          %s125 = smul.addr %s124, 12
          %s126 = smul.addr %s125, 8
          %s127 = scalar_lea.vmem %s0, %s126
        $region24: #{tpu_custom_call.1} parent=19 // pred_fallthru
          _
      $region20: #{tpu_custom_call.1} parent=5 // pred_fallthru
        _
      %p128 = scmp.le.s32.totalorder 1, %s11
      %p129 = scmp.lt.s32.totalorder %s11, 3
      %p130 = pnand %p128, %p129
      %p131 = pneg %p130
      // Predicated region
      $region25: #{tpu_custom_call.1} parent=5 // pred_check
        _
      $region26: #{tpu_custom_call.1} parent=5 // pred_check_branch
        %133 = sbr.rel (%p130) target = $region28
      $region27: #{tpu_custom_call.1} parent=5 // pred_region
        %s134 = ssub.s32 %s11, 1
        %p135 = scmp.lt.s32.totalorder %s20, 1
        %s136 = scalar_select %p135, %s20, 1
        %s137 = smul.addr %s136, 12
        %s138 = smul.addr %s137, 8
        %s139 = scalar_lea.vmem %s0, %s138
        %p140 = pneg %p49
        %p141 = pneg %p46
        %p142 = pneg %p70
        %p143 = pneg %p67
        %p144 = pneg %p98
        %p145 = pneg %p95
        %s146 = sand.u32 %s85, 1
        %s147 = scalar_lea.sflag [#allocation3], %s146
        %s148 = sand.u32 %s85, 1
        %s149 = smul.addr %s148, 64
        %s150 = scalar_lea.vmem [#allocation2], %s149
        %p151 = scmp.lt.s32.totalorder %s20, 1
        %s152 = scalar_select %p151, %s20, 1
        %s153 = smul.addr %s152, 12
        %s154 = smul.addr %s153, 8
        %s155 = scalar_lea.vmem %s0, %s154
        %s156 = smul.u32 8, %s21
        %s157 = smul.u32 %s21, 64
        %s158 = scalar_lea.vmem %s155, %s157
        %v159 = vld [vmem:[%s158] sm:$0xff]
        %v160 = vld [vmem:[%s158 + $0x8] sm:$0xff]
        %v161 = vld [vmem:[%s158 + $0x10] sm:$0xff]
        %v162 = vld [vmem:[%s158 + $0x18] sm:$0xff]
        %v163 = vld [vmem:[%s158 + $0x20] sm:$0xff]
        %v164 = vld [vmem:[%s158 + $0x28] sm:$0xff]
        %v165 = vld [vmem:[%s158 + $0x30] sm:$0xff]
        %v166 = vld [vmem:[%s158 + $0x38] sm:$0xff]
        %v167 = vld [vmem:[%s158 + $0x40] sm:$0xff]
        %v168 = vld [vmem:[%s158 + $0x48] sm:$0xff]
        %v169 = vld [vmem:[%s158 + $0x50] sm:$0xff]
        %v170 = vld [vmem:[%s158 + $0x58] sm:$0x3f]
        %v171 = vld [vmem:[%s1] sm:$0x3]
        %v172 = vld [vmem:[%s1 + $0x2] sm:$0x3]
        %v173 = vld [vmem:[%s1 + $0x4] sm:$0x3]
        %v174 = vld [vmem:[%s1 + $0x6] sm:$0x3]
        %v175 = vld [vmem:[%s1 + $0x8] sm:$0x3]
        %v176 = vld [vmem:[%s1 + $0xa] sm:$0x3]
        %v177 = vld [vmem:[%s1 + $0xc] sm:$0x3]
        %v178 = vld [vmem:[%s1 + $0xe] sm:$0x3]
        %v179 = vld [vmem:[%s1 + $0x10] sm:$0x3]
        %v180 = vld [vmem:[%s1 + $0x12] sm:$0x3]
        %v181 = vld [vmem:[%s1 + $0x14] sm:$0x3]
        %v182 = vld [vmem:[%s1 + $0x16] sm:$0x3]
        %v183 = vld [vmem:[%s1 + $0x18] sm:$0x3]
        %v184 = vld [vmem:[%s1 + $0x1a] sm:$0x3]
        %v185 = vld [vmem:[%s1 + $0x1c] sm:$0x3]
        %v186 = vld [vmem:[%s1 + $0x1e] sm:$0x3]
        %v187 = vld [vmem:[%s1 + $0x20] sm:$0x3]
        %v188 = vld [vmem:[%s1 + $0x22] sm:$0x3]
        %v189 = vld [vmem:[%s1 + $0x24] sm:$0x3]
        %v190 = vld [vmem:[%s1 + $0x26] sm:$0x3]
        %v191 = vld [vmem:[%s1 + $0x28] sm:$0x3]
        %v192 = vld [vmem:[%s1 + $0x2a] sm:$0x3]
        %v193 = vld [vmem:[%s1 + $0x2c] sm:$0x3]
        %v194 = vld [vmem:[%s1 + $0x2e] sm:$0x3]
        %v195 = vld [vmem:[%s1 + $0x30] sm:$0x3]
        %v196 = vld [vmem:[%s1 + $0x32] sm:$0x3]
        %v197 = vld [vmem:[%s1 + $0x34] sm:$0x3]
        %v198 = vld [vmem:[%s1 + $0x36] sm:$0x3]
        %v199 = vld [vmem:[%s1 + $0x38] sm:$0x3]
        %v200 = vld [vmem:[%s1 + $0x3a] sm:$0x3]
        %v201 = vld [vmem:[%s1 + $0x3c] sm:$0x3]
        %vm211 = vcmask 1046528
        %v212 = vrot.slane %v159, 1
        %v213 = vrot.slane %v160, 1
        %v214 = vsel %vm211, %v212, %v213
        %v215 = vrot.slane %v161, 1
        %v216 = vsel %vm211, %v213, %v215
        %v217 = vrot.slane %v162, 1
        %v218 = vsel %vm211, %v215, %v217
        %v219 = vrot.slane %v163, 1
        %v220 = vsel %vm211, %v217, %v219
        %v221 = vrot.slane %v164, 1
        %v222 = vsel %vm211, %v219, %v221
        %v223 = vrot.slane %v165, 1
        %v224 = vsel %vm211, %v221, %v223
        %v225 = vrot.slane %v166, 1
        %v226 = vsel %vm211, %v223, %v225
        %v227 = vrot.slane %v167, 1
        %v228 = vsel %vm211, %v225, %v227
        %vm229 = vcmask 15360
        %v230 = vsel %vm229, %v214, 0
        %v232 = vsel %vm229, %v216, 0
        %v234 = vsel %vm229, %v218, 0
        %v236 = vsel %vm229, %v220, 0
        %v238 = vsel %vm229, %v222, 0
        %v240 = vsel %vm229, %v224, 0
        %v242 = vsel %vm229, %v226, 0
        %v244 = vsel %vm229, %v228, 0
        %vm246 = vcmask 1041408
        %v248 = vsel %vm246, %v172, 0
        %250 = vmatprep.subr.mxu0 0.0
        %251 = vmatpush1.msra.mxu0 0.0
        %252 = vmatprep.subr.mxu0 0.0
        %253 = vmatpush1.msra.mxu0 0.0
        %254 = vmatprep.subr.mxu0 0.0
        %255 = vmatpush1.msra.mxu0 0.0
        %256 = vmatprep.subr.mxu0 0.0
        %257 = vmatpush1.msra.mxu0 0.0
        %258 = vmatprep.subr.mxu0 0.0
        %259 = vmatpush1.msra.mxu0 0.0
        %260 = vmatprep.subr.mxu0 0.0
        %261 = vmatpush1.msra.mxu0 0.0
        %262 = vmatprep.subr.mxu0 0.0
        %263 = vmatpush1.msra.mxu0 0.0
        %264 = vmatprep.subr.mxu0 0.0
        %265 = vmatpush1.msra.mxu0 0.0
        %266 = vmatprep.subr.mxu0 0.0
        %267 = vmatpush1.msra.mxu0 0.0
        %268 = vmatprep.subr.mxu0 0.0
        %269 = vmatpush1.msra.mxu0 0.0
        %270 = vmatprep.subr.mxu0 0.0
        %271 = vmatpush1.msra.mxu0 0.0
        %272 = vmatprep.subr.mxu0 0.0
        %273 = vmatpush1.msra.mxu0 0.0
        %274 = vmatprep.subr.mxu0 0.0
        %275 = vmatpush1.msra.mxu0 0.0
        %276 = vmatprep.subr.mxu0 0.0
        %277 = vmatpush1.msra.mxu0 0.0
        %278 = vmatprep.subr.mxu0 0.0
        %279 = vmatpush1.msra.mxu0 0.0
        %280 = vmatprep.subr.mxu0 0.0
        %281 = vmatpush1.msra.mxu0 %v248
        %282 = vmatprep.subr.mxu0 0.0
        %283 = vmatpush2.msra.mxu0 0.0
        %284 = vmatprep.subr.mxu0 0.0
        %285 = vmatpush2.msra.mxu0 0.0
        %286 = vmatprep.subr.mxu0 0.0
        %287 = vmatpush2.msra.mxu0 0.0
        %288 = vmatprep.subr.mxu0 0.0
        %289 = vmatpush2.msra.mxu0 0.0
        %290 = vmatprep.subr.mxu0 0.0
        %291 = vmatpush2.msra.mxu0 0.0
        %292 = vmatprep.subr.mxu0 0.0
        %293 = vmatpush2.msra.mxu0 0.0
        %294 = vmatprep.subr.mxu0 0.0
        %295 = vmatpush2.msra.mxu0 0.0
        %296 = vmatprep.subr.mxu0 0.0
        %297 = vmatpush2.msra.mxu0 0.0
        %298 = vmatprep.subr.mxu0 0.0
        %299 = vmatpush2.msra.mxu0 0.0
        %300 = vmatprep.subr.mxu0 0.0
        %301 = vmatpush2.msra.mxu0 0.0
        %302 = vmatprep.subr.mxu0 0.0
        %303 = vmatpush2.msra.mxu0 0.0
        %304 = vmatprep.subr.mxu0 0.0
        %305 = vmatpush2.msra.mxu0 0.0
        %306 = vmatprep.subr.mxu0 0.0
        %307 = vmatpush2.msra.mxu0 0.0
        %308 = vmatprep.subr.mxu0 0.0
        %309 = vmatpush2.msra.mxu0 0.0
        %310 = vmatprep.subr.mxu0 0.0
        %311 = vmatpush2.msra.mxu0 0.0
        %312 = vmatprep.subr.mxu0 0.0
        %313 = vmatpush2.msra.mxu0 0.0
        %314 = vmatprep.mubr.f32.mxu0 0.0
        %315 = vmatmul.mubr.f32.gmra.mxu0 %v230
        %v316 = vpop.f32.mrf.mxu0
        %v317 = vadd.f32 0.0, %v316
        %v318 = vpop.f32.mrf.mxu0
        %319 = vmatprep.mubr.f32.mxu0 0.0
        %320 = vmatmul.mubr.f32.gmra.mxu0 %v232
        %v321 = vpop.f32.mrf.mxu0
        %v322 = vadd.f32 0.0, %v321
        %v323 = vpop.f32.mrf.mxu0
        %324 = vmatprep.mubr.f32.mxu0 0.0
        %325 = vmatmul.mubr.f32.gmra.mxu0 %v234
        %v326 = vpop.f32.mrf.mxu0
        %v327 = vadd.f32 0.0, %v326
        %v328 = vpop.f32.mrf.mxu0
        %329 = vmatprep.mubr.f32.mxu0 0.0
        %330 = vmatmul.mubr.f32.gmra.mxu0 %v236
        %v331 = vpop.f32.mrf.mxu0
        %v332 = vadd.f32 0.0, %v331
        %v333 = vpop.f32.mrf.mxu0
        %334 = vmatprep.mubr.f32.mxu0 0.0
        %335 = vmatmul.mubr.f32.gmra.mxu0 %v238
        %v336 = vpop.f32.mrf.mxu0
        %v337 = vadd.f32 0.0, %v336
        %v338 = vpop.f32.mrf.mxu0
        %339 = vmatprep.mubr.f32.mxu0 0.0
        %340 = vmatmul.mubr.f32.gmra.mxu0 %v240
        %v341 = vpop.f32.mrf.mxu0
        %v342 = vadd.f32 0.0, %v341
        %v343 = vpop.f32.mrf.mxu0
        %344 = vmatprep.mubr.f32.mxu0 0.0
        %345 = vmatmul.mubr.f32.gmra.mxu0 %v242
        %v346 = vpop.f32.mrf.mxu0
        %v347 = vadd.f32 0.0, %v346
        %v348 = vpop.f32.mrf.mxu0
        %349 = vmatprep.mubr.f32.mxu0 0.0
        %350 = vmatmul.mubr.f32.gmra.mxu0 %v244
        %v351 = vpop.f32.mrf.mxu0
        %v352 = vadd.f32 0.0, %v351
        %v353 = vpop.f32.mrf.mxu0
        %354 = vdwg.mxu0
        %v355 = vsel %vm229, %v159, 0
        %v357 = vsel %vm229, %v160, 0
        %v359 = vsel %vm229, %v161, 0
        %v361 = vsel %vm229, %v162, 0
        %v363 = vsel %vm229, %v163, 0
        %v365 = vsel %vm229, %v164, 0
        %v367 = vsel %vm229, %v165, 0
        %v369 = vsel %vm229, %v166, 0
        %v372 = vsel %vm246, %v171, 0
        %374 = vmatprep.subr.mxu0 0.0
        %375 = vmatpush1.msra.mxu0 0.0
        %376 = vmatprep.subr.mxu0 0.0
        %377 = vmatpush1.msra.mxu0 0.0
        %378 = vmatprep.subr.mxu0 0.0
        %379 = vmatpush1.msra.mxu0 0.0
        %380 = vmatprep.subr.mxu0 0.0
        %381 = vmatpush1.msra.mxu0 0.0
        %382 = vmatprep.subr.mxu0 0.0
        %383 = vmatpush1.msra.mxu0 0.0
        %384 = vmatprep.subr.mxu0 0.0
        %385 = vmatpush1.msra.mxu0 0.0
        %386 = vmatprep.subr.mxu0 0.0
        %387 = vmatpush1.msra.mxu0 0.0
        %388 = vmatprep.subr.mxu0 0.0
        %389 = vmatpush1.msra.mxu0 0.0
        %390 = vmatprep.subr.mxu0 0.0
        %391 = vmatpush1.msra.mxu0 0.0
        %392 = vmatprep.subr.mxu0 0.0
        %393 = vmatpush1.msra.mxu0 0.0
        %394 = vmatprep.subr.mxu0 0.0
        %395 = vmatpush1.msra.mxu0 0.0
        %396 = vmatprep.subr.mxu0 0.0
        %397 = vmatpush1.msra.mxu0 0.0
        %398 = vmatprep.subr.mxu0 0.0
        %399 = vmatpush1.msra.mxu0 0.0
        %400 = vmatprep.subr.mxu0 0.0
        %401 = vmatpush1.msra.mxu0 0.0
        %402 = vmatprep.subr.mxu0 0.0
        %403 = vmatpush1.msra.mxu0 0.0
        %404 = vmatprep.subr.mxu0 0.0
        %405 = vmatpush1.msra.mxu0 %v372
        %406 = vmatprep.subr.mxu0 0.0
        %407 = vmatpush2.msra.mxu0 0.0
        %408 = vmatprep.subr.mxu0 0.0
        %409 = vmatpush2.msra.mxu0 0.0
        %410 = vmatprep.subr.mxu0 0.0
        %411 = vmatpush2.msra.mxu0 0.0
        %412 = vmatprep.subr.mxu0 0.0
        %413 = vmatpush2.msra.mxu0 0.0
        %414 = vmatprep.subr.mxu0 0.0
        %415 = vmatpush2.msra.mxu0 0.0
        %416 = vmatprep.subr.mxu0 0.0
        %417 = vmatpush2.msra.mxu0 0.0
        %418 = vmatprep.subr.mxu0 0.0
        %419 = vmatpush2.msra.mxu0 0.0
        %420 = vmatprep.subr.mxu0 0.0
        %421 = vmatpush2.msra.mxu0 0.0
        %422 = vmatprep.subr.mxu0 0.0
        %423 = vmatpush2.msra.mxu0 0.0
        %424 = vmatprep.subr.mxu0 0.0
        %425 = vmatpush2.msra.mxu0 0.0
        %426 = vmatprep.subr.mxu0 0.0
        %427 = vmatpush2.msra.mxu0 0.0
        %428 = vmatprep.subr.mxu0 0.0
        %429 = vmatpush2.msra.mxu0 0.0
        %430 = vmatprep.subr.mxu0 0.0
        %431 = vmatpush2.msra.mxu0 0.0
        %432 = vmatprep.subr.mxu0 0.0
        %433 = vmatpush2.msra.mxu0 0.0
        %434 = vmatprep.subr.mxu0 0.0
        %435 = vmatpush2.msra.mxu0 0.0
        %436 = vmatprep.subr.mxu0 0.0
        %437 = vmatpush2.msra.mxu0 0.0
        %438 = vmatprep.mubr.f32.mxu0 0.0
        %439 = vmatmul.mubr.f32.gmra.mxu0 %v355
        %v440 = vpop.f32.mrf.mxu0
        %v441 = vadd.f32 %v317, %v440
        %v442 = vpop.f32.mrf.mxu0
        %443 = vmatprep.mubr.f32.mxu0 0.0
        %444 = vmatmul.mubr.f32.gmra.mxu0 %v357
        %v445 = vpop.f32.mrf.mxu0
        %v446 = vadd.f32 %v322, %v445
        %v447 = vpop.f32.mrf.mxu0
        %448 = vmatprep.mubr.f32.mxu0 0.0
        %449 = vmatmul.mubr.f32.gmra.mxu0 %v359
        %v450 = vpop.f32.mrf.mxu0
        %v451 = vadd.f32 %v327, %v450
        %v452 = vpop.f32.mrf.mxu0
        %453 = vmatprep.mubr.f32.mxu0 0.0
        %454 = vmatmul.mubr.f32.gmra.mxu0 %v361
        %v455 = vpop.f32.mrf.mxu0
        %v456 = vadd.f32 %v332, %v455
        %v457 = vpop.f32.mrf.mxu0
        %458 = vmatprep.mubr.f32.mxu0 0.0
        %459 = vmatmul.mubr.f32.gmra.mxu0 %v363
        %v460 = vpop.f32.mrf.mxu0
        %v461 = vadd.f32 %v337, %v460
        %v462 = vpop.f32.mrf.mxu0
        %463 = vmatprep.mubr.f32.mxu0 0.0
        %464 = vmatmul.mubr.f32.gmra.mxu0 %v365
        %v465 = vpop.f32.mrf.mxu0
        %v466 = vadd.f32 %v342, %v465
        %v467 = vpop.f32.mrf.mxu0
        %468 = vmatprep.mubr.f32.mxu0 0.0
        %469 = vmatmul.mubr.f32.gmra.mxu0 %v367
        %v470 = vpop.f32.mrf.mxu0
        %v471 = vadd.f32 %v347, %v470
        %v472 = vpop.f32.mrf.mxu0
        %473 = vmatprep.mubr.f32.mxu0 0.0
        %474 = vmatmul.mubr.f32.gmra.mxu0 %v369
        %v475 = vpop.f32.mrf.mxu0
        %v476 = vadd.f32 %v352, %v475
        %v477 = vpop.f32.mrf.mxu0
        %478 = vdwg.mxu0
        %vm479 = vcmask 1045504
        %v480 = vrot.slane %v159, 2
        %v481 = vrot.slane %v160, 2
        %v482 = vsel %vm479, %v480, %v481
        %v483 = vrot.slane %v161, 2
        %v484 = vsel %vm479, %v481, %v483
        %v485 = vrot.slane %v162, 2
        %v486 = vsel %vm479, %v483, %v485
        %v487 = vrot.slane %v163, 2
        %v488 = vsel %vm479, %v485, %v487
        %v489 = vrot.slane %v164, 2
        %v490 = vsel %vm479, %v487, %v489
        %v491 = vrot.slane %v165, 2
        %v492 = vsel %vm479, %v489, %v491
        %v493 = vrot.slane %v166, 2
        %v494 = vsel %vm479, %v491, %v493
        %v495 = vrot.slane %v167, 2
        %v496 = vsel %vm479, %v493, %v495
        %v497 = vsel %vm229, %v482, 0
        %v499 = vsel %vm229, %v484, 0
        %v501 = vsel %vm229, %v486, 0
        %v503 = vsel %vm229, %v488, 0
        %v505 = vsel %vm229, %v490, 0
        %v507 = vsel %vm229, %v492, 0
        %v509 = vsel %vm229, %v494, 0
        %v511 = vsel %vm229, %v496, 0
        %v514 = vsel %vm246, %v173, 0
        %516 = vmatprep.subr.mxu0 0.0
        %517 = vmatpush1.msra.mxu0 0.0
        %518 = vmatprep.subr.mxu0 0.0
        %519 = vmatpush1.msra.mxu0 0.0
        %520 = vmatprep.subr.mxu0 0.0
        %521 = vmatpush1.msra.mxu0 0.0
        %522 = vmatprep.subr.mxu0 0.0
        %523 = vmatpush1.msra.mxu0 0.0
        %524 = vmatprep.subr.mxu0 0.0
        %525 = vmatpush1.msra.mxu0 0.0
        %526 = vmatprep.subr.mxu0 0.0
        %527 = vmatpush1.msra.mxu0 0.0
        %528 = vmatprep.subr.mxu0 0.0
        %529 = vmatpush1.msra.mxu0 0.0
        %530 = vmatprep.subr.mxu0 0.0
        %531 = vmatpush1.msra.mxu0 0.0
        %532 = vmatprep.subr.mxu0 0.0
        %533 = vmatpush1.msra.mxu0 0.0
        %534 = vmatprep.subr.mxu0 0.0
        %535 = vmatpush1.msra.mxu0 0.0
        %536 = vmatprep.subr.mxu0 0.0
        %537 = vmatpush1.msra.mxu0 0.0
        %538 = vmatprep.subr.mxu0 0.0
        %539 = vmatpush1.msra.mxu0 0.0
        %540 = vmatprep.subr.mxu0 0.0
        %541 = vmatpush1.msra.mxu0 0.0
        %542 = vmatprep.subr.mxu0 0.0
        %543 = vmatpush1.msra.mxu0 0.0
        %544 = vmatprep.subr.mxu0 0.0
        %545 = vmatpush1.msra.mxu0 0.0
        %546 = vmatprep.subr.mxu0 0.0
        %547 = vmatpush1.msra.mxu0 %v514
        %548 = vmatprep.subr.mxu0 0.0
        %549 = vmatpush2.msra.mxu0 0.0
        %550 = vmatprep.subr.mxu0 0.0
        %551 = vmatpush2.msra.mxu0 0.0
        %552 = vmatprep.subr.mxu0 0.0
        %553 = vmatpush2.msra.mxu0 0.0
        %554 = vmatprep.subr.mxu0 0.0
        %555 = vmatpush2.msra.mxu0 0.0
        %556 = vmatprep.subr.mxu0 0.0
        %557 = vmatpush2.msra.mxu0 0.0
        %558 = vmatprep.subr.mxu0 0.0
        %559 = vmatpush2.msra.mxu0 0.0
        %560 = vmatprep.subr.mxu0 0.0
        %561 = vmatpush2.msra.mxu0 0.0
        %562 = vmatprep.subr.mxu0 0.0
        %563 = vmatpush2.msra.mxu0 0.0
        %564 = vmatprep.subr.mxu0 0.0
        %565 = vmatpush2.msra.mxu0 0.0
        %566 = vmatprep.subr.mxu0 0.0
        %567 = vmatpush2.msra.mxu0 0.0
        %568 = vmatprep.subr.mxu0 0.0
        %569 = vmatpush2.msra.mxu0 0.0
        %570 = vmatprep.subr.mxu0 0.0
        %571 = vmatpush2.msra.mxu0 0.0
        %572 = vmatprep.subr.mxu0 0.0
        %573 = vmatpush2.msra.mxu0 0.0
        %574 = vmatprep.subr.mxu0 0.0
        %575 = vmatpush2.msra.mxu0 0.0
        %576 = vmatprep.subr.mxu0 0.0
        %577 = vmatpush2.msra.mxu0 0.0
        %578 = vmatprep.subr.mxu0 0.0
        %579 = vmatpush2.msra.mxu0 0.0
        %580 = vmatprep.mubr.f32.mxu0 0.0
        %581 = vmatmul.mubr.f32.gmra.mxu0 %v497
        %v582 = vpop.f32.mrf.mxu0
        %v583 = vadd.f32 0.0, %v582
        %v584 = vpop.f32.mrf.mxu0
        %585 = vmatprep.mubr.f32.mxu0 0.0
        %586 = vmatmul.mubr.f32.gmra.mxu0 %v499
        %v587 = vpop.f32.mrf.mxu0
        %v588 = vadd.f32 0.0, %v587
        %v589 = vpop.f32.mrf.mxu0
        %590 = vmatprep.mubr.f32.mxu0 0.0
        %591 = vmatmul.mubr.f32.gmra.mxu0 %v501
        %v592 = vpop.f32.mrf.mxu0
        %v593 = vadd.f32 0.0, %v592
        %v594 = vpop.f32.mrf.mxu0
        %595 = vmatprep.mubr.f32.mxu0 0.0
        %596 = vmatmul.mubr.f32.gmra.mxu0 %v503
        %v597 = vpop.f32.mrf.mxu0
        %v598 = vadd.f32 0.0, %v597
        %v599 = vpop.f32.mrf.mxu0
        %600 = vmatprep.mubr.f32.mxu0 0.0
        %601 = vmatmul.mubr.f32.gmra.mxu0 %v505
        %v602 = vpop.f32.mrf.mxu0
        %v603 = vadd.f32 0.0, %v602
        %v604 = vpop.f32.mrf.mxu0
        %605 = vmatprep.mubr.f32.mxu0 0.0
        %606 = vmatmul.mubr.f32.gmra.mxu0 %v507
        %v607 = vpop.f32.mrf.mxu0
        %v608 = vadd.f32 0.0, %v607
        %v609 = vpop.f32.mrf.mxu0
        %610 = vmatprep.mubr.f32.mxu0 0.0
        %611 = vmatmul.mubr.f32.gmra.mxu0 %v509
        %v612 = vpop.f32.mrf.mxu0
        %v613 = vadd.f32 0.0, %v612
        %v614 = vpop.f32.mrf.mxu0
        %615 = vmatprep.mubr.f32.mxu0 0.0
        %616 = vmatmul.mubr.f32.gmra.mxu0 %v511
        %v617 = vpop.f32.mrf.mxu0
        %v618 = vadd.f32 0.0, %v617
        %v619 = vpop.f32.mrf.mxu0
        %620 = vdwg.mxu0
        %v621 = vadd.f32 %v441, %v583
        %v622 = vadd.f32 %v446, %v588
        %v623 = vadd.f32 %v451, %v593
        %v624 = vadd.f32 %v456, %v598
        %v625 = vadd.f32 %v461, %v603
        %v626 = vadd.f32 %v466, %v608
        %v627 = vadd.f32 %v471, %v613
        %v628 = vadd.f32 %v476, %v618
        %vm629 = vcmask 1044480
        %v630 = vrot.slane %v159, 3
        %v631 = vrot.slane %v160, 3
        %v632 = vsel %vm629, %v630, %v631
        %v633 = vrot.slane %v161, 3
        %v634 = vsel %vm629, %v631, %v633
        %v635 = vrot.slane %v162, 3
        %v636 = vsel %vm629, %v633, %v635
        %v637 = vrot.slane %v163, 3
        %v638 = vsel %vm629, %v635, %v637
        %v639 = vrot.slane %v164, 3
        %v640 = vsel %vm629, %v637, %v639
        %v641 = vrot.slane %v165, 3
        %v642 = vsel %vm629, %v639, %v641
        %v643 = vrot.slane %v166, 3
        %v644 = vsel %vm629, %v641, %v643
        %v645 = vrot.slane %v167, 3
        %v646 = vsel %vm629, %v643, %v645
        %v647 = vsel %vm229, %v632, 0
        %v649 = vsel %vm229, %v634, 0
        %v651 = vsel %vm229, %v636, 0
        %v653 = vsel %vm229, %v638, 0
        %v655 = vsel %vm229, %v640, 0
        %v657 = vsel %vm229, %v642, 0
        %v659 = vsel %vm229, %v644, 0
        %v661 = vsel %vm229, %v646, 0
        %v664 = vsel %vm246, %v174, 0
        %666 = vmatprep.subr.mxu0 0.0
        %667 = vmatpush1.msra.mxu0 0.0
        %668 = vmatprep.subr.mxu0 0.0
        %669 = vmatpush1.msra.mxu0 0.0
        %670 = vmatprep.subr.mxu0 0.0
        %671 = vmatpush1.msra.mxu0 0.0
        %672 = vmatprep.subr.mxu0 0.0
        %673 = vmatpush1.msra.mxu0 0.0
        %674 = vmatprep.subr.mxu0 0.0
        %675 = vmatpush1.msra.mxu0 0.0
        %676 = vmatprep.subr.mxu0 0.0
        %677 = vmatpush1.msra.mxu0 0.0
        %678 = vmatprep.subr.mxu0 0.0
        %679 = vmatpush1.msra.mxu0 0.0
        %680 = vmatprep.subr.mxu0 0.0
        %681 = vmatpush1.msra.mxu0 0.0
        %682 = vmatprep.subr.mxu0 0.0
        %683 = vmatpush1.msra.mxu0 0.0
        %684 = vmatprep.subr.mxu0 0.0
        %685 = vmatpush1.msra.mxu0 0.0
        %686 = vmatprep.subr.mxu0 0.0
        %687 = vmatpush1.msra.mxu0 0.0
        %688 = vmatprep.subr.mxu0 0.0
        %689 = vmatpush1.msra.mxu0 0.0
        %690 = vmatprep.subr.mxu0 0.0
        %691 = vmatpush1.msra.mxu0 0.0
        %692 = vmatprep.subr.mxu0 0.0
        %693 = vmatpush1.msra.mxu0 0.0
        %694 = vmatprep.subr.mxu0 0.0
        %695 = vmatpush1.msra.mxu0 0.0
        %696 = vmatprep.subr.mxu0 0.0
        %697 = vmatpush1.msra.mxu0 %v664
        %698 = vmatprep.subr.mxu0 0.0
        %699 = vmatpush2.msra.mxu0 0.0
        %700 = vmatprep.subr.mxu0 0.0
        %701 = vmatpush2.msra.mxu0 0.0
        %702 = vmatprep.subr.mxu0 0.0
        %703 = vmatpush2.msra.mxu0 0.0
        %704 = vmatprep.subr.mxu0 0.0
        %705 = vmatpush2.msra.mxu0 0.0
        %706 = vmatprep.subr.mxu0 0.0
        %707 = vmatpush2.msra.mxu0 0.0
        %708 = vmatprep.subr.mxu0 0.0
        %709 = vmatpush2.msra.mxu0 0.0
        %710 = vmatprep.subr.mxu0 0.0
        %711 = vmatpush2.msra.mxu0 0.0
        %712 = vmatprep.subr.mxu0 0.0
        %713 = vmatpush2.msra.mxu0 0.0
        %714 = vmatprep.subr.mxu0 0.0
        %715 = vmatpush2.msra.mxu0 0.0
        %716 = vmatprep.subr.mxu0 0.0
        %717 = vmatpush2.msra.mxu0 0.0
        %718 = vmatprep.subr.mxu0 0.0
        %719 = vmatpush2.msra.mxu0 0.0
        %720 = vmatprep.subr.mxu0 0.0
        %721 = vmatpush2.msra.mxu0 0.0
        %722 = vmatprep.subr.mxu0 0.0
        %723 = vmatpush2.msra.mxu0 0.0
        %724 = vmatprep.subr.mxu0 0.0
        %725 = vmatpush2.msra.mxu0 0.0
        %726 = vmatprep.subr.mxu0 0.0
        %727 = vmatpush2.msra.mxu0 0.0
        %728 = vmatprep.subr.mxu0 0.0
        %729 = vmatpush2.msra.mxu0 0.0
        %730 = vmatprep.mubr.f32.mxu0 0.0
        %731 = vmatmul.mubr.f32.gmra.mxu0 %v647
        %v732 = vpop.f32.mrf.mxu0
        %v733 = vadd.f32 0.0, %v732
        %v734 = vpop.f32.mrf.mxu0
        %735 = vmatprep.mubr.f32.mxu0 0.0
        %736 = vmatmul.mubr.f32.gmra.mxu0 %v649
        %v737 = vpop.f32.mrf.mxu0
        %v738 = vadd.f32 0.0, %v737
        %v739 = vpop.f32.mrf.mxu0
        %740 = vmatprep.mubr.f32.mxu0 0.0
        %741 = vmatmul.mubr.f32.gmra.mxu0 %v651
        %v742 = vpop.f32.mrf.mxu0
        %v743 = vadd.f32 0.0, %v742
        %v744 = vpop.f32.mrf.mxu0
        %745 = vmatprep.mubr.f32.mxu0 0.0
        %746 = vmatmul.mubr.f32.gmra.mxu0 %v653
        %v747 = vpop.f32.mrf.mxu0
        %v748 = vadd.f32 0.0, %v747
        %v749 = vpop.f32.mrf.mxu0
        %750 = vmatprep.mubr.f32.mxu0 0.0
        %751 = vmatmul.mubr.f32.gmra.mxu0 %v655
        %v752 = vpop.f32.mrf.mxu0
        %v753 = vadd.f32 0.0, %v752
        %v754 = vpop.f32.mrf.mxu0
        %755 = vmatprep.mubr.f32.mxu0 0.0
        %756 = vmatmul.mubr.f32.gmra.mxu0 %v657
        %v757 = vpop.f32.mrf.mxu0
        %v758 = vadd.f32 0.0, %v757
        %v759 = vpop.f32.mrf.mxu0
        %760 = vmatprep.mubr.f32.mxu0 0.0
        %761 = vmatmul.mubr.f32.gmra.mxu0 %v659
        %v762 = vpop.f32.mrf.mxu0
        %v763 = vadd.f32 0.0, %v762
        %v764 = vpop.f32.mrf.mxu0
        %765 = vmatprep.mubr.f32.mxu0 0.0
        %766 = vmatmul.mubr.f32.gmra.mxu0 %v661
        %v767 = vpop.f32.mrf.mxu0
        %v768 = vadd.f32 0.0, %v767
        %v769 = vpop.f32.mrf.mxu0
        %770 = vdwg.mxu0
        %v771 = vadd.f32 %v621, %v733
        %v772 = vadd.f32 %v622, %v738
        %v773 = vadd.f32 %v623, %v743
        %v774 = vadd.f32 %v624, %v748
        %v775 = vadd.f32 %v625, %v753
        %v776 = vadd.f32 %v626, %v758
        %v777 = vadd.f32 %v627, %v763
        %v778 = vadd.f32 %v628, %v768
        %vm779 = vcmask 1043456
        %v780 = vrot.slane %v159, 4
        %v781 = vrot.slane %v160, 4
        %v782 = vsel %vm779, %v780, %v781
        %v783 = vrot.slane %v161, 4
        %v784 = vsel %vm779, %v781, %v783
        %v785 = vrot.slane %v162, 4
        %v786 = vsel %vm779, %v783, %v785
        %v787 = vrot.slane %v163, 4
        %v788 = vsel %vm779, %v785, %v787
        %v789 = vrot.slane %v164, 4
        %v790 = vsel %vm779, %v787, %v789
        %v791 = vrot.slane %v165, 4
        %v792 = vsel %vm779, %v789, %v791
        %v793 = vrot.slane %v166, 4
        %v794 = vsel %vm779, %v791, %v793
        %v795 = vrot.slane %v167, 4
        %v796 = vsel %vm779, %v793, %v795
        %v797 = vsel %vm229, %v782, 0
        %v799 = vsel %vm229, %v784, 0
        %v801 = vsel %vm229, %v786, 0
        %v803 = vsel %vm229, %v788, 0
        %v805 = vsel %vm229, %v790, 0
        %v807 = vsel %vm229, %v792, 0
        %v809 = vsel %vm229, %v794, 0
        %v811 = vsel %vm229, %v796, 0
        %v814 = vsel %vm246, %v175, 0
        %816 = vmatprep.subr.mxu0 0.0
        %817 = vmatpush1.msra.mxu0 0.0
        %818 = vmatprep.subr.mxu0 0.0
        %819 = vmatpush1.msra.mxu0 0.0
        %820 = vmatprep.subr.mxu0 0.0
        %821 = vmatpush1.msra.mxu0 0.0
        %822 = vmatprep.subr.mxu0 0.0
        %823 = vmatpush1.msra.mxu0 0.0
        %824 = vmatprep.subr.mxu0 0.0
        %825 = vmatpush1.msra.mxu0 0.0
        %826 = vmatprep.subr.mxu0 0.0
        %827 = vmatpush1.msra.mxu0 0.0
        %828 = vmatprep.subr.mxu0 0.0
        %829 = vmatpush1.msra.mxu0 0.0
        %830 = vmatprep.subr.mxu0 0.0
        %831 = vmatpush1.msra.mxu0 0.0
        %832 = vmatprep.subr.mxu0 0.0
        %833 = vmatpush1.msra.mxu0 0.0
        %834 = vmatprep.subr.mxu0 0.0
        %835 = vmatpush1.msra.mxu0 0.0
        %836 = vmatprep.subr.mxu0 0.0
        %837 = vmatpush1.msra.mxu0 0.0
        %838 = vmatprep.subr.mxu0 0.0
        %839 = vmatpush1.msra.mxu0 0.0
        %840 = vmatprep.subr.mxu0 0.0
        %841 = vmatpush1.msra.mxu0 0.0
        %842 = vmatprep.subr.mxu0 0.0
        %843 = vmatpush1.msra.mxu0 0.0
        %844 = vmatprep.subr.mxu0 0.0
        %845 = vmatpush1.msra.mxu0 0.0
        %846 = vmatprep.subr.mxu0 0.0
        %847 = vmatpush1.msra.mxu0 %v814
        %848 = vmatprep.subr.mxu0 0.0
        %849 = vmatpush2.msra.mxu0 0.0
        %850 = vmatprep.subr.mxu0 0.0
        %851 = vmatpush2.msra.mxu0 0.0
        %852 = vmatprep.subr.mxu0 0.0
        %853 = vmatpush2.msra.mxu0 0.0
        %854 = vmatprep.subr.mxu0 0.0
        %855 = vmatpush2.msra.mxu0 0.0
        %856 = vmatprep.subr.mxu0 0.0
        %857 = vmatpush2.msra.mxu0 0.0
        %858 = vmatprep.subr.mxu0 0.0
        %859 = vmatpush2.msra.mxu0 0.0
        %860 = vmatprep.subr.mxu0 0.0
        %861 = vmatpush2.msra.mxu0 0.0
        %862 = vmatprep.subr.mxu0 0.0
        %863 = vmatpush2.msra.mxu0 0.0
        %864 = vmatprep.subr.mxu0 0.0
        %865 = vmatpush2.msra.mxu0 0.0
        %866 = vmatprep.subr.mxu0 0.0
        %867 = vmatpush2.msra.mxu0 0.0
        %868 = vmatprep.subr.mxu0 0.0
        %869 = vmatpush2.msra.mxu0 0.0
        %870 = vmatprep.subr.mxu0 0.0
        %871 = vmatpush2.msra.mxu0 0.0
        %872 = vmatprep.subr.mxu0 0.0
        %873 = vmatpush2.msra.mxu0 0.0
        %874 = vmatprep.subr.mxu0 0.0
        %875 = vmatpush2.msra.mxu0 0.0
        %876 = vmatprep.subr.mxu0 0.0
        %877 = vmatpush2.msra.mxu0 0.0
        %878 = vmatprep.subr.mxu0 0.0
        %879 = vmatpush2.msra.mxu0 0.0
        %880 = vmatprep.mubr.f32.mxu0 0.0
        %881 = vmatmul.mubr.f32.gmra.mxu0 %v797
        %v882 = vpop.f32.mrf.mxu0
        %v883 = vadd.f32 0.0, %v882
        %v884 = vpop.f32.mrf.mxu0
        %885 = vmatprep.mubr.f32.mxu0 0.0
        %886 = vmatmul.mubr.f32.gmra.mxu0 %v799
        %v887 = vpop.f32.mrf.mxu0
        %v888 = vadd.f32 0.0, %v887
        %v889 = vpop.f32.mrf.mxu0
        %890 = vmatprep.mubr.f32.mxu0 0.0
        %891 = vmatmul.mubr.f32.gmra.mxu0 %v801
        %v892 = vpop.f32.mrf.mxu0
        %v893 = vadd.f32 0.0, %v892
        %v894 = vpop.f32.mrf.mxu0
        %895 = vmatprep.mubr.f32.mxu0 0.0
        %896 = vmatmul.mubr.f32.gmra.mxu0 %v803
        %v897 = vpop.f32.mrf.mxu0
        %v898 = vadd.f32 0.0, %v897
        %v899 = vpop.f32.mrf.mxu0
        %900 = vmatprep.mubr.f32.mxu0 0.0
        %901 = vmatmul.mubr.f32.gmra.mxu0 %v805
        %v902 = vpop.f32.mrf.mxu0
        %v903 = vadd.f32 0.0, %v902
        %v904 = vpop.f32.mrf.mxu0
        %905 = vmatprep.mubr.f32.mxu0 0.0
        %906 = vmatmul.mubr.f32.gmra.mxu0 %v807
        %v907 = vpop.f32.mrf.mxu0
        %v908 = vadd.f32 0.0, %v907
        %v909 = vpop.f32.mrf.mxu0
        %910 = vmatprep.mubr.f32.mxu0 0.0
        %911 = vmatmul.mubr.f32.gmra.mxu0 %v809
        %v912 = vpop.f32.mrf.mxu0
        %v913 = vadd.f32 0.0, %v912
        %v914 = vpop.f32.mrf.mxu0
        %915 = vmatprep.mubr.f32.mxu0 0.0
        %916 = vmatmul.mubr.f32.gmra.mxu0 %v811
        %v917 = vpop.f32.mrf.mxu0
        %v918 = vadd.f32 0.0, %v917
        %v919 = vpop.f32.mrf.mxu0
        %920 = vdwg.mxu0
        %v921 = vadd.f32 %v771, %v883
        %v922 = vadd.f32 %v772, %v888
        %v923 = vadd.f32 %v773, %v893
        %v924 = vadd.f32 %v774, %v898
        %v925 = vadd.f32 %v775, %v903
        %v926 = vadd.f32 %v776, %v908
        %v927 = vadd.f32 %v777, %v913
        %v928 = vadd.f32 %v778, %v918
        %vm929 = vcmask 1042432
        %v930 = vrot.slane %v159, 5
        %v931 = vrot.slane %v160, 5
        %v932 = vsel %vm929, %v930, %v931
        %v933 = vrot.slane %v161, 5
        %v934 = vsel %vm929, %v931, %v933
        %v935 = vrot.slane %v162, 5
        %v936 = vsel %vm929, %v933, %v935
        %v937 = vrot.slane %v163, 5
        %v938 = vsel %vm929, %v935, %v937
        %v939 = vrot.slane %v164, 5
        %v940 = vsel %vm929, %v937, %v939
        %v941 = vrot.slane %v165, 5
        %v942 = vsel %vm929, %v939, %v941
        %v943 = vrot.slane %v166, 5
        %v944 = vsel %vm929, %v941, %v943
        %v945 = vrot.slane %v167, 5
        %v946 = vsel %vm929, %v943, %v945
        %v947 = vsel %vm229, %v932, 0
        %v949 = vsel %vm229, %v934, 0
        %v951 = vsel %vm229, %v936, 0
        %v953 = vsel %vm229, %v938, 0
        %v955 = vsel %vm229, %v940, 0
        %v957 = vsel %vm229, %v942, 0
        %v959 = vsel %vm229, %v944, 0
        %v961 = vsel %vm229, %v946, 0
        %v964 = vsel %vm246, %v176, 0
        %966 = vmatprep.subr.mxu0 0.0
        %967 = vmatpush1.msra.mxu0 0.0
        %968 = vmatprep.subr.mxu0 0.0
        %969 = vmatpush1.msra.mxu0 0.0
        %970 = vmatprep.subr.mxu0 0.0
        %971 = vmatpush1.msra.mxu0 0.0
        %972 = vmatprep.subr.mxu0 0.0
        %973 = vmatpush1.msra.mxu0 0.0
        %974 = vmatprep.subr.mxu0 0.0
        %975 = vmatpush1.msra.mxu0 0.0
        %976 = vmatprep.subr.mxu0 0.0
        %977 = vmatpush1.msra.mxu0 0.0
        %978 = vmatprep.subr.mxu0 0.0
        %979 = vmatpush1.msra.mxu0 0.0
        %980 = vmatprep.subr.mxu0 0.0
        %981 = vmatpush1.msra.mxu0 0.0
        %982 = vmatprep.subr.mxu0 0.0
        %983 = vmatpush1.msra.mxu0 0.0
        %984 = vmatprep.subr.mxu0 0.0
        %985 = vmatpush1.msra.mxu0 0.0
        %986 = vmatprep.subr.mxu0 0.0
        %987 = vmatpush1.msra.mxu0 0.0
        %988 = vmatprep.subr.mxu0 0.0
        %989 = vmatpush1.msra.mxu0 0.0
        %990 = vmatprep.subr.mxu0 0.0
        %991 = vmatpush1.msra.mxu0 0.0
        %992 = vmatprep.subr.mxu0 0.0
        %993 = vmatpush1.msra.mxu0 0.0
        %994 = vmatprep.subr.mxu0 0.0
        %995 = vmatpush1.msra.mxu0 0.0
        %996 = vmatprep.subr.mxu0 0.0
        %997 = vmatpush1.msra.mxu0 %v964
        %998 = vmatprep.subr.mxu0 0.0
        %999 = vmatpush2.msra.mxu0 0.0
        %1000 = vmatprep.subr.mxu0 0.0
        %1001 = vmatpush2.msra.mxu0 0.0
        %1002 = vmatprep.subr.mxu0 0.0
        %1003 = vmatpush2.msra.mxu0 0.0
        %1004 = vmatprep.subr.mxu0 0.0
        %1005 = vmatpush2.msra.mxu0 0.0
        %1006 = vmatprep.subr.mxu0 0.0
        %1007 = vmatpush2.msra.mxu0 0.0
        %1008 = vmatprep.subr.mxu0 0.0
        %1009 = vmatpush2.msra.mxu0 0.0
        %1010 = vmatprep.subr.mxu0 0.0
        %1011 = vmatpush2.msra.mxu0 0.0
        %1012 = vmatprep.subr.mxu0 0.0
        %1013 = vmatpush2.msra.mxu0 0.0
        %1014 = vmatprep.subr.mxu0 0.0
        %1015 = vmatpush2.msra.mxu0 0.0
        %1016 = vmatprep.subr.mxu0 0.0
        %1017 = vmatpush2.msra.mxu0 0.0
        %1018 = vmatprep.subr.mxu0 0.0
        %1019 = vmatpush2.msra.mxu0 0.0
        %1020 = vmatprep.subr.mxu0 0.0
        %1021 = vmatpush2.msra.mxu0 0.0
        %1022 = vmatprep.subr.mxu0 0.0
        %1023 = vmatpush2.msra.mxu0 0.0
        %1024 = vmatprep.subr.mxu0 0.0
        %1025 = vmatpush2.msra.mxu0 0.0
        %1026 = vmatprep.subr.mxu0 0.0
        %1027 = vmatpush2.msra.mxu0 0.0
        %1028 = vmatprep.subr.mxu0 0.0
        %1029 = vmatpush2.msra.mxu0 0.0
        %1030 = vmatprep.mubr.f32.mxu0 0.0
        %1031 = vmatmul.mubr.f32.gmra.mxu0 %v947
        %v1032 = vpop.f32.mrf.mxu0
        %v1033 = vadd.f32 0.0, %v1032
        %v1034 = vpop.f32.mrf.mxu0
        %1035 = vmatprep.mubr.f32.mxu0 0.0
        %1036 = vmatmul.mubr.f32.gmra.mxu0 %v949
        %v1037 = vpop.f32.mrf.mxu0
        %v1038 = vadd.f32 0.0, %v1037
        %v1039 = vpop.f32.mrf.mxu0
        %1040 = vmatprep.mubr.f32.mxu0 0.0
        %1041 = vmatmul.mubr.f32.gmra.mxu0 %v951
        %v1042 = vpop.f32.mrf.mxu0
        %v1043 = vadd.f32 0.0, %v1042
        %v1044 = vpop.f32.mrf.mxu0
        %1045 = vmatprep.mubr.f32.mxu0 0.0
        %1046 = vmatmul.mubr.f32.gmra.mxu0 %v953
        %v1047 = vpop.f32.mrf.mxu0
        %v1048 = vadd.f32 0.0, %v1047
        %v1049 = vpop.f32.mrf.mxu0
        %1050 = vmatprep.mubr.f32.mxu0 0.0
        %1051 = vmatmul.mubr.f32.gmra.mxu0 %v955
        %v1052 = vpop.f32.mrf.mxu0
        %v1053 = vadd.f32 0.0, %v1052
        %v1054 = vpop.f32.mrf.mxu0
        %1055 = vmatprep.mubr.f32.mxu0 0.0
        %1056 = vmatmul.mubr.f32.gmra.mxu0 %v957
        %v1057 = vpop.f32.mrf.mxu0
        %v1058 = vadd.f32 0.0, %v1057
        %v1059 = vpop.f32.mrf.mxu0
        %1060 = vmatprep.mubr.f32.mxu0 0.0
        %1061 = vmatmul.mubr.f32.gmra.mxu0 %v959
        %v1062 = vpop.f32.mrf.mxu0
        %v1063 = vadd.f32 0.0, %v1062
        %v1064 = vpop.f32.mrf.mxu0
        %1065 = vmatprep.mubr.f32.mxu0 0.0
        %1066 = vmatmul.mubr.f32.gmra.mxu0 %v961
        %v1067 = vpop.f32.mrf.mxu0
        %v1068 = vadd.f32 0.0, %v1067
        %v1069 = vpop.f32.mrf.mxu0
        %1070 = vdwg.mxu0
        %v1071 = vadd.f32 %v921, %v1033
        %v1072 = vadd.f32 %v922, %v1038
        %v1073 = vadd.f32 %v923, %v1043
        %v1074 = vadd.f32 %v924, %v1048
        %v1075 = vadd.f32 %v925, %v1053
        %v1076 = vadd.f32 %v926, %v1058
        %v1077 = vadd.f32 %v927, %v1063
        %v1078 = vadd.f32 %v928, %v1068
        %v1079 = vrot.slane %v159, 6
        %v1080 = vrot.slane %v160, 6
        %v1081 = vsel %vm246, %v1079, %v1080
        %v1082 = vrot.slane %v161, 6
        %v1083 = vsel %vm246, %v1080, %v1082
        %v1084 = vrot.slane %v162, 6
        %v1085 = vsel %vm246, %v1082, %v1084
        %v1086 = vrot.slane %v163, 6
        %v1087 = vsel %vm246, %v1084, %v1086
        %v1088 = vrot.slane %v164, 6
        %v1089 = vsel %vm246, %v1086, %v1088
        %v1090 = vrot.slane %v165, 6
        %v1091 = vsel %vm246, %v1088, %v1090
        %v1092 = vrot.slane %v166, 6
        %v1093 = vsel %vm246, %v1090, %v1092
        %v1094 = vrot.slane %v167, 6
        %v1095 = vsel %vm246, %v1092, %v1094
        %v1096 = vsel %vm229, %v1081, 0
        %v1098 = vsel %vm229, %v1083, 0
        %v1100 = vsel %vm229, %v1085, 0
        %v1102 = vsel %vm229, %v1087, 0
        %v1104 = vsel %vm229, %v1089, 0
        %v1106 = vsel %vm229, %v1091, 0
        %v1108 = vsel %vm229, %v1093, 0
        %v1110 = vsel %vm229, %v1095, 0
        %v1113 = vsel %vm246, %v177, 0
        %1115 = vmatprep.subr.mxu0 0.0
        %1116 = vmatpush1.msra.mxu0 0.0
        %1117 = vmatprep.subr.mxu0 0.0
        %1118 = vmatpush1.msra.mxu0 0.0
        %1119 = vmatprep.subr.mxu0 0.0
        %1120 = vmatpush1.msra.mxu0 0.0
        %1121 = vmatprep.subr.mxu0 0.0
        %1122 = vmatpush1.msra.mxu0 0.0
        %1123 = vmatprep.subr.mxu0 0.0
        %1124 = vmatpush1.msra.mxu0 0.0
        %1125 = vmatprep.subr.mxu0 0.0
        %1126 = vmatpush1.msra.mxu0 0.0
        %1127 = vmatprep.subr.mxu0 0.0
        %1128 = vmatpush1.msra.mxu0 0.0
        %1129 = vmatprep.subr.mxu0 0.0
        %1130 = vmatpush1.msra.mxu0 0.0
        %1131 = vmatprep.subr.mxu0 0.0
        %1132 = vmatpush1.msra.mxu0 0.0
        %1133 = vmatprep.subr.mxu0 0.0
        %1134 = vmatpush1.msra.mxu0 0.0
        %1135 = vmatprep.subr.mxu0 0.0
        %1136 = vmatpush1.msra.mxu0 0.0
        %1137 = vmatprep.subr.mxu0 0.0
        %1138 = vmatpush1.msra.mxu0 0.0
        %1139 = vmatprep.subr.mxu0 0.0
        %1140 = vmatpush1.msra.mxu0 0.0
        %1141 = vmatprep.subr.mxu0 0.0
        %1142 = vmatpush1.msra.mxu0 0.0
        %1143 = vmatprep.subr.mxu0 0.0
        %1144 = vmatpush1.msra.mxu0 0.0
        %1145 = vmatprep.subr.mxu0 0.0
        %1146 = vmatpush1.msra.mxu0 %v1113
        %1147 = vmatprep.subr.mxu0 0.0
        %1148 = vmatpush2.msra.mxu0 0.0
        %1149 = vmatprep.subr.mxu0 0.0
        %1150 = vmatpush2.msra.mxu0 0.0
        %1151 = vmatprep.subr.mxu0 0.0
        %1152 = vmatpush2.msra.mxu0 0.0
        %1153 = vmatprep.subr.mxu0 0.0
        %1154 = vmatpush2.msra.mxu0 0.0
        %1155 = vmatprep.subr.mxu0 0.0
        %1156 = vmatpush2.msra.mxu0 0.0
        %1157 = vmatprep.subr.mxu0 0.0
        %1158 = vmatpush2.msra.mxu0 0.0
        %1159 = vmatprep.subr.mxu0 0.0
        %1160 = vmatpush2.msra.mxu0 0.0
        %1161 = vmatprep.subr.mxu0 0.0
        %1162 = vmatpush2.msra.mxu0 0.0
        %1163 = vmatprep.subr.mxu0 0.0
        %1164 = vmatpush2.msra.mxu0 0.0
        %1165 = vmatprep.subr.mxu0 0.0
        %1166 = vmatpush2.msra.mxu0 0.0
        %1167 = vmatprep.subr.mxu0 0.0
        %1168 = vmatpush2.msra.mxu0 0.0
        %1169 = vmatprep.subr.mxu0 0.0
        %1170 = vmatpush2.msra.mxu0 0.0
        %1171 = vmatprep.subr.mxu0 0.0
        %1172 = vmatpush2.msra.mxu0 0.0
        %1173 = vmatprep.subr.mxu0 0.0
        %1174 = vmatpush2.msra.mxu0 0.0
        %1175 = vmatprep.subr.mxu0 0.0
        %1176 = vmatpush2.msra.mxu0 0.0
        %1177 = vmatprep.subr.mxu0 0.0
        %1178 = vmatpush2.msra.mxu0 0.0
        %1179 = vmatprep.mubr.f32.mxu0 0.0
        %1180 = vmatmul.mubr.f32.gmra.mxu0 %v1096
        %v1181 = vpop.f32.mrf.mxu0
        %v1182 = vadd.f32 0.0, %v1181
        %v1183 = vpop.f32.mrf.mxu0
        %1184 = vmatprep.mubr.f32.mxu0 0.0
        %1185 = vmatmul.mubr.f32.gmra.mxu0 %v1098
        %v1186 = vpop.f32.mrf.mxu0
        %v1187 = vadd.f32 0.0, %v1186
        %v1188 = vpop.f32.mrf.mxu0
        %1189 = vmatprep.mubr.f32.mxu0 0.0
        %1190 = vmatmul.mubr.f32.gmra.mxu0 %v1100
        %v1191 = vpop.f32.mrf.mxu0
        %v1192 = vadd.f32 0.0, %v1191
        %v1193 = vpop.f32.mrf.mxu0
        %1194 = vmatprep.mubr.f32.mxu0 0.0
        %1195 = vmatmul.mubr.f32.gmra.mxu0 %v1102
        %v1196 = vpop.f32.mrf.mxu0
        %v1197 = vadd.f32 0.0, %v1196
        %v1198 = vpop.f32.mrf.mxu0
        %1199 = vmatprep.mubr.f32.mxu0 0.0
        %1200 = vmatmul.mubr.f32.gmra.mxu0 %v1104
        %v1201 = vpop.f32.mrf.mxu0
        %v1202 = vadd.f32 0.0, %v1201
        %v1203 = vpop.f32.mrf.mxu0
        %1204 = vmatprep.mubr.f32.mxu0 0.0
        %1205 = vmatmul.mubr.f32.gmra.mxu0 %v1106
        %v1206 = vpop.f32.mrf.mxu0
        %v1207 = vadd.f32 0.0, %v1206
        %v1208 = vpop.f32.mrf.mxu0
        %1209 = vmatprep.mubr.f32.mxu0 0.0
        %1210 = vmatmul.mubr.f32.gmra.mxu0 %v1108
        %v1211 = vpop.f32.mrf.mxu0
        %v1212 = vadd.f32 0.0, %v1211
        %v1213 = vpop.f32.mrf.mxu0
        %1214 = vmatprep.mubr.f32.mxu0 0.0
        %1215 = vmatmul.mubr.f32.gmra.mxu0 %v1110
        %v1216 = vpop.f32.mrf.mxu0
        %v1217 = vadd.f32 0.0, %v1216
        %v1218 = vpop.f32.mrf.mxu0
        %1219 = vdwg.mxu0
        %v1220 = vadd.f32 %v1071, %v1182
        %v1221 = vadd.f32 %v1072, %v1187
        %v1222 = vadd.f32 %v1073, %v1192
        %v1223 = vadd.f32 %v1074, %v1197
        %v1224 = vadd.f32 %v1075, %v1202
        %v1225 = vadd.f32 %v1076, %v1207
        %v1226 = vadd.f32 %v1077, %v1212
        %v1227 = vadd.f32 %v1078, %v1217
        %vm1228 = vcmask 1040384
        %v1229 = vrot.slane %v159, 7
        %v1230 = vrot.slane %v160, 7
        %v1231 = vsel %vm1228, %v1229, %v1230
        %v1232 = vrot.slane %v161, 7
        %v1233 = vsel %vm1228, %v1230, %v1232
        %v1234 = vrot.slane %v162, 7
        %v1235 = vsel %vm1228, %v1232, %v1234
        %v1236 = vrot.slane %v163, 7
        %v1237 = vsel %vm1228, %v1234, %v1236
        %v1238 = vrot.slane %v164, 7
        %v1239 = vsel %vm1228, %v1236, %v1238
        %v1240 = vrot.slane %v165, 7
        %v1241 = vsel %vm1228, %v1238, %v1240
        %v1242 = vrot.slane %v166, 7
        %v1243 = vsel %vm1228, %v1240, %v1242
        %v1244 = vrot.slane %v167, 7
        %v1245 = vsel %vm1228, %v1242, %v1244
        %v1246 = vsel %vm229, %v1231, 0
        %v1248 = vsel %vm229, %v1233, 0
        %v1250 = vsel %vm229, %v1235, 0
        %v1252 = vsel %vm229, %v1237, 0
        %v1254 = vsel %vm229, %v1239, 0
        %v1256 = vsel %vm229, %v1241, 0
        %v1258 = vsel %vm229, %v1243, 0
        %v1260 = vsel %vm229, %v1245, 0
        %v1263 = vsel %vm246, %v178, 0
        %1265 = vmatprep.subr.mxu0 0.0
        %1266 = vmatpush1.msra.mxu0 0.0
        %1267 = vmatprep.subr.mxu0 0.0
        %1268 = vmatpush1.msra.mxu0 0.0
        %1269 = vmatprep.subr.mxu0 0.0
        %1270 = vmatpush1.msra.mxu0 0.0
        %1271 = vmatprep.subr.mxu0 0.0
        %1272 = vmatpush1.msra.mxu0 0.0
        %1273 = vmatprep.subr.mxu0 0.0
        %1274 = vmatpush1.msra.mxu0 0.0
        %1275 = vmatprep.subr.mxu0 0.0
        %1276 = vmatpush1.msra.mxu0 0.0
        %1277 = vmatprep.subr.mxu0 0.0
        %1278 = vmatpush1.msra.mxu0 0.0
        %1279 = vmatprep.subr.mxu0 0.0
        %1280 = vmatpush1.msra.mxu0 0.0
        %1281 = vmatprep.subr.mxu0 0.0
        %1282 = vmatpush1.msra.mxu0 0.0
        %1283 = vmatprep.subr.mxu0 0.0
        %1284 = vmatpush1.msra.mxu0 0.0
        %1285 = vmatprep.subr.mxu0 0.0
        %1286 = vmatpush1.msra.mxu0 0.0
        %1287 = vmatprep.subr.mxu0 0.0
        %1288 = vmatpush1.msra.mxu0 0.0
        %1289 = vmatprep.subr.mxu0 0.0
        %1290 = vmatpush1.msra.mxu0 0.0
        %1291 = vmatprep.subr.mxu0 0.0
        %1292 = vmatpush1.msra.mxu0 0.0
        %1293 = vmatprep.subr.mxu0 0.0
        %1294 = vmatpush1.msra.mxu0 0.0
        %1295 = vmatprep.subr.mxu0 0.0
        %1296 = vmatpush1.msra.mxu0 %v1263
        %1297 = vmatprep.subr.mxu0 0.0
        %1298 = vmatpush2.msra.mxu0 0.0
        %1299 = vmatprep.subr.mxu0 0.0
        %1300 = vmatpush2.msra.mxu0 0.0
        %1301 = vmatprep.subr.mxu0 0.0
        %1302 = vmatpush2.msra.mxu0 0.0
        %1303 = vmatprep.subr.mxu0 0.0
        %1304 = vmatpush2.msra.mxu0 0.0
        %1305 = vmatprep.subr.mxu0 0.0
        %1306 = vmatpush2.msra.mxu0 0.0
        %1307 = vmatprep.subr.mxu0 0.0
        %1308 = vmatpush2.msra.mxu0 0.0
        %1309 = vmatprep.subr.mxu0 0.0
        %1310 = vmatpush2.msra.mxu0 0.0
        %1311 = vmatprep.subr.mxu0 0.0
        %1312 = vmatpush2.msra.mxu0 0.0
        %1313 = vmatprep.subr.mxu0 0.0
        %1314 = vmatpush2.msra.mxu0 0.0
        %1315 = vmatprep.subr.mxu0 0.0
        %1316 = vmatpush2.msra.mxu0 0.0
        %1317 = vmatprep.subr.mxu0 0.0
        %1318 = vmatpush2.msra.mxu0 0.0
        %1319 = vmatprep.subr.mxu0 0.0
        %1320 = vmatpush2.msra.mxu0 0.0
        %1321 = vmatprep.subr.mxu0 0.0
        %1322 = vmatpush2.msra.mxu0 0.0
        %1323 = vmatprep.subr.mxu0 0.0
        %1324 = vmatpush2.msra.mxu0 0.0
        %1325 = vmatprep.subr.mxu0 0.0
        %1326 = vmatpush2.msra.mxu0 0.0
        %1327 = vmatprep.subr.mxu0 0.0
        %1328 = vmatpush2.msra.mxu0 0.0
        %1329 = vmatprep.mubr.f32.mxu0 0.0
        %1330 = vmatmul.mubr.f32.gmra.mxu0 %v1246
        %v1331 = vpop.f32.mrf.mxu0
        %v1332 = vadd.f32 0.0, %v1331
        %v1333 = vpop.f32.mrf.mxu0
        %1334 = vmatprep.mubr.f32.mxu0 0.0
        %1335 = vmatmul.mubr.f32.gmra.mxu0 %v1248
        %v1336 = vpop.f32.mrf.mxu0
        %v1337 = vadd.f32 0.0, %v1336
        %v1338 = vpop.f32.mrf.mxu0
        %1339 = vmatprep.mubr.f32.mxu0 0.0
        %1340 = vmatmul.mubr.f32.gmra.mxu0 %v1250
        %v1341 = vpop.f32.mrf.mxu0
        %v1342 = vadd.f32 0.0, %v1341
        %v1343 = vpop.f32.mrf.mxu0
        %1344 = vmatprep.mubr.f32.mxu0 0.0
        %1345 = vmatmul.mubr.f32.gmra.mxu0 %v1252
        %v1346 = vpop.f32.mrf.mxu0
        %v1347 = vadd.f32 0.0, %v1346
        %v1348 = vpop.f32.mrf.mxu0
        %1349 = vmatprep.mubr.f32.mxu0 0.0
        %1350 = vmatmul.mubr.f32.gmra.mxu0 %v1254
        %v1351 = vpop.f32.mrf.mxu0
        %v1352 = vadd.f32 0.0, %v1351
        %v1353 = vpop.f32.mrf.mxu0
        %1354 = vmatprep.mubr.f32.mxu0 0.0
        %1355 = vmatmul.mubr.f32.gmra.mxu0 %v1256
        %v1356 = vpop.f32.mrf.mxu0
        %v1357 = vadd.f32 0.0, %v1356
        %v1358 = vpop.f32.mrf.mxu0
        %1359 = vmatprep.mubr.f32.mxu0 0.0
        %1360 = vmatmul.mubr.f32.gmra.mxu0 %v1258
        %v1361 = vpop.f32.mrf.mxu0
        %v1362 = vadd.f32 0.0, %v1361
        %v1363 = vpop.f32.mrf.mxu0
        %1364 = vmatprep.mubr.f32.mxu0 0.0
        %1365 = vmatmul.mubr.f32.gmra.mxu0 %v1260
        %v1366 = vpop.f32.mrf.mxu0
        %v1367 = vadd.f32 0.0, %v1366
        %v1368 = vpop.f32.mrf.mxu0
        %1369 = vdwg.mxu0
        %v1370 = vadd.f32 %v1220, %v1332
        %v1371 = vadd.f32 %v1221, %v1337
        %v1372 = vadd.f32 %v1222, %v1342
        %v1373 = vadd.f32 %v1223, %v1347
        %v1374 = vadd.f32 %v1224, %v1352
        %v1375 = vadd.f32 %v1225, %v1357
        %v1376 = vadd.f32 %v1226, %v1362
        %v1377 = vadd.f32 %v1227, %v1367
        %v1378 = vsel %vm229, %v167, 0
        %v1381 = vsel %vm246, %v179, 0
        %1383 = vmatprep.subr.mxu0 0.0
        %1384 = vmatpush1.msra.mxu0 0.0
        %1385 = vmatprep.subr.mxu0 0.0
        %1386 = vmatpush1.msra.mxu0 0.0
        %1387 = vmatprep.subr.mxu0 0.0
        %1388 = vmatpush1.msra.mxu0 0.0
        %1389 = vmatprep.subr.mxu0 0.0
        %1390 = vmatpush1.msra.mxu0 0.0
        %1391 = vmatprep.subr.mxu0 0.0
        %1392 = vmatpush1.msra.mxu0 0.0
        %1393 = vmatprep.subr.mxu0 0.0
        %1394 = vmatpush1.msra.mxu0 0.0
        %1395 = vmatprep.subr.mxu0 0.0
        %1396 = vmatpush1.msra.mxu0 0.0
        %1397 = vmatprep.subr.mxu0 0.0
        %1398 = vmatpush1.msra.mxu0 0.0
        %1399 = vmatprep.subr.mxu0 0.0
        %1400 = vmatpush1.msra.mxu0 0.0
        %1401 = vmatprep.subr.mxu0 0.0
        %1402 = vmatpush1.msra.mxu0 0.0
        %1403 = vmatprep.subr.mxu0 0.0
        %1404 = vmatpush1.msra.mxu0 0.0
        %1405 = vmatprep.subr.mxu0 0.0
        %1406 = vmatpush1.msra.mxu0 0.0
        %1407 = vmatprep.subr.mxu0 0.0
        %1408 = vmatpush1.msra.mxu0 0.0
        %1409 = vmatprep.subr.mxu0 0.0
        %1410 = vmatpush1.msra.mxu0 0.0
        %1411 = vmatprep.subr.mxu0 0.0
        %1412 = vmatpush1.msra.mxu0 0.0
        %1413 = vmatprep.subr.mxu0 0.0
        %1414 = vmatpush1.msra.mxu0 %v1381
        %1415 = vmatprep.subr.mxu0 0.0
        %1416 = vmatpush2.msra.mxu0 0.0
        %1417 = vmatprep.subr.mxu0 0.0
        %1418 = vmatpush2.msra.mxu0 0.0
        %1419 = vmatprep.subr.mxu0 0.0
        %1420 = vmatpush2.msra.mxu0 0.0
        %1421 = vmatprep.subr.mxu0 0.0
        %1422 = vmatpush2.msra.mxu0 0.0
        %1423 = vmatprep.subr.mxu0 0.0
        %1424 = vmatpush2.msra.mxu0 0.0
        %1425 = vmatprep.subr.mxu0 0.0
        %1426 = vmatpush2.msra.mxu0 0.0
        %1427 = vmatprep.subr.mxu0 0.0
        %1428 = vmatpush2.msra.mxu0 0.0
        %1429 = vmatprep.subr.mxu0 0.0
        %1430 = vmatpush2.msra.mxu0 0.0
        %1431 = vmatprep.subr.mxu0 0.0
        %1432 = vmatpush2.msra.mxu0 0.0
        %1433 = vmatprep.subr.mxu0 0.0
        %1434 = vmatpush2.msra.mxu0 0.0
        %1435 = vmatprep.subr.mxu0 0.0
        %1436 = vmatpush2.msra.mxu0 0.0
        %1437 = vmatprep.subr.mxu0 0.0
        %1438 = vmatpush2.msra.mxu0 0.0
        %1439 = vmatprep.subr.mxu0 0.0
        %1440 = vmatpush2.msra.mxu0 0.0
        %1441 = vmatprep.subr.mxu0 0.0
        %1442 = vmatpush2.msra.mxu0 0.0
        %1443 = vmatprep.subr.mxu0 0.0
        %1444 = vmatpush2.msra.mxu0 0.0
        %1445 = vmatprep.subr.mxu0 0.0
        %1446 = vmatpush2.msra.mxu0 0.0
        %1447 = vmatprep.mubr.f32.mxu0 0.0
        %1448 = vmatmul.mubr.f32.gmra.mxu0 %v357
        %v1449 = vpop.f32.mrf.mxu0
        %v1450 = vadd.f32 0.0, %v1449
        %v1451 = vpop.f32.mrf.mxu0
        %1452 = vmatprep.mubr.f32.mxu0 0.0
        %1453 = vmatmul.mubr.f32.gmra.mxu0 %v359
        %v1454 = vpop.f32.mrf.mxu0
        %v1455 = vadd.f32 0.0, %v1454
        %v1456 = vpop.f32.mrf.mxu0
        %1457 = vmatprep.mubr.f32.mxu0 0.0
        %1458 = vmatmul.mubr.f32.gmra.mxu0 %v361
        %v1459 = vpop.f32.mrf.mxu0
        %v1460 = vadd.f32 0.0, %v1459
        %v1461 = vpop.f32.mrf.mxu0
        %1462 = vmatprep.mubr.f32.mxu0 0.0
        %1463 = vmatmul.mubr.f32.gmra.mxu0 %v363
        %v1464 = vpop.f32.mrf.mxu0
        %v1465 = vadd.f32 0.0, %v1464
        %v1466 = vpop.f32.mrf.mxu0
        %1467 = vmatprep.mubr.f32.mxu0 0.0
        %1468 = vmatmul.mubr.f32.gmra.mxu0 %v365
        %v1469 = vpop.f32.mrf.mxu0
        %v1470 = vadd.f32 0.0, %v1469
        %v1471 = vpop.f32.mrf.mxu0
        %1472 = vmatprep.mubr.f32.mxu0 0.0
        %1473 = vmatmul.mubr.f32.gmra.mxu0 %v367
        %v1474 = vpop.f32.mrf.mxu0
        %v1475 = vadd.f32 0.0, %v1474
        %v1476 = vpop.f32.mrf.mxu0
        %1477 = vmatprep.mubr.f32.mxu0 0.0
        %1478 = vmatmul.mubr.f32.gmra.mxu0 %v369
        %v1479 = vpop.f32.mrf.mxu0
        %v1480 = vadd.f32 0.0, %v1479
        %v1481 = vpop.f32.mrf.mxu0
        %1482 = vmatprep.mubr.f32.mxu0 0.0
        %1483 = vmatmul.mubr.f32.gmra.mxu0 %v1378
        %v1484 = vpop.f32.mrf.mxu0
        %v1485 = vadd.f32 0.0, %v1484
        %v1486 = vpop.f32.mrf.mxu0
        %1487 = vdwg.mxu0
        %v1488 = vadd.f32 %v1370, %v1450
        %v1489 = vadd.f32 %v1371, %v1455
        %v1490 = vadd.f32 %v1372, %v1460
        %v1491 = vadd.f32 %v1373, %v1465
        %v1492 = vadd.f32 %v1374, %v1470
        %v1493 = vadd.f32 %v1375, %v1475
        %v1494 = vadd.f32 %v1376, %v1480
        %v1495 = vadd.f32 %v1377, %v1485
        %v1497 = vrot.slane %v168, 1
        %v1498 = vsel %vm211, %v227, %v1497
        %v1499 = vsel %vm229, %v1498, 0
        %v1502 = vsel %vm246, %v180, 0
        %1504 = vmatprep.subr.mxu0 0.0
        %1505 = vmatpush1.msra.mxu0 0.0
        %1506 = vmatprep.subr.mxu0 0.0
        %1507 = vmatpush1.msra.mxu0 0.0
        %1508 = vmatprep.subr.mxu0 0.0
        %1509 = vmatpush1.msra.mxu0 0.0
        %1510 = vmatprep.subr.mxu0 0.0
        %1511 = vmatpush1.msra.mxu0 0.0
        %1512 = vmatprep.subr.mxu0 0.0
        %1513 = vmatpush1.msra.mxu0 0.0
        %1514 = vmatprep.subr.mxu0 0.0
        %1515 = vmatpush1.msra.mxu0 0.0
        %1516 = vmatprep.subr.mxu0 0.0
        %1517 = vmatpush1.msra.mxu0 0.0
        %1518 = vmatprep.subr.mxu0 0.0
        %1519 = vmatpush1.msra.mxu0 0.0
        %1520 = vmatprep.subr.mxu0 0.0
        %1521 = vmatpush1.msra.mxu0 0.0
        %1522 = vmatprep.subr.mxu0 0.0
        %1523 = vmatpush1.msra.mxu0 0.0
        %1524 = vmatprep.subr.mxu0 0.0
        %1525 = vmatpush1.msra.mxu0 0.0
        %1526 = vmatprep.subr.mxu0 0.0
        %1527 = vmatpush1.msra.mxu0 0.0
        %1528 = vmatprep.subr.mxu0 0.0
        %1529 = vmatpush1.msra.mxu0 0.0
        %1530 = vmatprep.subr.mxu0 0.0
        %1531 = vmatpush1.msra.mxu0 0.0
        %1532 = vmatprep.subr.mxu0 0.0
        %1533 = vmatpush1.msra.mxu0 0.0
        %1534 = vmatprep.subr.mxu0 0.0
        %1535 = vmatpush1.msra.mxu0 %v1502
        %1536 = vmatprep.subr.mxu0 0.0
        %1537 = vmatpush2.msra.mxu0 0.0
        %1538 = vmatprep.subr.mxu0 0.0
        %1539 = vmatpush2.msra.mxu0 0.0
        %1540 = vmatprep.subr.mxu0 0.0
        %1541 = vmatpush2.msra.mxu0 0.0
        %1542 = vmatprep.subr.mxu0 0.0
        %1543 = vmatpush2.msra.mxu0 0.0
        %1544 = vmatprep.subr.mxu0 0.0
        %1545 = vmatpush2.msra.mxu0 0.0
        %1546 = vmatprep.subr.mxu0 0.0
        %1547 = vmatpush2.msra.mxu0 0.0
        %1548 = vmatprep.subr.mxu0 0.0
        %1549 = vmatpush2.msra.mxu0 0.0
        %1550 = vmatprep.subr.mxu0 0.0
        %1551 = vmatpush2.msra.mxu0 0.0
        %1552 = vmatprep.subr.mxu0 0.0
        %1553 = vmatpush2.msra.mxu0 0.0
        %1554 = vmatprep.subr.mxu0 0.0
        %1555 = vmatpush2.msra.mxu0 0.0
        %1556 = vmatprep.subr.mxu0 0.0
        %1557 = vmatpush2.msra.mxu0 0.0
        %1558 = vmatprep.subr.mxu0 0.0
        %1559 = vmatpush2.msra.mxu0 0.0
        %1560 = vmatprep.subr.mxu0 0.0
        %1561 = vmatpush2.msra.mxu0 0.0
        %1562 = vmatprep.subr.mxu0 0.0
        %1563 = vmatpush2.msra.mxu0 0.0
        %1564 = vmatprep.subr.mxu0 0.0
        %1565 = vmatpush2.msra.mxu0 0.0
        %1566 = vmatprep.subr.mxu0 0.0
        %1567 = vmatpush2.msra.mxu0 0.0
        %1568 = vmatprep.mubr.f32.mxu0 0.0
        %1569 = vmatmul.mubr.f32.gmra.mxu0 %v232
        %v1570 = vpop.f32.mrf.mxu0
        %v1571 = vadd.f32 0.0, %v1570
        %v1572 = vpop.f32.mrf.mxu0
        %1573 = vmatprep.mubr.f32.mxu0 0.0
        %1574 = vmatmul.mubr.f32.gmra.mxu0 %v234
        %v1575 = vpop.f32.mrf.mxu0
        %v1576 = vadd.f32 0.0, %v1575
        %v1577 = vpop.f32.mrf.mxu0
        %1578 = vmatprep.mubr.f32.mxu0 0.0
        %1579 = vmatmul.mubr.f32.gmra.mxu0 %v236
        %v1580 = vpop.f32.mrf.mxu0
        %v1581 = vadd.f32 0.0, %v1580
        %v1582 = vpop.f32.mrf.mxu0
        %1583 = vmatprep.mubr.f32.mxu0 0.0
        %1584 = vmatmul.mubr.f32.gmra.mxu0 %v238
        %v1585 = vpop.f32.mrf.mxu0
        %v1586 = vadd.f32 0.0, %v1585
        %v1587 = vpop.f32.mrf.mxu0
        %1588 = vmatprep.mubr.f32.mxu0 0.0
        %1589 = vmatmul.mubr.f32.gmra.mxu0 %v240
        %v1590 = vpop.f32.mrf.mxu0
        %v1591 = vadd.f32 0.0, %v1590
        %v1592 = vpop.f32.mrf.mxu0
        %1593 = vmatprep.mubr.f32.mxu0 0.0
        %1594 = vmatmul.mubr.f32.gmra.mxu0 %v242
        %v1595 = vpop.f32.mrf.mxu0
        %v1596 = vadd.f32 0.0, %v1595
        %v1597 = vpop.f32.mrf.mxu0
        %1598 = vmatprep.mubr.f32.mxu0 0.0
        %1599 = vmatmul.mubr.f32.gmra.mxu0 %v244
        %v1600 = vpop.f32.mrf.mxu0
        %v1601 = vadd.f32 0.0, %v1600
        %v1602 = vpop.f32.mrf.mxu0
        %1603 = vmatprep.mubr.f32.mxu0 0.0
        %1604 = vmatmul.mubr.f32.gmra.mxu0 %v1499
        %v1605 = vpop.f32.mrf.mxu0
        %v1606 = vadd.f32 0.0, %v1605
        %v1607 = vpop.f32.mrf.mxu0
        %1608 = vdwg.mxu0
        %v1609 = vadd.f32 %v1488, %v1571
        %v1610 = vadd.f32 %v1489, %v1576
        %v1611 = vadd.f32 %v1490, %v1581
        %v1612 = vadd.f32 %v1491, %v1586
        %v1613 = vadd.f32 %v1492, %v1591
        %v1614 = vadd.f32 %v1493, %v1596
        %v1615 = vadd.f32 %v1494, %v1601
        %v1616 = vadd.f32 %v1495, %v1606
        %v1617 = vrot.slane %v168, 2
        %v1618 = vsel %vm479, %v495, %v1617
        %v1619 = vsel %vm229, %v1618, 0
        %v1622 = vsel %vm246, %v181, 0
        %1624 = vmatprep.subr.mxu0 0.0
        %1625 = vmatpush1.msra.mxu0 0.0
        %1626 = vmatprep.subr.mxu0 0.0
        %1627 = vmatpush1.msra.mxu0 0.0
        %1628 = vmatprep.subr.mxu0 0.0
        %1629 = vmatpush1.msra.mxu0 0.0
        %1630 = vmatprep.subr.mxu0 0.0
        %1631 = vmatpush1.msra.mxu0 0.0
        %1632 = vmatprep.subr.mxu0 0.0
        %1633 = vmatpush1.msra.mxu0 0.0
        %1634 = vmatprep.subr.mxu0 0.0
        %1635 = vmatpush1.msra.mxu0 0.0
        %1636 = vmatprep.subr.mxu0 0.0
        %1637 = vmatpush1.msra.mxu0 0.0
        %1638 = vmatprep.subr.mxu0 0.0
        %1639 = vmatpush1.msra.mxu0 0.0
        %1640 = vmatprep.subr.mxu0 0.0
        %1641 = vmatpush1.msra.mxu0 0.0
        %1642 = vmatprep.subr.mxu0 0.0
        %1643 = vmatpush1.msra.mxu0 0.0
        %1644 = vmatprep.subr.mxu0 0.0
        %1645 = vmatpush1.msra.mxu0 0.0
        %1646 = vmatprep.subr.mxu0 0.0
        %1647 = vmatpush1.msra.mxu0 0.0
        %1648 = vmatprep.subr.mxu0 0.0
        %1649 = vmatpush1.msra.mxu0 0.0
        %1650 = vmatprep.subr.mxu0 0.0
        %1651 = vmatpush1.msra.mxu0 0.0
        %1652 = vmatprep.subr.mxu0 0.0
        %1653 = vmatpush1.msra.mxu0 0.0
        %1654 = vmatprep.subr.mxu0 0.0
        %1655 = vmatpush1.msra.mxu0 %v1622
        %1656 = vmatprep.subr.mxu0 0.0
        %1657 = vmatpush2.msra.mxu0 0.0
        %1658 = vmatprep.subr.mxu0 0.0
        %1659 = vmatpush2.msra.mxu0 0.0
        %1660 = vmatprep.subr.mxu0 0.0
        %1661 = vmatpush2.msra.mxu0 0.0
        %1662 = vmatprep.subr.mxu0 0.0
        %1663 = vmatpush2.msra.mxu0 0.0
        %1664 = vmatprep.subr.mxu0 0.0
        %1665 = vmatpush2.msra.mxu0 0.0
        %1666 = vmatprep.subr.mxu0 0.0
        %1667 = vmatpush2.msra.mxu0 0.0
        %1668 = vmatprep.subr.mxu0 0.0
        %1669 = vmatpush2.msra.mxu0 0.0
        %1670 = vmatprep.subr.mxu0 0.0
        %1671 = vmatpush2.msra.mxu0 0.0
        %1672 = vmatprep.subr.mxu0 0.0
        %1673 = vmatpush2.msra.mxu0 0.0
        %1674 = vmatprep.subr.mxu0 0.0
        %1675 = vmatpush2.msra.mxu0 0.0
        %1676 = vmatprep.subr.mxu0 0.0
        %1677 = vmatpush2.msra.mxu0 0.0
        %1678 = vmatprep.subr.mxu0 0.0
        %1679 = vmatpush2.msra.mxu0 0.0
        %1680 = vmatprep.subr.mxu0 0.0
        %1681 = vmatpush2.msra.mxu0 0.0
        %1682 = vmatprep.subr.mxu0 0.0
        %1683 = vmatpush2.msra.mxu0 0.0
        %1684 = vmatprep.subr.mxu0 0.0
        %1685 = vmatpush2.msra.mxu0 0.0
        %1686 = vmatprep.subr.mxu0 0.0
        %1687 = vmatpush2.msra.mxu0 0.0
        %1688 = vmatprep.mubr.f32.mxu0 0.0
        %1689 = vmatmul.mubr.f32.gmra.mxu0 %v499
        %v1690 = vpop.f32.mrf.mxu0
        %v1691 = vadd.f32 0.0, %v1690
        %v1692 = vpop.f32.mrf.mxu0
        %1693 = vmatprep.mubr.f32.mxu0 0.0
        %1694 = vmatmul.mubr.f32.gmra.mxu0 %v501
        %v1695 = vpop.f32.mrf.mxu0
        %v1696 = vadd.f32 0.0, %v1695
        %v1697 = vpop.f32.mrf.mxu0
        %1698 = vmatprep.mubr.f32.mxu0 0.0
        %1699 = vmatmul.mubr.f32.gmra.mxu0 %v503
        %v1700 = vpop.f32.mrf.mxu0
        %v1701 = vadd.f32 0.0, %v1700
        %v1702 = vpop.f32.mrf.mxu0
        %1703 = vmatprep.mubr.f32.mxu0 0.0
        %1704 = vmatmul.mubr.f32.gmra.mxu0 %v505
        %v1705 = vpop.f32.mrf.mxu0
        %v1706 = vadd.f32 0.0, %v1705
        %v1707 = vpop.f32.mrf.mxu0
        %1708 = vmatprep.mubr.f32.mxu0 0.0
        %1709 = vmatmul.mubr.f32.gmra.mxu0 %v507
        %v1710 = vpop.f32.mrf.mxu0
        %v1711 = vadd.f32 0.0, %v1710
        %v1712 = vpop.f32.mrf.mxu0
        %1713 = vmatprep.mubr.f32.mxu0 0.0
        %1714 = vmatmul.mubr.f32.gmra.mxu0 %v509
        %v1715 = vpop.f32.mrf.mxu0
        %v1716 = vadd.f32 0.0, %v1715
        %v1717 = vpop.f32.mrf.mxu0
        %1718 = vmatprep.mubr.f32.mxu0 0.0
        %1719 = vmatmul.mubr.f32.gmra.mxu0 %v511
        %v1720 = vpop.f32.mrf.mxu0
        %v1721 = vadd.f32 0.0, %v1720
        %v1722 = vpop.f32.mrf.mxu0
        %1723 = vmatprep.mubr.f32.mxu0 0.0
        %1724 = vmatmul.mubr.f32.gmra.mxu0 %v1619
        %v1725 = vpop.f32.mrf.mxu0
        %v1726 = vadd.f32 0.0, %v1725
        %v1727 = vpop.f32.mrf.mxu0
        %1728 = vdwg.mxu0
        %v1729 = vadd.f32 %v1609, %v1691
        %v1730 = vadd.f32 %v1610, %v1696
        %v1731 = vadd.f32 %v1611, %v1701
        %v1732 = vadd.f32 %v1612, %v1706
        %v1733 = vadd.f32 %v1613, %v1711
        %v1734 = vadd.f32 %v1614, %v1716
        %v1735 = vadd.f32 %v1615, %v1721
        %v1736 = vadd.f32 %v1616, %v1726
        %v1737 = vrot.slane %v168, 3
        %v1738 = vsel %vm629, %v645, %v1737
        %v1739 = vsel %vm229, %v1738, 0
        %v1742 = vsel %vm246, %v182, 0
        %1744 = vmatprep.subr.mxu0 0.0
        %1745 = vmatpush1.msra.mxu0 0.0
        %1746 = vmatprep.subr.mxu0 0.0
        %1747 = vmatpush1.msra.mxu0 0.0
        %1748 = vmatprep.subr.mxu0 0.0
        %1749 = vmatpush1.msra.mxu0 0.0
        %1750 = vmatprep.subr.mxu0 0.0
        %1751 = vmatpush1.msra.mxu0 0.0
        %1752 = vmatprep.subr.mxu0 0.0
        %1753 = vmatpush1.msra.mxu0 0.0
        %1754 = vmatprep.subr.mxu0 0.0
        %1755 = vmatpush1.msra.mxu0 0.0
        %1756 = vmatprep.subr.mxu0 0.0
        %1757 = vmatpush1.msra.mxu0 0.0
        %1758 = vmatprep.subr.mxu0 0.0
        %1759 = vmatpush1.msra.mxu0 0.0
        %1760 = vmatprep.subr.mxu0 0.0
        %1761 = vmatpush1.msra.mxu0 0.0
        %1762 = vmatprep.subr.mxu0 0.0
        %1763 = vmatpush1.msra.mxu0 0.0
        %1764 = vmatprep.subr.mxu0 0.0
        %1765 = vmatpush1.msra.mxu0 0.0
        %1766 = vmatprep.subr.mxu0 0.0
        %1767 = vmatpush1.msra.mxu0 0.0
        %1768 = vmatprep.subr.mxu0 0.0
        %1769 = vmatpush1.msra.mxu0 0.0
        %1770 = vmatprep.subr.mxu0 0.0
        %1771 = vmatpush1.msra.mxu0 0.0
        %1772 = vmatprep.subr.mxu0 0.0
        %1773 = vmatpush1.msra.mxu0 0.0
        %1774 = vmatprep.subr.mxu0 0.0
        %1775 = vmatpush1.msra.mxu0 %v1742
        %1776 = vmatprep.subr.mxu0 0.0
        %1777 = vmatpush2.msra.mxu0 0.0
        %1778 = vmatprep.subr.mxu0 0.0
        %1779 = vmatpush2.msra.mxu0 0.0
        %1780 = vmatprep.subr.mxu0 0.0
        %1781 = vmatpush2.msra.mxu0 0.0
        %1782 = vmatprep.subr.mxu0 0.0
        %1783 = vmatpush2.msra.mxu0 0.0
        %1784 = vmatprep.subr.mxu0 0.0
        %1785 = vmatpush2.msra.mxu0 0.0
        %1786 = vmatprep.subr.mxu0 0.0
        %1787 = vmatpush2.msra.mxu0 0.0
        %1788 = vmatprep.subr.mxu0 0.0
        %1789 = vmatpush2.msra.mxu0 0.0
        %1790 = vmatprep.subr.mxu0 0.0
        %1791 = vmatpush2.msra.mxu0 0.0
        %1792 = vmatprep.subr.mxu0 0.0
        %1793 = vmatpush2.msra.mxu0 0.0
        %1794 = vmatprep.subr.mxu0 0.0
        %1795 = vmatpush2.msra.mxu0 0.0
        %1796 = vmatprep.subr.mxu0 0.0
        %1797 = vmatpush2.msra.mxu0 0.0
        %1798 = vmatprep.subr.mxu0 0.0
        %1799 = vmatpush2.msra.mxu0 0.0
        %1800 = vmatprep.subr.mxu0 0.0
        %1801 = vmatpush2.msra.mxu0 0.0
        %1802 = vmatprep.subr.mxu0 0.0
        %1803 = vmatpush2.msra.mxu0 0.0
        %1804 = vmatprep.subr.mxu0 0.0
        %1805 = vmatpush2.msra.mxu0 0.0
        %1806 = vmatprep.subr.mxu0 0.0
        %1807 = vmatpush2.msra.mxu0 0.0
        %1808 = vmatprep.mubr.f32.mxu0 0.0
        %1809 = vmatmul.mubr.f32.gmra.mxu0 %v649
        %v1810 = vpop.f32.mrf.mxu0
        %v1811 = vadd.f32 0.0, %v1810
        %v1812 = vpop.f32.mrf.mxu0
        %1813 = vmatprep.mubr.f32.mxu0 0.0
        %1814 = vmatmul.mubr.f32.gmra.mxu0 %v651
        %v1815 = vpop.f32.mrf.mxu0
        %v1816 = vadd.f32 0.0, %v1815
        %v1817 = vpop.f32.mrf.mxu0
        %1818 = vmatprep.mubr.f32.mxu0 0.0
        %1819 = vmatmul.mubr.f32.gmra.mxu0 %v653
        %v1820 = vpop.f32.mrf.mxu0
        %v1821 = vadd.f32 0.0, %v1820
        %v1822 = vpop.f32.mrf.mxu0
        %1823 = vmatprep.mubr.f32.mxu0 0.0
        %1824 = vmatmul.mubr.f32.gmra.mxu0 %v655
        %v1825 = vpop.f32.mrf.mxu0
        %v1826 = vadd.f32 0.0, %v1825
        %v1827 = vpop.f32.mrf.mxu0
        %1828 = vmatprep.mubr.f32.mxu0 0.0
        %1829 = vmatmul.mubr.f32.gmra.mxu0 %v657
        %v1830 = vpop.f32.mrf.mxu0
        %v1831 = vadd.f32 0.0, %v1830
        %v1832 = vpop.f32.mrf.mxu0
        %1833 = vmatprep.mubr.f32.mxu0 0.0
        %1834 = vmatmul.mubr.f32.gmra.mxu0 %v659
        %v1835 = vpop.f32.mrf.mxu0
        %v1836 = vadd.f32 0.0, %v1835
        %v1837 = vpop.f32.mrf.mxu0
        %1838 = vmatprep.mubr.f32.mxu0 0.0
        %1839 = vmatmul.mubr.f32.gmra.mxu0 %v661
        %v1840 = vpop.f32.mrf.mxu0
        %v1841 = vadd.f32 0.0, %v1840
        %v1842 = vpop.f32.mrf.mxu0
        %1843 = vmatprep.mubr.f32.mxu0 0.0
        %1844 = vmatmul.mubr.f32.gmra.mxu0 %v1739
        %v1845 = vpop.f32.mrf.mxu0
        %v1846 = vadd.f32 0.0, %v1845
        %v1847 = vpop.f32.mrf.mxu0
        %1848 = vdwg.mxu0
        %v1849 = vadd.f32 %v1729, %v1811
        %v1850 = vadd.f32 %v1730, %v1816
        %v1851 = vadd.f32 %v1731, %v1821
        %v1852 = vadd.f32 %v1732, %v1826
        %v1853 = vadd.f32 %v1733, %v1831
        %v1854 = vadd.f32 %v1734, %v1836
        %v1855 = vadd.f32 %v1735, %v1841
        %v1856 = vadd.f32 %v1736, %v1846
        %v1857 = vrot.slane %v168, 4
        %v1858 = vsel %vm779, %v795, %v1857
        %v1859 = vsel %vm229, %v1858, 0
        %v1862 = vsel %vm246, %v183, 0
        %1864 = vmatprep.subr.mxu0 0.0
        %1865 = vmatpush1.msra.mxu0 0.0
        %1866 = vmatprep.subr.mxu0 0.0
        %1867 = vmatpush1.msra.mxu0 0.0
        %1868 = vmatprep.subr.mxu0 0.0
        %1869 = vmatpush1.msra.mxu0 0.0
        %1870 = vmatprep.subr.mxu0 0.0
        %1871 = vmatpush1.msra.mxu0 0.0
        %1872 = vmatprep.subr.mxu0 0.0
        %1873 = vmatpush1.msra.mxu0 0.0
        %1874 = vmatprep.subr.mxu0 0.0
        %1875 = vmatpush1.msra.mxu0 0.0
        %1876 = vmatprep.subr.mxu0 0.0
        %1877 = vmatpush1.msra.mxu0 0.0
        %1878 = vmatprep.subr.mxu0 0.0
        %1879 = vmatpush1.msra.mxu0 0.0
        %1880 = vmatprep.subr.mxu0 0.0
        %1881 = vmatpush1.msra.mxu0 0.0
        %1882 = vmatprep.subr.mxu0 0.0
        %1883 = vmatpush1.msra.mxu0 0.0
        %1884 = vmatprep.subr.mxu0 0.0
        %1885 = vmatpush1.msra.mxu0 0.0
        %1886 = vmatprep.subr.mxu0 0.0
        %1887 = vmatpush1.msra.mxu0 0.0
        %1888 = vmatprep.subr.mxu0 0.0
        %1889 = vmatpush1.msra.mxu0 0.0
        %1890 = vmatprep.subr.mxu0 0.0
        %1891 = vmatpush1.msra.mxu0 0.0
        %1892 = vmatprep.subr.mxu0 0.0
        %1893 = vmatpush1.msra.mxu0 0.0
        %1894 = vmatprep.subr.mxu0 0.0
        %1895 = vmatpush1.msra.mxu0 %v1862
        %1896 = vmatprep.subr.mxu0 0.0
        %1897 = vmatpush2.msra.mxu0 0.0
        %1898 = vmatprep.subr.mxu0 0.0
        %1899 = vmatpush2.msra.mxu0 0.0
        %1900 = vmatprep.subr.mxu0 0.0
        %1901 = vmatpush2.msra.mxu0 0.0
        %1902 = vmatprep.subr.mxu0 0.0
        %1903 = vmatpush2.msra.mxu0 0.0
        %1904 = vmatprep.subr.mxu0 0.0
        %1905 = vmatpush2.msra.mxu0 0.0
        %1906 = vmatprep.subr.mxu0 0.0
        %1907 = vmatpush2.msra.mxu0 0.0
        %1908 = vmatprep.subr.mxu0 0.0
        %1909 = vmatpush2.msra.mxu0 0.0
        %1910 = vmatprep.subr.mxu0 0.0
        %1911 = vmatpush2.msra.mxu0 0.0
        %1912 = vmatprep.subr.mxu0 0.0
        %1913 = vmatpush2.msra.mxu0 0.0
        %1914 = vmatprep.subr.mxu0 0.0
        %1915 = vmatpush2.msra.mxu0 0.0
        %1916 = vmatprep.subr.mxu0 0.0
        %1917 = vmatpush2.msra.mxu0 0.0
        %1918 = vmatprep.subr.mxu0 0.0
        %1919 = vmatpush2.msra.mxu0 0.0
        %1920 = vmatprep.subr.mxu0 0.0
        %1921 = vmatpush2.msra.mxu0 0.0
        %1922 = vmatprep.subr.mxu0 0.0
        %1923 = vmatpush2.msra.mxu0 0.0
        %1924 = vmatprep.subr.mxu0 0.0
        %1925 = vmatpush2.msra.mxu0 0.0
        %1926 = vmatprep.subr.mxu0 0.0
        %1927 = vmatpush2.msra.mxu0 0.0
        %1928 = vmatprep.mubr.f32.mxu0 0.0
        %1929 = vmatmul.mubr.f32.gmra.mxu0 %v799
        %v1930 = vpop.f32.mrf.mxu0
        %v1931 = vadd.f32 0.0, %v1930
        %v1932 = vpop.f32.mrf.mxu0
        %1933 = vmatprep.mubr.f32.mxu0 0.0
        %1934 = vmatmul.mubr.f32.gmra.mxu0 %v801
        %v1935 = vpop.f32.mrf.mxu0
        %v1936 = vadd.f32 0.0, %v1935
        %v1937 = vpop.f32.mrf.mxu0
        %1938 = vmatprep.mubr.f32.mxu0 0.0
        %1939 = vmatmul.mubr.f32.gmra.mxu0 %v803
        %v1940 = vpop.f32.mrf.mxu0
        %v1941 = vadd.f32 0.0, %v1940
        %v1942 = vpop.f32.mrf.mxu0
        %1943 = vmatprep.mubr.f32.mxu0 0.0
        %1944 = vmatmul.mubr.f32.gmra.mxu0 %v805
        %v1945 = vpop.f32.mrf.mxu0
        %v1946 = vadd.f32 0.0, %v1945
        %v1947 = vpop.f32.mrf.mxu0
        %1948 = vmatprep.mubr.f32.mxu0 0.0
        %1949 = vmatmul.mubr.f32.gmra.mxu0 %v807
        %v1950 = vpop.f32.mrf.mxu0
        %v1951 = vadd.f32 0.0, %v1950
        %v1952 = vpop.f32.mrf.mxu0
        %1953 = vmatprep.mubr.f32.mxu0 0.0
        %1954 = vmatmul.mubr.f32.gmra.mxu0 %v809
        %v1955 = vpop.f32.mrf.mxu0
        %v1956 = vadd.f32 0.0, %v1955
        %v1957 = vpop.f32.mrf.mxu0
        %1958 = vmatprep.mubr.f32.mxu0 0.0
        %1959 = vmatmul.mubr.f32.gmra.mxu0 %v811
        %v1960 = vpop.f32.mrf.mxu0
        %v1961 = vadd.f32 0.0, %v1960
        %v1962 = vpop.f32.mrf.mxu0
        %1963 = vmatprep.mubr.f32.mxu0 0.0
        %1964 = vmatmul.mubr.f32.gmra.mxu0 %v1859
        %v1965 = vpop.f32.mrf.mxu0
        %v1966 = vadd.f32 0.0, %v1965
        %v1967 = vpop.f32.mrf.mxu0
        %1968 = vdwg.mxu0
        %v1969 = vadd.f32 %v1849, %v1931
        %v1970 = vadd.f32 %v1850, %v1936
        %v1971 = vadd.f32 %v1851, %v1941
        %v1972 = vadd.f32 %v1852, %v1946
        %v1973 = vadd.f32 %v1853, %v1951
        %v1974 = vadd.f32 %v1854, %v1956
        %v1975 = vadd.f32 %v1855, %v1961
        %v1976 = vadd.f32 %v1856, %v1966
        %v1977 = vrot.slane %v168, 5
        %v1978 = vsel %vm929, %v945, %v1977
        %v1979 = vsel %vm229, %v1978, 0
        %v1982 = vsel %vm246, %v184, 0
        %1984 = vmatprep.subr.mxu0 0.0
        %1985 = vmatpush1.msra.mxu0 0.0
        %1986 = vmatprep.subr.mxu0 0.0
        %1987 = vmatpush1.msra.mxu0 0.0
        %1988 = vmatprep.subr.mxu0 0.0
        %1989 = vmatpush1.msra.mxu0 0.0
        %1990 = vmatprep.subr.mxu0 0.0
        %1991 = vmatpush1.msra.mxu0 0.0
        %1992 = vmatprep.subr.mxu0 0.0
        %1993 = vmatpush1.msra.mxu0 0.0
        %1994 = vmatprep.subr.mxu0 0.0
        %1995 = vmatpush1.msra.mxu0 0.0
        %1996 = vmatprep.subr.mxu0 0.0
        %1997 = vmatpush1.msra.mxu0 0.0
        %1998 = vmatprep.subr.mxu0 0.0
        %1999 = vmatpush1.msra.mxu0 0.0
        %2000 = vmatprep.subr.mxu0 0.0
        %2001 = vmatpush1.msra.mxu0 0.0
        %2002 = vmatprep.subr.mxu0 0.0
        %2003 = vmatpush1.msra.mxu0 0.0
        %2004 = vmatprep.subr.mxu0 0.0
        %2005 = vmatpush1.msra.mxu0 0.0
        %2006 = vmatprep.subr.mxu0 0.0
        %2007 = vmatpush1.msra.mxu0 0.0
        %2008 = vmatprep.subr.mxu0 0.0
        %2009 = vmatpush1.msra.mxu0 0.0
        %2010 = vmatprep.subr.mxu0 0.0
        %2011 = vmatpush1.msra.mxu0 0.0
        %2012 = vmatprep.subr.mxu0 0.0
        %2013 = vmatpush1.msra.mxu0 0.0
        %2014 = vmatprep.subr.mxu0 0.0
        %2015 = vmatpush1.msra.mxu0 %v1982
        %2016 = vmatprep.subr.mxu0 0.0
        %2017 = vmatpush2.msra.mxu0 0.0
        %2018 = vmatprep.subr.mxu0 0.0
        %2019 = vmatpush2.msra.mxu0 0.0
        %2020 = vmatprep.subr.mxu0 0.0
        %2021 = vmatpush2.msra.mxu0 0.0
        %2022 = vmatprep.subr.mxu0 0.0
        %2023 = vmatpush2.msra.mxu0 0.0
        %2024 = vmatprep.subr.mxu0 0.0
        %2025 = vmatpush2.msra.mxu0 0.0
        %2026 = vmatprep.subr.mxu0 0.0
        %2027 = vmatpush2.msra.mxu0 0.0
        %2028 = vmatprep.subr.mxu0 0.0
        %2029 = vmatpush2.msra.mxu0 0.0
        %2030 = vmatprep.subr.mxu0 0.0
        %2031 = vmatpush2.msra.mxu0 0.0
        %2032 = vmatprep.subr.mxu0 0.0
        %2033 = vmatpush2.msra.mxu0 0.0
        %2034 = vmatprep.subr.mxu0 0.0
        %2035 = vmatpush2.msra.mxu0 0.0
        %2036 = vmatprep.subr.mxu0 0.0
        %2037 = vmatpush2.msra.mxu0 0.0
        %2038 = vmatprep.subr.mxu0 0.0
        %2039 = vmatpush2.msra.mxu0 0.0
        %2040 = vmatprep.subr.mxu0 0.0
        %2041 = vmatpush2.msra.mxu0 0.0
        %2042 = vmatprep.subr.mxu0 0.0
        %2043 = vmatpush2.msra.mxu0 0.0
        %2044 = vmatprep.subr.mxu0 0.0
        %2045 = vmatpush2.msra.mxu0 0.0
        %2046 = vmatprep.subr.mxu0 0.0
        %2047 = vmatpush2.msra.mxu0 0.0
        %2048 = vmatprep.mubr.f32.mxu0 0.0
        %2049 = vmatmul.mubr.f32.gmra.mxu0 %v949
        %v2050 = vpop.f32.mrf.mxu0
        %v2051 = vadd.f32 0.0, %v2050
        %v2052 = vpop.f32.mrf.mxu0
        %2053 = vmatprep.mubr.f32.mxu0 0.0
        %2054 = vmatmul.mubr.f32.gmra.mxu0 %v951
        %v2055 = vpop.f32.mrf.mxu0
        %v2056 = vadd.f32 0.0, %v2055
        %v2057 = vpop.f32.mrf.mxu0
        %2058 = vmatprep.mubr.f32.mxu0 0.0
        %2059 = vmatmul.mubr.f32.gmra.mxu0 %v953
        %v2060 = vpop.f32.mrf.mxu0
        %v2061 = vadd.f32 0.0, %v2060
        %v2062 = vpop.f32.mrf.mxu0
        %2063 = vmatprep.mubr.f32.mxu0 0.0
        %2064 = vmatmul.mubr.f32.gmra.mxu0 %v955
        %v2065 = vpop.f32.mrf.mxu0
        %v2066 = vadd.f32 0.0, %v2065
        %v2067 = vpop.f32.mrf.mxu0
        %2068 = vmatprep.mubr.f32.mxu0 0.0
        %2069 = vmatmul.mubr.f32.gmra.mxu0 %v957
        %v2070 = vpop.f32.mrf.mxu0
        %v2071 = vadd.f32 0.0, %v2070
        %v2072 = vpop.f32.mrf.mxu0
        %2073 = vmatprep.mubr.f32.mxu0 0.0
        %2074 = vmatmul.mubr.f32.gmra.mxu0 %v959
        %v2075 = vpop.f32.mrf.mxu0
        %v2076 = vadd.f32 0.0, %v2075
        %v2077 = vpop.f32.mrf.mxu0
        %2078 = vmatprep.mubr.f32.mxu0 0.0
        %2079 = vmatmul.mubr.f32.gmra.mxu0 %v961
        %v2080 = vpop.f32.mrf.mxu0
        %v2081 = vadd.f32 0.0, %v2080
        %v2082 = vpop.f32.mrf.mxu0
        %2083 = vmatprep.mubr.f32.mxu0 0.0
        %2084 = vmatmul.mubr.f32.gmra.mxu0 %v1979
        %v2085 = vpop.f32.mrf.mxu0
        %v2086 = vadd.f32 0.0, %v2085
        %v2087 = vpop.f32.mrf.mxu0
        %2088 = vdwg.mxu0
        %v2089 = vadd.f32 %v1969, %v2051
        %v2090 = vadd.f32 %v1970, %v2056
        %v2091 = vadd.f32 %v1971, %v2061
        %v2092 = vadd.f32 %v1972, %v2066
        %v2093 = vadd.f32 %v1973, %v2071
        %v2094 = vadd.f32 %v1974, %v2076
        %v2095 = vadd.f32 %v1975, %v2081
        %v2096 = vadd.f32 %v1976, %v2086
        %v2097 = vrot.slane %v168, 6
        %v2098 = vsel %vm246, %v1094, %v2097
        %v2099 = vsel %vm229, %v2098, 0
        %v2102 = vsel %vm246, %v185, 0
        %2104 = vmatprep.subr.mxu0 0.0
        %2105 = vmatpush1.msra.mxu0 0.0
        %2106 = vmatprep.subr.mxu0 0.0
        %2107 = vmatpush1.msra.mxu0 0.0
        %2108 = vmatprep.subr.mxu0 0.0
        %2109 = vmatpush1.msra.mxu0 0.0
        %2110 = vmatprep.subr.mxu0 0.0
        %2111 = vmatpush1.msra.mxu0 0.0
        %2112 = vmatprep.subr.mxu0 0.0
        %2113 = vmatpush1.msra.mxu0 0.0
        %2114 = vmatprep.subr.mxu0 0.0
        %2115 = vmatpush1.msra.mxu0 0.0
        %2116 = vmatprep.subr.mxu0 0.0
        %2117 = vmatpush1.msra.mxu0 0.0
        %2118 = vmatprep.subr.mxu0 0.0
        %2119 = vmatpush1.msra.mxu0 0.0
        %2120 = vmatprep.subr.mxu0 0.0
        %2121 = vmatpush1.msra.mxu0 0.0
        %2122 = vmatprep.subr.mxu0 0.0
        %2123 = vmatpush1.msra.mxu0 0.0
        %2124 = vmatprep.subr.mxu0 0.0
        %2125 = vmatpush1.msra.mxu0 0.0
        %2126 = vmatprep.subr.mxu0 0.0
        %2127 = vmatpush1.msra.mxu0 0.0
        %2128 = vmatprep.subr.mxu0 0.0
        %2129 = vmatpush1.msra.mxu0 0.0
        %2130 = vmatprep.subr.mxu0 0.0
        %2131 = vmatpush1.msra.mxu0 0.0
        %2132 = vmatprep.subr.mxu0 0.0
        %2133 = vmatpush1.msra.mxu0 0.0
        %2134 = vmatprep.subr.mxu0 0.0
        %2135 = vmatpush1.msra.mxu0 %v2102
        %2136 = vmatprep.subr.mxu0 0.0
        %2137 = vmatpush2.msra.mxu0 0.0
        %2138 = vmatprep.subr.mxu0 0.0
        %2139 = vmatpush2.msra.mxu0 0.0
        %2140 = vmatprep.subr.mxu0 0.0
        %2141 = vmatpush2.msra.mxu0 0.0
        %2142 = vmatprep.subr.mxu0 0.0
        %2143 = vmatpush2.msra.mxu0 0.0
        %2144 = vmatprep.subr.mxu0 0.0
        %2145 = vmatpush2.msra.mxu0 0.0
        %2146 = vmatprep.subr.mxu0 0.0
        %2147 = vmatpush2.msra.mxu0 0.0
        %2148 = vmatprep.subr.mxu0 0.0
        %2149 = vmatpush2.msra.mxu0 0.0
        %2150 = vmatprep.subr.mxu0 0.0
        %2151 = vmatpush2.msra.mxu0 0.0
        %2152 = vmatprep.subr.mxu0 0.0
        %2153 = vmatpush2.msra.mxu0 0.0
        %2154 = vmatprep.subr.mxu0 0.0
        %2155 = vmatpush2.msra.mxu0 0.0
        %2156 = vmatprep.subr.mxu0 0.0
        %2157 = vmatpush2.msra.mxu0 0.0
        %2158 = vmatprep.subr.mxu0 0.0
        %2159 = vmatpush2.msra.mxu0 0.0
        %2160 = vmatprep.subr.mxu0 0.0
        %2161 = vmatpush2.msra.mxu0 0.0
        %2162 = vmatprep.subr.mxu0 0.0
        %2163 = vmatpush2.msra.mxu0 0.0
        %2164 = vmatprep.subr.mxu0 0.0
        %2165 = vmatpush2.msra.mxu0 0.0
        %2166 = vmatprep.subr.mxu0 0.0
        %2167 = vmatpush2.msra.mxu0 0.0
        %2168 = vmatprep.mubr.f32.mxu0 0.0
        %2169 = vmatmul.mubr.f32.gmra.mxu0 %v1098
        %v2170 = vpop.f32.mrf.mxu0
        %v2171 = vadd.f32 0.0, %v2170
        %v2172 = vpop.f32.mrf.mxu0
        %2173 = vmatprep.mubr.f32.mxu0 0.0
        %2174 = vmatmul.mubr.f32.gmra.mxu0 %v1100
        %v2175 = vpop.f32.mrf.mxu0
        %v2176 = vadd.f32 0.0, %v2175
        %v2177 = vpop.f32.mrf.mxu0
        %2178 = vmatprep.mubr.f32.mxu0 0.0
        %2179 = vmatmul.mubr.f32.gmra.mxu0 %v1102
        %v2180 = vpop.f32.mrf.mxu0
        %v2181 = vadd.f32 0.0, %v2180
        %v2182 = vpop.f32.mrf.mxu0
        %2183 = vmatprep.mubr.f32.mxu0 0.0
        %2184 = vmatmul.mubr.f32.gmra.mxu0 %v1104
        %v2185 = vpop.f32.mrf.mxu0
        %v2186 = vadd.f32 0.0, %v2185
        %v2187 = vpop.f32.mrf.mxu0
        %2188 = vmatprep.mubr.f32.mxu0 0.0
        %2189 = vmatmul.mubr.f32.gmra.mxu0 %v1106
        %v2190 = vpop.f32.mrf.mxu0
        %v2191 = vadd.f32 0.0, %v2190
        %v2192 = vpop.f32.mrf.mxu0
        %2193 = vmatprep.mubr.f32.mxu0 0.0
        %2194 = vmatmul.mubr.f32.gmra.mxu0 %v1108
        %v2195 = vpop.f32.mrf.mxu0
        %v2196 = vadd.f32 0.0, %v2195
        %v2197 = vpop.f32.mrf.mxu0
        %2198 = vmatprep.mubr.f32.mxu0 0.0
        %2199 = vmatmul.mubr.f32.gmra.mxu0 %v1110
        %v2200 = vpop.f32.mrf.mxu0
        %v2201 = vadd.f32 0.0, %v2200
        %v2202 = vpop.f32.mrf.mxu0
        %2203 = vmatprep.mubr.f32.mxu0 0.0
        %2204 = vmatmul.mubr.f32.gmra.mxu0 %v2099
        %v2205 = vpop.f32.mrf.mxu0
        %v2206 = vadd.f32 0.0, %v2205
        %v2207 = vpop.f32.mrf.mxu0
        %2208 = vdwg.mxu0
        %v2209 = vadd.f32 %v2089, %v2171
        %v2210 = vadd.f32 %v2090, %v2176
        %v2211 = vadd.f32 %v2091, %v2181
        %v2212 = vadd.f32 %v2092, %v2186
        %v2213 = vadd.f32 %v2093, %v2191
        %v2214 = vadd.f32 %v2094, %v2196
        %v2215 = vadd.f32 %v2095, %v2201
        %v2216 = vadd.f32 %v2096, %v2206
        %v2217 = vrot.slane %v168, 7
        %v2218 = vsel %vm1228, %v1244, %v2217
        %v2219 = vsel %vm229, %v2218, 0
        %v2222 = vsel %vm246, %v186, 0
        %2224 = vmatprep.subr.mxu0 0.0
        %2225 = vmatpush1.msra.mxu0 0.0
        %2226 = vmatprep.subr.mxu0 0.0
        %2227 = vmatpush1.msra.mxu0 0.0
        %2228 = vmatprep.subr.mxu0 0.0
        %2229 = vmatpush1.msra.mxu0 0.0
        %2230 = vmatprep.subr.mxu0 0.0
        %2231 = vmatpush1.msra.mxu0 0.0
        %2232 = vmatprep.subr.mxu0 0.0
        %2233 = vmatpush1.msra.mxu0 0.0
        %2234 = vmatprep.subr.mxu0 0.0
        %2235 = vmatpush1.msra.mxu0 0.0
        %2236 = vmatprep.subr.mxu0 0.0
        %2237 = vmatpush1.msra.mxu0 0.0
        %2238 = vmatprep.subr.mxu0 0.0
        %2239 = vmatpush1.msra.mxu0 0.0
        %2240 = vmatprep.subr.mxu0 0.0
        %2241 = vmatpush1.msra.mxu0 0.0
        %2242 = vmatprep.subr.mxu0 0.0
        %2243 = vmatpush1.msra.mxu0 0.0
        %2244 = vmatprep.subr.mxu0 0.0
        %2245 = vmatpush1.msra.mxu0 0.0
        %2246 = vmatprep.subr.mxu0 0.0
        %2247 = vmatpush1.msra.mxu0 0.0
        %2248 = vmatprep.subr.mxu0 0.0
        %2249 = vmatpush1.msra.mxu0 0.0
        %2250 = vmatprep.subr.mxu0 0.0
        %2251 = vmatpush1.msra.mxu0 0.0
        %2252 = vmatprep.subr.mxu0 0.0
        %2253 = vmatpush1.msra.mxu0 0.0
        %2254 = vmatprep.subr.mxu0 0.0
        %2255 = vmatpush1.msra.mxu0 %v2222
        %2256 = vmatprep.subr.mxu0 0.0
        %2257 = vmatpush2.msra.mxu0 0.0
        %2258 = vmatprep.subr.mxu0 0.0
        %2259 = vmatpush2.msra.mxu0 0.0
        %2260 = vmatprep.subr.mxu0 0.0
        %2261 = vmatpush2.msra.mxu0 0.0
        %2262 = vmatprep.subr.mxu0 0.0
        %2263 = vmatpush2.msra.mxu0 0.0
        %2264 = vmatprep.subr.mxu0 0.0
        %2265 = vmatpush2.msra.mxu0 0.0
        %2266 = vmatprep.subr.mxu0 0.0
        %2267 = vmatpush2.msra.mxu0 0.0
        %2268 = vmatprep.subr.mxu0 0.0
        %2269 = vmatpush2.msra.mxu0 0.0
        %2270 = vmatprep.subr.mxu0 0.0
        %2271 = vmatpush2.msra.mxu0 0.0
        %2272 = vmatprep.subr.mxu0 0.0
        %2273 = vmatpush2.msra.mxu0 0.0
        %2274 = vmatprep.subr.mxu0 0.0
        %2275 = vmatpush2.msra.mxu0 0.0
        %2276 = vmatprep.subr.mxu0 0.0
        %2277 = vmatpush2.msra.mxu0 0.0
        %2278 = vmatprep.subr.mxu0 0.0
        %2279 = vmatpush2.msra.mxu0 0.0
        %2280 = vmatprep.subr.mxu0 0.0
        %2281 = vmatpush2.msra.mxu0 0.0
        %2282 = vmatprep.subr.mxu0 0.0
        %2283 = vmatpush2.msra.mxu0 0.0
        %2284 = vmatprep.subr.mxu0 0.0
        %2285 = vmatpush2.msra.mxu0 0.0
        %2286 = vmatprep.subr.mxu0 0.0
        %2287 = vmatpush2.msra.mxu0 0.0
        %2288 = vmatprep.mubr.f32.mxu0 0.0
        %2289 = vmatmul.mubr.f32.gmra.mxu0 %v1248
        %v2290 = vpop.f32.mrf.mxu0
        %v2291 = vadd.f32 0.0, %v2290
        %v2292 = vpop.f32.mrf.mxu0
        %2293 = vmatprep.mubr.f32.mxu0 0.0
        %2294 = vmatmul.mubr.f32.gmra.mxu0 %v1250
        %v2295 = vpop.f32.mrf.mxu0
        %v2296 = vadd.f32 0.0, %v2295
        %v2297 = vpop.f32.mrf.mxu0
        %2298 = vmatprep.mubr.f32.mxu0 0.0
        %2299 = vmatmul.mubr.f32.gmra.mxu0 %v1252
        %v2300 = vpop.f32.mrf.mxu0
        %v2301 = vadd.f32 0.0, %v2300
        %v2302 = vpop.f32.mrf.mxu0
        %2303 = vmatprep.mubr.f32.mxu0 0.0
        %2304 = vmatmul.mubr.f32.gmra.mxu0 %v1254
        %v2305 = vpop.f32.mrf.mxu0
        %v2306 = vadd.f32 0.0, %v2305
        %v2307 = vpop.f32.mrf.mxu0
        %2308 = vmatprep.mubr.f32.mxu0 0.0
        %2309 = vmatmul.mubr.f32.gmra.mxu0 %v1256
        %v2310 = vpop.f32.mrf.mxu0
        %v2311 = vadd.f32 0.0, %v2310
        %v2312 = vpop.f32.mrf.mxu0
        %2313 = vmatprep.mubr.f32.mxu0 0.0
        %2314 = vmatmul.mubr.f32.gmra.mxu0 %v1258
        %v2315 = vpop.f32.mrf.mxu0
        %v2316 = vadd.f32 0.0, %v2315
        %v2317 = vpop.f32.mrf.mxu0
        %2318 = vmatprep.mubr.f32.mxu0 0.0
        %2319 = vmatmul.mubr.f32.gmra.mxu0 %v1260
        %v2320 = vpop.f32.mrf.mxu0
        %v2321 = vadd.f32 0.0, %v2320
        %v2322 = vpop.f32.mrf.mxu0
        %2323 = vmatprep.mubr.f32.mxu0 0.0
        %2324 = vmatmul.mubr.f32.gmra.mxu0 %v2219
        %v2325 = vpop.f32.mrf.mxu0
        %v2326 = vadd.f32 0.0, %v2325
        %v2327 = vpop.f32.mrf.mxu0
        %2328 = vdwg.mxu0
        %v2329 = vadd.f32 %v2209, %v2291
        %v2330 = vadd.f32 %v2210, %v2296
        %v2331 = vadd.f32 %v2211, %v2301
        %v2332 = vadd.f32 %v2212, %v2306
        %v2333 = vadd.f32 %v2213, %v2311
        %v2334 = vadd.f32 %v2214, %v2316
        %v2335 = vadd.f32 %v2215, %v2321
        %v2336 = vadd.f32 %v2216, %v2326
        %v2337 = vsel %vm229, %v168, 0
        %v2340 = vsel %vm246, %v187, 0
        %2342 = vmatprep.subr.mxu0 0.0
        %2343 = vmatpush1.msra.mxu0 0.0
        %2344 = vmatprep.subr.mxu0 0.0
        %2345 = vmatpush1.msra.mxu0 0.0
        %2346 = vmatprep.subr.mxu0 0.0
        %2347 = vmatpush1.msra.mxu0 0.0
        %2348 = vmatprep.subr.mxu0 0.0
        %2349 = vmatpush1.msra.mxu0 0.0
        %2350 = vmatprep.subr.mxu0 0.0
        %2351 = vmatpush1.msra.mxu0 0.0
        %2352 = vmatprep.subr.mxu0 0.0
        %2353 = vmatpush1.msra.mxu0 0.0
        %2354 = vmatprep.subr.mxu0 0.0
        %2355 = vmatpush1.msra.mxu0 0.0
        %2356 = vmatprep.subr.mxu0 0.0
        %2357 = vmatpush1.msra.mxu0 0.0
        %2358 = vmatprep.subr.mxu0 0.0
        %2359 = vmatpush1.msra.mxu0 0.0
        %2360 = vmatprep.subr.mxu0 0.0
        %2361 = vmatpush1.msra.mxu0 0.0
        %2362 = vmatprep.subr.mxu0 0.0
        %2363 = vmatpush1.msra.mxu0 0.0
        %2364 = vmatprep.subr.mxu0 0.0
        %2365 = vmatpush1.msra.mxu0 0.0
        %2366 = vmatprep.subr.mxu0 0.0
        %2367 = vmatpush1.msra.mxu0 0.0
        %2368 = vmatprep.subr.mxu0 0.0
        %2369 = vmatpush1.msra.mxu0 0.0
        %2370 = vmatprep.subr.mxu0 0.0
        %2371 = vmatpush1.msra.mxu0 0.0
        %2372 = vmatprep.subr.mxu0 0.0
        %2373 = vmatpush1.msra.mxu0 %v2340
        %2374 = vmatprep.subr.mxu0 0.0
        %2375 = vmatpush2.msra.mxu0 0.0
        %2376 = vmatprep.subr.mxu0 0.0
        %2377 = vmatpush2.msra.mxu0 0.0
        %2378 = vmatprep.subr.mxu0 0.0
        %2379 = vmatpush2.msra.mxu0 0.0
        %2380 = vmatprep.subr.mxu0 0.0
        %2381 = vmatpush2.msra.mxu0 0.0
        %2382 = vmatprep.subr.mxu0 0.0
        %2383 = vmatpush2.msra.mxu0 0.0
        %2384 = vmatprep.subr.mxu0 0.0
        %2385 = vmatpush2.msra.mxu0 0.0
        %2386 = vmatprep.subr.mxu0 0.0
        %2387 = vmatpush2.msra.mxu0 0.0
        %2388 = vmatprep.subr.mxu0 0.0
        %2389 = vmatpush2.msra.mxu0 0.0
        %2390 = vmatprep.subr.mxu0 0.0
        %2391 = vmatpush2.msra.mxu0 0.0
        %2392 = vmatprep.subr.mxu0 0.0
        %2393 = vmatpush2.msra.mxu0 0.0
        %2394 = vmatprep.subr.mxu0 0.0
        %2395 = vmatpush2.msra.mxu0 0.0
        %2396 = vmatprep.subr.mxu0 0.0
        %2397 = vmatpush2.msra.mxu0 0.0
        %2398 = vmatprep.subr.mxu0 0.0
        %2399 = vmatpush2.msra.mxu0 0.0
        %2400 = vmatprep.subr.mxu0 0.0
        %2401 = vmatpush2.msra.mxu0 0.0
        %2402 = vmatprep.subr.mxu0 0.0
        %2403 = vmatpush2.msra.mxu0 0.0
        %2404 = vmatprep.subr.mxu0 0.0
        %2405 = vmatpush2.msra.mxu0 0.0
        %2406 = vmatprep.mubr.f32.mxu0 0.0
        %2407 = vmatmul.mubr.f32.gmra.mxu0 %v359
        %v2408 = vpop.f32.mrf.mxu0
        %v2409 = vadd.f32 0.0, %v2408
        %v2410 = vpop.f32.mrf.mxu0
        %2411 = vmatprep.mubr.f32.mxu0 0.0
        %2412 = vmatmul.mubr.f32.gmra.mxu0 %v361
        %v2413 = vpop.f32.mrf.mxu0
        %v2414 = vadd.f32 0.0, %v2413
        %v2415 = vpop.f32.mrf.mxu0
        %2416 = vmatprep.mubr.f32.mxu0 0.0
        %2417 = vmatmul.mubr.f32.gmra.mxu0 %v363
        %v2418 = vpop.f32.mrf.mxu0
        %v2419 = vadd.f32 0.0, %v2418
        %v2420 = vpop.f32.mrf.mxu0
        %2421 = vmatprep.mubr.f32.mxu0 0.0
        %2422 = vmatmul.mubr.f32.gmra.mxu0 %v365
        %v2423 = vpop.f32.mrf.mxu0
        %v2424 = vadd.f32 0.0, %v2423
        %v2425 = vpop.f32.mrf.mxu0
        %2426 = vmatprep.mubr.f32.mxu0 0.0
        %2427 = vmatmul.mubr.f32.gmra.mxu0 %v367
        %v2428 = vpop.f32.mrf.mxu0
        %v2429 = vadd.f32 0.0, %v2428
        %v2430 = vpop.f32.mrf.mxu0
        %2431 = vmatprep.mubr.f32.mxu0 0.0
        %2432 = vmatmul.mubr.f32.gmra.mxu0 %v369
        %v2433 = vpop.f32.mrf.mxu0
        %v2434 = vadd.f32 0.0, %v2433
        %v2435 = vpop.f32.mrf.mxu0
        %2436 = vmatprep.mubr.f32.mxu0 0.0
        %2437 = vmatmul.mubr.f32.gmra.mxu0 %v1378
        %v2438 = vpop.f32.mrf.mxu0
        %v2439 = vadd.f32 0.0, %v2438
        %v2440 = vpop.f32.mrf.mxu0
        %2441 = vmatprep.mubr.f32.mxu0 0.0
        %2442 = vmatmul.mubr.f32.gmra.mxu0 %v2337
        %v2443 = vpop.f32.mrf.mxu0
        %v2444 = vadd.f32 0.0, %v2443
        %v2445 = vpop.f32.mrf.mxu0
        %2446 = vdwg.mxu0
        %v2447 = vadd.f32 %v2329, %v2409
        %v2448 = vadd.f32 %v2330, %v2414
        %v2449 = vadd.f32 %v2331, %v2419
        %v2450 = vadd.f32 %v2332, %v2424
        %v2451 = vadd.f32 %v2333, %v2429
        %v2452 = vadd.f32 %v2334, %v2434
        %v2453 = vadd.f32 %v2335, %v2439
        %v2454 = vadd.f32 %v2336, %v2444
        %v2456 = vrot.slane %v169, 1
        %v2457 = vsel %vm211, %v1497, %v2456
        %v2458 = vsel %vm229, %v2457, 0
        %v2461 = vsel %vm246, %v188, 0
        %2463 = vmatprep.subr.mxu0 0.0
        %2464 = vmatpush1.msra.mxu0 0.0
        %2465 = vmatprep.subr.mxu0 0.0
        %2466 = vmatpush1.msra.mxu0 0.0
        %2467 = vmatprep.subr.mxu0 0.0
        %2468 = vmatpush1.msra.mxu0 0.0
        %2469 = vmatprep.subr.mxu0 0.0
        %2470 = vmatpush1.msra.mxu0 0.0
        %2471 = vmatprep.subr.mxu0 0.0
        %2472 = vmatpush1.msra.mxu0 0.0
        %2473 = vmatprep.subr.mxu0 0.0
        %2474 = vmatpush1.msra.mxu0 0.0
        %2475 = vmatprep.subr.mxu0 0.0
        %2476 = vmatpush1.msra.mxu0 0.0
        %2477 = vmatprep.subr.mxu0 0.0
        %2478 = vmatpush1.msra.mxu0 0.0
        %2479 = vmatprep.subr.mxu0 0.0
        %2480 = vmatpush1.msra.mxu0 0.0
        %2481 = vmatprep.subr.mxu0 0.0
        %2482 = vmatpush1.msra.mxu0 0.0
        %2483 = vmatprep.subr.mxu0 0.0
        %2484 = vmatpush1.msra.mxu0 0.0
        %2485 = vmatprep.subr.mxu0 0.0
        %2486 = vmatpush1.msra.mxu0 0.0
        %2487 = vmatprep.subr.mxu0 0.0
        %2488 = vmatpush1.msra.mxu0 0.0
        %2489 = vmatprep.subr.mxu0 0.0
        %2490 = vmatpush1.msra.mxu0 0.0
        %2491 = vmatprep.subr.mxu0 0.0
        %2492 = vmatpush1.msra.mxu0 0.0
        %2493 = vmatprep.subr.mxu0 0.0
        %2494 = vmatpush1.msra.mxu0 %v2461
        %2495 = vmatprep.subr.mxu0 0.0
        %2496 = vmatpush2.msra.mxu0 0.0
        %2497 = vmatprep.subr.mxu0 0.0
        %2498 = vmatpush2.msra.mxu0 0.0
        %2499 = vmatprep.subr.mxu0 0.0
        %2500 = vmatpush2.msra.mxu0 0.0
        %2501 = vmatprep.subr.mxu0 0.0
        %2502 = vmatpush2.msra.mxu0 0.0
        %2503 = vmatprep.subr.mxu0 0.0
        %2504 = vmatpush2.msra.mxu0 0.0
        %2505 = vmatprep.subr.mxu0 0.0
        %2506 = vmatpush2.msra.mxu0 0.0
        %2507 = vmatprep.subr.mxu0 0.0
        %2508 = vmatpush2.msra.mxu0 0.0
        %2509 = vmatprep.subr.mxu0 0.0
        %2510 = vmatpush2.msra.mxu0 0.0
        %2511 = vmatprep.subr.mxu0 0.0
        %2512 = vmatpush2.msra.mxu0 0.0
        %2513 = vmatprep.subr.mxu0 0.0
        %2514 = vmatpush2.msra.mxu0 0.0
        %2515 = vmatprep.subr.mxu0 0.0
        %2516 = vmatpush2.msra.mxu0 0.0
        %2517 = vmatprep.subr.mxu0 0.0
        %2518 = vmatpush2.msra.mxu0 0.0
        %2519 = vmatprep.subr.mxu0 0.0
        %2520 = vmatpush2.msra.mxu0 0.0
        %2521 = vmatprep.subr.mxu0 0.0
        %2522 = vmatpush2.msra.mxu0 0.0
        %2523 = vmatprep.subr.mxu0 0.0
        %2524 = vmatpush2.msra.mxu0 0.0
        %2525 = vmatprep.subr.mxu0 0.0
        %2526 = vmatpush2.msra.mxu0 0.0
        %2527 = vmatprep.mubr.f32.mxu0 0.0
        %2528 = vmatmul.mubr.f32.gmra.mxu0 %v234
        %v2529 = vpop.f32.mrf.mxu0
        %v2530 = vadd.f32 0.0, %v2529
        %v2531 = vpop.f32.mrf.mxu0
        %2532 = vmatprep.mubr.f32.mxu0 0.0
        %2533 = vmatmul.mubr.f32.gmra.mxu0 %v236
        %v2534 = vpop.f32.mrf.mxu0
        %v2535 = vadd.f32 0.0, %v2534
        %v2536 = vpop.f32.mrf.mxu0
        %2537 = vmatprep.mubr.f32.mxu0 0.0
        %2538 = vmatmul.mubr.f32.gmra.mxu0 %v238
        %v2539 = vpop.f32.mrf.mxu0
        %v2540 = vadd.f32 0.0, %v2539
        %v2541 = vpop.f32.mrf.mxu0
        %2542 = vmatprep.mubr.f32.mxu0 0.0
        %2543 = vmatmul.mubr.f32.gmra.mxu0 %v240
        %v2544 = vpop.f32.mrf.mxu0
        %v2545 = vadd.f32 0.0, %v2544
        %v2546 = vpop.f32.mrf.mxu0
        %2547 = vmatprep.mubr.f32.mxu0 0.0
        %2548 = vmatmul.mubr.f32.gmra.mxu0 %v242
        %v2549 = vpop.f32.mrf.mxu0
        %v2550 = vadd.f32 0.0, %v2549
        %v2551 = vpop.f32.mrf.mxu0
        %2552 = vmatprep.mubr.f32.mxu0 0.0
        %2553 = vmatmul.mubr.f32.gmra.mxu0 %v244
        %v2554 = vpop.f32.mrf.mxu0
        %v2555 = vadd.f32 0.0, %v2554
        %v2556 = vpop.f32.mrf.mxu0
        %2557 = vmatprep.mubr.f32.mxu0 0.0
        %2558 = vmatmul.mubr.f32.gmra.mxu0 %v1499
        %v2559 = vpop.f32.mrf.mxu0
        %v2560 = vadd.f32 0.0, %v2559
        %v2561 = vpop.f32.mrf.mxu0
        %2562 = vmatprep.mubr.f32.mxu0 0.0
        %2563 = vmatmul.mubr.f32.gmra.mxu0 %v2458
        %v2564 = vpop.f32.mrf.mxu0
        %v2565 = vadd.f32 0.0, %v2564
        %v2566 = vpop.f32.mrf.mxu0
        %2567 = vdwg.mxu0
        %v2568 = vadd.f32 %v2447, %v2530
        %v2569 = vadd.f32 %v2448, %v2535
        %v2570 = vadd.f32 %v2449, %v2540
        %v2571 = vadd.f32 %v2450, %v2545
        %v2572 = vadd.f32 %v2451, %v2550
        %v2573 = vadd.f32 %v2452, %v2555
        %v2574 = vadd.f32 %v2453, %v2560
        %v2575 = vadd.f32 %v2454, %v2565
        %v2576 = vrot.slane %v169, 2
        %v2577 = vsel %vm479, %v1617, %v2576
        %v2578 = vsel %vm229, %v2577, 0
        %v2581 = vsel %vm246, %v189, 0
        %2583 = vmatprep.subr.mxu0 0.0
        %2584 = vmatpush1.msra.mxu0 0.0
        %2585 = vmatprep.subr.mxu0 0.0
        %2586 = vmatpush1.msra.mxu0 0.0
        %2587 = vmatprep.subr.mxu0 0.0
        %2588 = vmatpush1.msra.mxu0 0.0
        %2589 = vmatprep.subr.mxu0 0.0
        %2590 = vmatpush1.msra.mxu0 0.0
        %2591 = vmatprep.subr.mxu0 0.0
        %2592 = vmatpush1.msra.mxu0 0.0
        %2593 = vmatprep.subr.mxu0 0.0
        %2594 = vmatpush1.msra.mxu0 0.0
        %2595 = vmatprep.subr.mxu0 0.0
        %2596 = vmatpush1.msra.mxu0 0.0
        %2597 = vmatprep.subr.mxu0 0.0
        %2598 = vmatpush1.msra.mxu0 0.0
        %2599 = vmatprep.subr.mxu0 0.0
        %2600 = vmatpush1.msra.mxu0 0.0
        %2601 = vmatprep.subr.mxu0 0.0
        %2602 = vmatpush1.msra.mxu0 0.0
        %2603 = vmatprep.subr.mxu0 0.0
        %2604 = vmatpush1.msra.mxu0 0.0
        %2605 = vmatprep.subr.mxu0 0.0
        %2606 = vmatpush1.msra.mxu0 0.0
        %2607 = vmatprep.subr.mxu0 0.0
        %2608 = vmatpush1.msra.mxu0 0.0
        %2609 = vmatprep.subr.mxu0 0.0
        %2610 = vmatpush1.msra.mxu0 0.0
        %2611 = vmatprep.subr.mxu0 0.0
        %2612 = vmatpush1.msra.mxu0 0.0
        %2613 = vmatprep.subr.mxu0 0.0
        %2614 = vmatpush1.msra.mxu0 %v2581
        %2615 = vmatprep.subr.mxu0 0.0
        %2616 = vmatpush2.msra.mxu0 0.0
        %2617 = vmatprep.subr.mxu0 0.0
        %2618 = vmatpush2.msra.mxu0 0.0
        %2619 = vmatprep.subr.mxu0 0.0
        %2620 = vmatpush2.msra.mxu0 0.0
        %2621 = vmatprep.subr.mxu0 0.0
        %2622 = vmatpush2.msra.mxu0 0.0
        %2623 = vmatprep.subr.mxu0 0.0
        %2624 = vmatpush2.msra.mxu0 0.0
        %2625 = vmatprep.subr.mxu0 0.0
        %2626 = vmatpush2.msra.mxu0 0.0
        %2627 = vmatprep.subr.mxu0 0.0
        %2628 = vmatpush2.msra.mxu0 0.0
        %2629 = vmatprep.subr.mxu0 0.0
        %2630 = vmatpush2.msra.mxu0 0.0
        %2631 = vmatprep.subr.mxu0 0.0
        %2632 = vmatpush2.msra.mxu0 0.0
        %2633 = vmatprep.subr.mxu0 0.0
        %2634 = vmatpush2.msra.mxu0 0.0
        %2635 = vmatprep.subr.mxu0 0.0
        %2636 = vmatpush2.msra.mxu0 0.0
        %2637 = vmatprep.subr.mxu0 0.0
        %2638 = vmatpush2.msra.mxu0 0.0
        %2639 = vmatprep.subr.mxu0 0.0
        %2640 = vmatpush2.msra.mxu0 0.0
        %2641 = vmatprep.subr.mxu0 0.0
        %2642 = vmatpush2.msra.mxu0 0.0
        %2643 = vmatprep.subr.mxu0 0.0
        %2644 = vmatpush2.msra.mxu0 0.0
        %2645 = vmatprep.subr.mxu0 0.0
        %2646 = vmatpush2.msra.mxu0 0.0
        %2647 = vmatprep.mubr.f32.mxu0 0.0
        %2648 = vmatmul.mubr.f32.gmra.mxu0 %v501
        %v2649 = vpop.f32.mrf.mxu0
        %v2650 = vadd.f32 0.0, %v2649
        %v2651 = vpop.f32.mrf.mxu0
        %2652 = vmatprep.mubr.f32.mxu0 0.0
        %2653 = vmatmul.mubr.f32.gmra.mxu0 %v503
        %v2654 = vpop.f32.mrf.mxu0
        %v2655 = vadd.f32 0.0, %v2654
        %v2656 = vpop.f32.mrf.mxu0
        %2657 = vmatprep.mubr.f32.mxu0 0.0
        %2658 = vmatmul.mubr.f32.gmra.mxu0 %v505
        %v2659 = vpop.f32.mrf.mxu0
        %v2660 = vadd.f32 0.0, %v2659
        %v2661 = vpop.f32.mrf.mxu0
        %2662 = vmatprep.mubr.f32.mxu0 0.0
        %2663 = vmatmul.mubr.f32.gmra.mxu0 %v507
        %v2664 = vpop.f32.mrf.mxu0
        %v2665 = vadd.f32 0.0, %v2664
        %v2666 = vpop.f32.mrf.mxu0
        %2667 = vmatprep.mubr.f32.mxu0 0.0
        %2668 = vmatmul.mubr.f32.gmra.mxu0 %v509
        %v2669 = vpop.f32.mrf.mxu0
        %v2670 = vadd.f32 0.0, %v2669
        %v2671 = vpop.f32.mrf.mxu0
        %2672 = vmatprep.mubr.f32.mxu0 0.0
        %2673 = vmatmul.mubr.f32.gmra.mxu0 %v511
        %v2674 = vpop.f32.mrf.mxu0
        %v2675 = vadd.f32 0.0, %v2674
        %v2676 = vpop.f32.mrf.mxu0
        %2677 = vmatprep.mubr.f32.mxu0 0.0
        %2678 = vmatmul.mubr.f32.gmra.mxu0 %v1619
        %v2679 = vpop.f32.mrf.mxu0
        %v2680 = vadd.f32 0.0, %v2679
        %v2681 = vpop.f32.mrf.mxu0
        %2682 = vmatprep.mubr.f32.mxu0 0.0
        %2683 = vmatmul.mubr.f32.gmra.mxu0 %v2578
        %v2684 = vpop.f32.mrf.mxu0
        %v2685 = vadd.f32 0.0, %v2684
        %v2686 = vpop.f32.mrf.mxu0
        %2687 = vdwg.mxu0
        %v2688 = vadd.f32 %v2568, %v2650
        %v2689 = vadd.f32 %v2569, %v2655
        %v2690 = vadd.f32 %v2570, %v2660
        %v2691 = vadd.f32 %v2571, %v2665
        %v2692 = vadd.f32 %v2572, %v2670
        %v2693 = vadd.f32 %v2573, %v2675
        %v2694 = vadd.f32 %v2574, %v2680
        %v2695 = vadd.f32 %v2575, %v2685
        %v2696 = vrot.slane %v169, 3
        %v2697 = vsel %vm629, %v1737, %v2696
        %v2698 = vsel %vm229, %v2697, 0
        %v2701 = vsel %vm246, %v190, 0
        %2703 = vmatprep.subr.mxu0 0.0
        %2704 = vmatpush1.msra.mxu0 0.0
        %2705 = vmatprep.subr.mxu0 0.0
        %2706 = vmatpush1.msra.mxu0 0.0
        %2707 = vmatprep.subr.mxu0 0.0
        %2708 = vmatpush1.msra.mxu0 0.0
        %2709 = vmatprep.subr.mxu0 0.0
        %2710 = vmatpush1.msra.mxu0 0.0
        %2711 = vmatprep.subr.mxu0 0.0
        %2712 = vmatpush1.msra.mxu0 0.0
        %2713 = vmatprep.subr.mxu0 0.0
        %2714 = vmatpush1.msra.mxu0 0.0
        %2715 = vmatprep.subr.mxu0 0.0
        %2716 = vmatpush1.msra.mxu0 0.0
        %2717 = vmatprep.subr.mxu0 0.0
        %2718 = vmatpush1.msra.mxu0 0.0
        %2719 = vmatprep.subr.mxu0 0.0
        %2720 = vmatpush1.msra.mxu0 0.0
        %2721 = vmatprep.subr.mxu0 0.0
        %2722 = vmatpush1.msra.mxu0 0.0
        %2723 = vmatprep.subr.mxu0 0.0
        %2724 = vmatpush1.msra.mxu0 0.0
        %2725 = vmatprep.subr.mxu0 0.0
        %2726 = vmatpush1.msra.mxu0 0.0
        %2727 = vmatprep.subr.mxu0 0.0
        %2728 = vmatpush1.msra.mxu0 0.0
        %2729 = vmatprep.subr.mxu0 0.0
        %2730 = vmatpush1.msra.mxu0 0.0
        %2731 = vmatprep.subr.mxu0 0.0
        %2732 = vmatpush1.msra.mxu0 0.0
        %2733 = vmatprep.subr.mxu0 0.0
        %2734 = vmatpush1.msra.mxu0 %v2701
        %2735 = vmatprep.subr.mxu0 0.0
        %2736 = vmatpush2.msra.mxu0 0.0
        %2737 = vmatprep.subr.mxu0 0.0
        %2738 = vmatpush2.msra.mxu0 0.0
        %2739 = vmatprep.subr.mxu0 0.0
        %2740 = vmatpush2.msra.mxu0 0.0
        %2741 = vmatprep.subr.mxu0 0.0
        %2742 = vmatpush2.msra.mxu0 0.0
        %2743 = vmatprep.subr.mxu0 0.0
        %2744 = vmatpush2.msra.mxu0 0.0
        %2745 = vmatprep.subr.mxu0 0.0
        %2746 = vmatpush2.msra.mxu0 0.0
        %2747 = vmatprep.subr.mxu0 0.0
        %2748 = vmatpush2.msra.mxu0 0.0
        %2749 = vmatprep.subr.mxu0 0.0
        %2750 = vmatpush2.msra.mxu0 0.0
        %2751 = vmatprep.subr.mxu0 0.0
        %2752 = vmatpush2.msra.mxu0 0.0
        %2753 = vmatprep.subr.mxu0 0.0
        %2754 = vmatpush2.msra.mxu0 0.0
        %2755 = vmatprep.subr.mxu0 0.0
        %2756 = vmatpush2.msra.mxu0 0.0
        %2757 = vmatprep.subr.mxu0 0.0
        %2758 = vmatpush2.msra.mxu0 0.0
        %2759 = vmatprep.subr.mxu0 0.0
        %2760 = vmatpush2.msra.mxu0 0.0
        %2761 = vmatprep.subr.mxu0 0.0
        %2762 = vmatpush2.msra.mxu0 0.0
        %2763 = vmatprep.subr.mxu0 0.0
        %2764 = vmatpush2.msra.mxu0 0.0
        %2765 = vmatprep.subr.mxu0 0.0
        %2766 = vmatpush2.msra.mxu0 0.0
        %2767 = vmatprep.mubr.f32.mxu0 0.0
        %2768 = vmatmul.mubr.f32.gmra.mxu0 %v651
        %v2769 = vpop.f32.mrf.mxu0
        %v2770 = vadd.f32 0.0, %v2769
        %v2771 = vpop.f32.mrf.mxu0
        %2772 = vmatprep.mubr.f32.mxu0 0.0
        %2773 = vmatmul.mubr.f32.gmra.mxu0 %v653
        %v2774 = vpop.f32.mrf.mxu0
        %v2775 = vadd.f32 0.0, %v2774
        %v2776 = vpop.f32.mrf.mxu0
        %2777 = vmatprep.mubr.f32.mxu0 0.0
        %2778 = vmatmul.mubr.f32.gmra.mxu0 %v655
        %v2779 = vpop.f32.mrf.mxu0
        %v2780 = vadd.f32 0.0, %v2779
        %v2781 = vpop.f32.mrf.mxu0
        %2782 = vmatprep.mubr.f32.mxu0 0.0
        %2783 = vmatmul.mubr.f32.gmra.mxu0 %v657
        %v2784 = vpop.f32.mrf.mxu0
        %v2785 = vadd.f32 0.0, %v2784
        %v2786 = vpop.f32.mrf.mxu0
        %2787 = vmatprep.mubr.f32.mxu0 0.0
        %2788 = vmatmul.mubr.f32.gmra.mxu0 %v659
        %v2789 = vpop.f32.mrf.mxu0
        %v2790 = vadd.f32 0.0, %v2789
        %v2791 = vpop.f32.mrf.mxu0
        %2792 = vmatprep.mubr.f32.mxu0 0.0
        %2793 = vmatmul.mubr.f32.gmra.mxu0 %v661
        %v2794 = vpop.f32.mrf.mxu0
        %v2795 = vadd.f32 0.0, %v2794
        %v2796 = vpop.f32.mrf.mxu0
        %2797 = vmatprep.mubr.f32.mxu0 0.0
        %2798 = vmatmul.mubr.f32.gmra.mxu0 %v1739
        %v2799 = vpop.f32.mrf.mxu0
        %v2800 = vadd.f32 0.0, %v2799
        %v2801 = vpop.f32.mrf.mxu0
        %2802 = vmatprep.mubr.f32.mxu0 0.0
        %2803 = vmatmul.mubr.f32.gmra.mxu0 %v2698
        %v2804 = vpop.f32.mrf.mxu0
        %v2805 = vadd.f32 0.0, %v2804
        %v2806 = vpop.f32.mrf.mxu0
        %2807 = vdwg.mxu0
        %v2808 = vadd.f32 %v2688, %v2770
        %v2809 = vadd.f32 %v2689, %v2775
        %v2810 = vadd.f32 %v2690, %v2780
        %v2811 = vadd.f32 %v2691, %v2785
        %v2812 = vadd.f32 %v2692, %v2790
        %v2813 = vadd.f32 %v2693, %v2795
        %v2814 = vadd.f32 %v2694, %v2800
        %v2815 = vadd.f32 %v2695, %v2805
        %v2816 = vrot.slane %v169, 4
        %v2817 = vsel %vm779, %v1857, %v2816
        %v2818 = vsel %vm229, %v2817, 0
        %v2821 = vsel %vm246, %v191, 0
        %2823 = vmatprep.subr.mxu0 0.0
        %2824 = vmatpush1.msra.mxu0 0.0
        %2825 = vmatprep.subr.mxu0 0.0
        %2826 = vmatpush1.msra.mxu0 0.0
        %2827 = vmatprep.subr.mxu0 0.0
        %2828 = vmatpush1.msra.mxu0 0.0
        %2829 = vmatprep.subr.mxu0 0.0
        %2830 = vmatpush1.msra.mxu0 0.0
        %2831 = vmatprep.subr.mxu0 0.0
        %2832 = vmatpush1.msra.mxu0 0.0
        %2833 = vmatprep.subr.mxu0 0.0
        %2834 = vmatpush1.msra.mxu0 0.0
        %2835 = vmatprep.subr.mxu0 0.0
        %2836 = vmatpush1.msra.mxu0 0.0
        %2837 = vmatprep.subr.mxu0 0.0
        %2838 = vmatpush1.msra.mxu0 0.0
        %2839 = vmatprep.subr.mxu0 0.0
        %2840 = vmatpush1.msra.mxu0 0.0
        %2841 = vmatprep.subr.mxu0 0.0
        %2842 = vmatpush1.msra.mxu0 0.0
        %2843 = vmatprep.subr.mxu0 0.0
        %2844 = vmatpush1.msra.mxu0 0.0
        %2845 = vmatprep.subr.mxu0 0.0
        %2846 = vmatpush1.msra.mxu0 0.0
        %2847 = vmatprep.subr.mxu0 0.0
        %2848 = vmatpush1.msra.mxu0 0.0
        %2849 = vmatprep.subr.mxu0 0.0
        %2850 = vmatpush1.msra.mxu0 0.0
        %2851 = vmatprep.subr.mxu0 0.0
        %2852 = vmatpush1.msra.mxu0 0.0
        %2853 = vmatprep.subr.mxu0 0.0
        %2854 = vmatpush1.msra.mxu0 %v2821
        %2855 = vmatprep.subr.mxu0 0.0
        %2856 = vmatpush2.msra.mxu0 0.0
        %2857 = vmatprep.subr.mxu0 0.0
        %2858 = vmatpush2.msra.mxu0 0.0
        %2859 = vmatprep.subr.mxu0 0.0
        %2860 = vmatpush2.msra.mxu0 0.0
        %2861 = vmatprep.subr.mxu0 0.0
        %2862 = vmatpush2.msra.mxu0 0.0
        %2863 = vmatprep.subr.mxu0 0.0
        %2864 = vmatpush2.msra.mxu0 0.0
        %2865 = vmatprep.subr.mxu0 0.0
        %2866 = vmatpush2.msra.mxu0 0.0
        %2867 = vmatprep.subr.mxu0 0.0
        %2868 = vmatpush2.msra.mxu0 0.0
        %2869 = vmatprep.subr.mxu0 0.0
        %2870 = vmatpush2.msra.mxu0 0.0
        %2871 = vmatprep.subr.mxu0 0.0
        %2872 = vmatpush2.msra.mxu0 0.0
        %2873 = vmatprep.subr.mxu0 0.0
        %2874 = vmatpush2.msra.mxu0 0.0
        %2875 = vmatprep.subr.mxu0 0.0
        %2876 = vmatpush2.msra.mxu0 0.0
        %2877 = vmatprep.subr.mxu0 0.0
        %2878 = vmatpush2.msra.mxu0 0.0
        %2879 = vmatprep.subr.mxu0 0.0
        %2880 = vmatpush2.msra.mxu0 0.0
        %2881 = vmatprep.subr.mxu0 0.0
        %2882 = vmatpush2.msra.mxu0 0.0
        %2883 = vmatprep.subr.mxu0 0.0
        %2884 = vmatpush2.msra.mxu0 0.0
        %2885 = vmatprep.subr.mxu0 0.0
        %2886 = vmatpush2.msra.mxu0 0.0
        %2887 = vmatprep.mubr.f32.mxu0 0.0
        %2888 = vmatmul.mubr.f32.gmra.mxu0 %v801
        %v2889 = vpop.f32.mrf.mxu0
        %v2890 = vadd.f32 0.0, %v2889
        %v2891 = vpop.f32.mrf.mxu0
        %2892 = vmatprep.mubr.f32.mxu0 0.0
        %2893 = vmatmul.mubr.f32.gmra.mxu0 %v803
        %v2894 = vpop.f32.mrf.mxu0
        %v2895 = vadd.f32 0.0, %v2894
        %v2896 = vpop.f32.mrf.mxu0
        %2897 = vmatprep.mubr.f32.mxu0 0.0
        %2898 = vmatmul.mubr.f32.gmra.mxu0 %v805
        %v2899 = vpop.f32.mrf.mxu0
        %v2900 = vadd.f32 0.0, %v2899
        %v2901 = vpop.f32.mrf.mxu0
        %2902 = vmatprep.mubr.f32.mxu0 0.0
        %2903 = vmatmul.mubr.f32.gmra.mxu0 %v807
        %v2904 = vpop.f32.mrf.mxu0
        %v2905 = vadd.f32 0.0, %v2904
        %v2906 = vpop.f32.mrf.mxu0
        %2907 = vmatprep.mubr.f32.mxu0 0.0
        %2908 = vmatmul.mubr.f32.gmra.mxu0 %v809
        %v2909 = vpop.f32.mrf.mxu0
        %v2910 = vadd.f32 0.0, %v2909
        %v2911 = vpop.f32.mrf.mxu0
        %2912 = vmatprep.mubr.f32.mxu0 0.0
        %2913 = vmatmul.mubr.f32.gmra.mxu0 %v811
        %v2914 = vpop.f32.mrf.mxu0
        %v2915 = vadd.f32 0.0, %v2914
        %v2916 = vpop.f32.mrf.mxu0
        %2917 = vmatprep.mubr.f32.mxu0 0.0
        %2918 = vmatmul.mubr.f32.gmra.mxu0 %v1859
        %v2919 = vpop.f32.mrf.mxu0
        %v2920 = vadd.f32 0.0, %v2919
        %v2921 = vpop.f32.mrf.mxu0
        %2922 = vmatprep.mubr.f32.mxu0 0.0
        %2923 = vmatmul.mubr.f32.gmra.mxu0 %v2818
        %v2924 = vpop.f32.mrf.mxu0
        %v2925 = vadd.f32 0.0, %v2924
        %v2926 = vpop.f32.mrf.mxu0
        %2927 = vdwg.mxu0
        %v2928 = vadd.f32 %v2808, %v2890
        %v2929 = vadd.f32 %v2809, %v2895
        %v2930 = vadd.f32 %v2810, %v2900
        %v2931 = vadd.f32 %v2811, %v2905
        %v2932 = vadd.f32 %v2812, %v2910
        %v2933 = vadd.f32 %v2813, %v2915
        %v2934 = vadd.f32 %v2814, %v2920
        %v2935 = vadd.f32 %v2815, %v2925
        %v2936 = vrot.slane %v169, 5
        %v2937 = vsel %vm929, %v1977, %v2936
        %v2938 = vsel %vm229, %v2937, 0
        %v2941 = vsel %vm246, %v192, 0
        %2943 = vmatprep.subr.mxu0 0.0
        %2944 = vmatpush1.msra.mxu0 0.0
        %2945 = vmatprep.subr.mxu0 0.0
        %2946 = vmatpush1.msra.mxu0 0.0
        %2947 = vmatprep.subr.mxu0 0.0
        %2948 = vmatpush1.msra.mxu0 0.0
        %2949 = vmatprep.subr.mxu0 0.0
        %2950 = vmatpush1.msra.mxu0 0.0
        %2951 = vmatprep.subr.mxu0 0.0
        %2952 = vmatpush1.msra.mxu0 0.0
        %2953 = vmatprep.subr.mxu0 0.0
        %2954 = vmatpush1.msra.mxu0 0.0
        %2955 = vmatprep.subr.mxu0 0.0
        %2956 = vmatpush1.msra.mxu0 0.0
        %2957 = vmatprep.subr.mxu0 0.0
        %2958 = vmatpush1.msra.mxu0 0.0
        %2959 = vmatprep.subr.mxu0 0.0
        %2960 = vmatpush1.msra.mxu0 0.0
        %2961 = vmatprep.subr.mxu0 0.0
        %2962 = vmatpush1.msra.mxu0 0.0
        %2963 = vmatprep.subr.mxu0 0.0
        %2964 = vmatpush1.msra.mxu0 0.0
        %2965 = vmatprep.subr.mxu0 0.0
        %2966 = vmatpush1.msra.mxu0 0.0
        %2967 = vmatprep.subr.mxu0 0.0
        %2968 = vmatpush1.msra.mxu0 0.0
        %2969 = vmatprep.subr.mxu0 0.0
        %2970 = vmatpush1.msra.mxu0 0.0
        %2971 = vmatprep.subr.mxu0 0.0
        %2972 = vmatpush1.msra.mxu0 0.0
        %2973 = vmatprep.subr.mxu0 0.0
        %2974 = vmatpush1.msra.mxu0 %v2941
        %2975 = vmatprep.subr.mxu0 0.0
        %2976 = vmatpush2.msra.mxu0 0.0
        %2977 = vmatprep.subr.mxu0 0.0
        %2978 = vmatpush2.msra.mxu0 0.0
        %2979 = vmatprep.subr.mxu0 0.0
        %2980 = vmatpush2.msra.mxu0 0.0
        %2981 = vmatprep.subr.mxu0 0.0
        %2982 = vmatpush2.msra.mxu0 0.0
        %2983 = vmatprep.subr.mxu0 0.0
        %2984 = vmatpush2.msra.mxu0 0.0
        %2985 = vmatprep.subr.mxu0 0.0
        %2986 = vmatpush2.msra.mxu0 0.0
        %2987 = vmatprep.subr.mxu0 0.0
        %2988 = vmatpush2.msra.mxu0 0.0
        %2989 = vmatprep.subr.mxu0 0.0
        %2990 = vmatpush2.msra.mxu0 0.0
        %2991 = vmatprep.subr.mxu0 0.0
        %2992 = vmatpush2.msra.mxu0 0.0
        %2993 = vmatprep.subr.mxu0 0.0
        %2994 = vmatpush2.msra.mxu0 0.0
        %2995 = vmatprep.subr.mxu0 0.0
        %2996 = vmatpush2.msra.mxu0 0.0
        %2997 = vmatprep.subr.mxu0 0.0
        %2998 = vmatpush2.msra.mxu0 0.0
        %2999 = vmatprep.subr.mxu0 0.0
        %3000 = vmatpush2.msra.mxu0 0.0
        %3001 = vmatprep.subr.mxu0 0.0
        %3002 = vmatpush2.msra.mxu0 0.0
        %3003 = vmatprep.subr.mxu0 0.0
        %3004 = vmatpush2.msra.mxu0 0.0
        %3005 = vmatprep.subr.mxu0 0.0
        %3006 = vmatpush2.msra.mxu0 0.0
        %3007 = vmatprep.mubr.f32.mxu0 0.0
        %3008 = vmatmul.mubr.f32.gmra.mxu0 %v951
        %v3009 = vpop.f32.mrf.mxu0
        %v3010 = vadd.f32 0.0, %v3009
        %v3011 = vpop.f32.mrf.mxu0
        %3012 = vmatprep.mubr.f32.mxu0 0.0
        %3013 = vmatmul.mubr.f32.gmra.mxu0 %v953
        %v3014 = vpop.f32.mrf.mxu0
        %v3015 = vadd.f32 0.0, %v3014
        %v3016 = vpop.f32.mrf.mxu0
        %3017 = vmatprep.mubr.f32.mxu0 0.0
        %3018 = vmatmul.mubr.f32.gmra.mxu0 %v955
        %v3019 = vpop.f32.mrf.mxu0
        %v3020 = vadd.f32 0.0, %v3019
        %v3021 = vpop.f32.mrf.mxu0
        %3022 = vmatprep.mubr.f32.mxu0 0.0
        %3023 = vmatmul.mubr.f32.gmra.mxu0 %v957
        %v3024 = vpop.f32.mrf.mxu0
        %v3025 = vadd.f32 0.0, %v3024
        %v3026 = vpop.f32.mrf.mxu0
        %3027 = vmatprep.mubr.f32.mxu0 0.0
        %3028 = vmatmul.mubr.f32.gmra.mxu0 %v959
        %v3029 = vpop.f32.mrf.mxu0
        %v3030 = vadd.f32 0.0, %v3029
        %v3031 = vpop.f32.mrf.mxu0
        %3032 = vmatprep.mubr.f32.mxu0 0.0
        %3033 = vmatmul.mubr.f32.gmra.mxu0 %v961
        %v3034 = vpop.f32.mrf.mxu0
        %v3035 = vadd.f32 0.0, %v3034
        %v3036 = vpop.f32.mrf.mxu0
        %3037 = vmatprep.mubr.f32.mxu0 0.0
        %3038 = vmatmul.mubr.f32.gmra.mxu0 %v1979
        %v3039 = vpop.f32.mrf.mxu0
        %v3040 = vadd.f32 0.0, %v3039
        %v3041 = vpop.f32.mrf.mxu0
        %3042 = vmatprep.mubr.f32.mxu0 0.0
        %3043 = vmatmul.mubr.f32.gmra.mxu0 %v2938
        %v3044 = vpop.f32.mrf.mxu0
        %v3045 = vadd.f32 0.0, %v3044
        %v3046 = vpop.f32.mrf.mxu0
        %3047 = vdwg.mxu0
        %v3048 = vadd.f32 %v2928, %v3010
        %v3049 = vadd.f32 %v2929, %v3015
        %v3050 = vadd.f32 %v2930, %v3020
        %v3051 = vadd.f32 %v2931, %v3025
        %v3052 = vadd.f32 %v2932, %v3030
        %v3053 = vadd.f32 %v2933, %v3035
        %v3054 = vadd.f32 %v2934, %v3040
        %v3055 = vadd.f32 %v2935, %v3045
        %v3056 = vrot.slane %v169, 6
        %v3057 = vsel %vm246, %v2097, %v3056
        %v3058 = vsel %vm229, %v3057, 0
        %v3061 = vsel %vm246, %v193, 0
        %3063 = vmatprep.subr.mxu0 0.0
        %3064 = vmatpush1.msra.mxu0 0.0
        %3065 = vmatprep.subr.mxu0 0.0
        %3066 = vmatpush1.msra.mxu0 0.0
        %3067 = vmatprep.subr.mxu0 0.0
        %3068 = vmatpush1.msra.mxu0 0.0
        %3069 = vmatprep.subr.mxu0 0.0
        %3070 = vmatpush1.msra.mxu0 0.0
        %3071 = vmatprep.subr.mxu0 0.0
        %3072 = vmatpush1.msra.mxu0 0.0
        %3073 = vmatprep.subr.mxu0 0.0
        %3074 = vmatpush1.msra.mxu0 0.0
        %3075 = vmatprep.subr.mxu0 0.0
        %3076 = vmatpush1.msra.mxu0 0.0
        %3077 = vmatprep.subr.mxu0 0.0
        %3078 = vmatpush1.msra.mxu0 0.0
        %3079 = vmatprep.subr.mxu0 0.0
        %3080 = vmatpush1.msra.mxu0 0.0
        %3081 = vmatprep.subr.mxu0 0.0
        %3082 = vmatpush1.msra.mxu0 0.0
        %3083 = vmatprep.subr.mxu0 0.0
        %3084 = vmatpush1.msra.mxu0 0.0
        %3085 = vmatprep.subr.mxu0 0.0
        %3086 = vmatpush1.msra.mxu0 0.0
        %3087 = vmatprep.subr.mxu0 0.0
        %3088 = vmatpush1.msra.mxu0 0.0
        %3089 = vmatprep.subr.mxu0 0.0
        %3090 = vmatpush1.msra.mxu0 0.0
        %3091 = vmatprep.subr.mxu0 0.0
        %3092 = vmatpush1.msra.mxu0 0.0
        %3093 = vmatprep.subr.mxu0 0.0
        %3094 = vmatpush1.msra.mxu0 %v3061
        %3095 = vmatprep.subr.mxu0 0.0
        %3096 = vmatpush2.msra.mxu0 0.0
        %3097 = vmatprep.subr.mxu0 0.0
        %3098 = vmatpush2.msra.mxu0 0.0
        %3099 = vmatprep.subr.mxu0 0.0
        %3100 = vmatpush2.msra.mxu0 0.0
        %3101 = vmatprep.subr.mxu0 0.0
        %3102 = vmatpush2.msra.mxu0 0.0
        %3103 = vmatprep.subr.mxu0 0.0
        %3104 = vmatpush2.msra.mxu0 0.0
        %3105 = vmatprep.subr.mxu0 0.0
        %3106 = vmatpush2.msra.mxu0 0.0
        %3107 = vmatprep.subr.mxu0 0.0
        %3108 = vmatpush2.msra.mxu0 0.0
        %3109 = vmatprep.subr.mxu0 0.0
        %3110 = vmatpush2.msra.mxu0 0.0
        %3111 = vmatprep.subr.mxu0 0.0
        %3112 = vmatpush2.msra.mxu0 0.0
        %3113 = vmatprep.subr.mxu0 0.0
        %3114 = vmatpush2.msra.mxu0 0.0
        %3115 = vmatprep.subr.mxu0 0.0
        %3116 = vmatpush2.msra.mxu0 0.0
        %3117 = vmatprep.subr.mxu0 0.0
        %3118 = vmatpush2.msra.mxu0 0.0
        %3119 = vmatprep.subr.mxu0 0.0
        %3120 = vmatpush2.msra.mxu0 0.0
        %3121 = vmatprep.subr.mxu0 0.0
        %3122 = vmatpush2.msra.mxu0 0.0
        %3123 = vmatprep.subr.mxu0 0.0
        %3124 = vmatpush2.msra.mxu0 0.0
        %3125 = vmatprep.subr.mxu0 0.0
        %3126 = vmatpush2.msra.mxu0 0.0
        %3127 = vmatprep.mubr.f32.mxu0 0.0
        %3128 = vmatmul.mubr.f32.gmra.mxu0 %v1100
        %v3129 = vpop.f32.mrf.mxu0
        %v3130 = vadd.f32 0.0, %v3129
        %v3131 = vpop.f32.mrf.mxu0
        %3132 = vmatprep.mubr.f32.mxu0 0.0
        %3133 = vmatmul.mubr.f32.gmra.mxu0 %v1102
        %v3134 = vpop.f32.mrf.mxu0
        %v3135 = vadd.f32 0.0, %v3134
        %v3136 = vpop.f32.mrf.mxu0
        %3137 = vmatprep.mubr.f32.mxu0 0.0
        %3138 = vmatmul.mubr.f32.gmra.mxu0 %v1104
        %v3139 = vpop.f32.mrf.mxu0
        %v3140 = vadd.f32 0.0, %v3139
        %v3141 = vpop.f32.mrf.mxu0
        %3142 = vmatprep.mubr.f32.mxu0 0.0
        %3143 = vmatmul.mubr.f32.gmra.mxu0 %v1106
        %v3144 = vpop.f32.mrf.mxu0
        %v3145 = vadd.f32 0.0, %v3144
        %v3146 = vpop.f32.mrf.mxu0
        %3147 = vmatprep.mubr.f32.mxu0 0.0
        %3148 = vmatmul.mubr.f32.gmra.mxu0 %v1108
        %v3149 = vpop.f32.mrf.mxu0
        %v3150 = vadd.f32 0.0, %v3149
        %v3151 = vpop.f32.mrf.mxu0
        %3152 = vmatprep.mubr.f32.mxu0 0.0
        %3153 = vmatmul.mubr.f32.gmra.mxu0 %v1110
        %v3154 = vpop.f32.mrf.mxu0
        %v3155 = vadd.f32 0.0, %v3154
        %v3156 = vpop.f32.mrf.mxu0
        %3157 = vmatprep.mubr.f32.mxu0 0.0
        %3158 = vmatmul.mubr.f32.gmra.mxu0 %v2099
        %v3159 = vpop.f32.mrf.mxu0
        %v3160 = vadd.f32 0.0, %v3159
        %v3161 = vpop.f32.mrf.mxu0
        %3162 = vmatprep.mubr.f32.mxu0 0.0
        %3163 = vmatmul.mubr.f32.gmra.mxu0 %v3058
        %v3164 = vpop.f32.mrf.mxu0
        %v3165 = vadd.f32 0.0, %v3164
        %v3166 = vpop.f32.mrf.mxu0
        %3167 = vdwg.mxu0
        %v3168 = vadd.f32 %v3048, %v3130
        %v3169 = vadd.f32 %v3049, %v3135
        %v3170 = vadd.f32 %v3050, %v3140
        %v3171 = vadd.f32 %v3051, %v3145
        %v3172 = vadd.f32 %v3052, %v3150
        %v3173 = vadd.f32 %v3053, %v3155
        %v3174 = vadd.f32 %v3054, %v3160
        %v3175 = vadd.f32 %v3055, %v3165
        %v3176 = vrot.slane %v169, 7
        %v3177 = vsel %vm1228, %v2217, %v3176
        %v3178 = vsel %vm229, %v3177, 0
        %v3181 = vsel %vm246, %v194, 0
        %3183 = vmatprep.subr.mxu0 0.0
        %3184 = vmatpush1.msra.mxu0 0.0
        %3185 = vmatprep.subr.mxu0 0.0
        %3186 = vmatpush1.msra.mxu0 0.0
        %3187 = vmatprep.subr.mxu0 0.0
        %3188 = vmatpush1.msra.mxu0 0.0
        %3189 = vmatprep.subr.mxu0 0.0
        %3190 = vmatpush1.msra.mxu0 0.0
        %3191 = vmatprep.subr.mxu0 0.0
        %3192 = vmatpush1.msra.mxu0 0.0
        %3193 = vmatprep.subr.mxu0 0.0
        %3194 = vmatpush1.msra.mxu0 0.0
        %3195 = vmatprep.subr.mxu0 0.0
        %3196 = vmatpush1.msra.mxu0 0.0
        %3197 = vmatprep.subr.mxu0 0.0
        %3198 = vmatpush1.msra.mxu0 0.0
        %3199 = vmatprep.subr.mxu0 0.0
        %3200 = vmatpush1.msra.mxu0 0.0
        %3201 = vmatprep.subr.mxu0 0.0
        %3202 = vmatpush1.msra.mxu0 0.0
        %3203 = vmatprep.subr.mxu0 0.0
        %3204 = vmatpush1.msra.mxu0 0.0
        %3205 = vmatprep.subr.mxu0 0.0
        %3206 = vmatpush1.msra.mxu0 0.0
        %3207 = vmatprep.subr.mxu0 0.0
        %3208 = vmatpush1.msra.mxu0 0.0
        %3209 = vmatprep.subr.mxu0 0.0
        %3210 = vmatpush1.msra.mxu0 0.0
        %3211 = vmatprep.subr.mxu0 0.0
        %3212 = vmatpush1.msra.mxu0 0.0
        %3213 = vmatprep.subr.mxu0 0.0
        %3214 = vmatpush1.msra.mxu0 %v3181
        %3215 = vmatprep.subr.mxu0 0.0
        %3216 = vmatpush2.msra.mxu0 0.0
        %3217 = vmatprep.subr.mxu0 0.0
        %3218 = vmatpush2.msra.mxu0 0.0
        %3219 = vmatprep.subr.mxu0 0.0
        %3220 = vmatpush2.msra.mxu0 0.0
        %3221 = vmatprep.subr.mxu0 0.0
        %3222 = vmatpush2.msra.mxu0 0.0
        %3223 = vmatprep.subr.mxu0 0.0
        %3224 = vmatpush2.msra.mxu0 0.0
        %3225 = vmatprep.subr.mxu0 0.0
        %3226 = vmatpush2.msra.mxu0 0.0
        %3227 = vmatprep.subr.mxu0 0.0
        %3228 = vmatpush2.msra.mxu0 0.0
        %3229 = vmatprep.subr.mxu0 0.0
        %3230 = vmatpush2.msra.mxu0 0.0
        %3231 = vmatprep.subr.mxu0 0.0
        %3232 = vmatpush2.msra.mxu0 0.0
        %3233 = vmatprep.subr.mxu0 0.0
        %3234 = vmatpush2.msra.mxu0 0.0
        %3235 = vmatprep.subr.mxu0 0.0
        %3236 = vmatpush2.msra.mxu0 0.0
        %3237 = vmatprep.subr.mxu0 0.0
        %3238 = vmatpush2.msra.mxu0 0.0
        %3239 = vmatprep.subr.mxu0 0.0
        %3240 = vmatpush2.msra.mxu0 0.0
        %3241 = vmatprep.subr.mxu0 0.0
        %3242 = vmatpush2.msra.mxu0 0.0
        %3243 = vmatprep.subr.mxu0 0.0
        %3244 = vmatpush2.msra.mxu0 0.0
        %3245 = vmatprep.subr.mxu0 0.0
        %3246 = vmatpush2.msra.mxu0 0.0
        %3247 = vmatprep.mubr.f32.mxu0 0.0
        %3248 = vmatmul.mubr.f32.gmra.mxu0 %v1250
        %v3249 = vpop.f32.mrf.mxu0
        %v3250 = vadd.f32 0.0, %v3249
        %v3251 = vpop.f32.mrf.mxu0
        %3252 = vmatprep.mubr.f32.mxu0 0.0
        %3253 = vmatmul.mubr.f32.gmra.mxu0 %v1252
        %v3254 = vpop.f32.mrf.mxu0
        %v3255 = vadd.f32 0.0, %v3254
        %v3256 = vpop.f32.mrf.mxu0
        %3257 = vmatprep.mubr.f32.mxu0 0.0
        %3258 = vmatmul.mubr.f32.gmra.mxu0 %v1254
        %v3259 = vpop.f32.mrf.mxu0
        %v3260 = vadd.f32 0.0, %v3259
        %v3261 = vpop.f32.mrf.mxu0
        %3262 = vmatprep.mubr.f32.mxu0 0.0
        %3263 = vmatmul.mubr.f32.gmra.mxu0 %v1256
        %v3264 = vpop.f32.mrf.mxu0
        %v3265 = vadd.f32 0.0, %v3264
        %v3266 = vpop.f32.mrf.mxu0
        %3267 = vmatprep.mubr.f32.mxu0 0.0
        %3268 = vmatmul.mubr.f32.gmra.mxu0 %v1258
        %v3269 = vpop.f32.mrf.mxu0
        %v3270 = vadd.f32 0.0, %v3269
        %v3271 = vpop.f32.mrf.mxu0
        %3272 = vmatprep.mubr.f32.mxu0 0.0
        %3273 = vmatmul.mubr.f32.gmra.mxu0 %v1260
        %v3274 = vpop.f32.mrf.mxu0
        %v3275 = vadd.f32 0.0, %v3274
        %v3276 = vpop.f32.mrf.mxu0
        %3277 = vmatprep.mubr.f32.mxu0 0.0
        %3278 = vmatmul.mubr.f32.gmra.mxu0 %v2219
        %v3279 = vpop.f32.mrf.mxu0
        %v3280 = vadd.f32 0.0, %v3279
        %v3281 = vpop.f32.mrf.mxu0
        %3282 = vmatprep.mubr.f32.mxu0 0.0
        %3283 = vmatmul.mubr.f32.gmra.mxu0 %v3178
        %v3284 = vpop.f32.mrf.mxu0
        %v3285 = vadd.f32 0.0, %v3284
        %v3286 = vpop.f32.mrf.mxu0
        %3287 = vdwg.mxu0
        %v3288 = vadd.f32 %v3168, %v3250
        %v3289 = vadd.f32 %v3169, %v3255
        %v3290 = vadd.f32 %v3170, %v3260
        %v3291 = vadd.f32 %v3171, %v3265
        %v3292 = vadd.f32 %v3172, %v3270
        %v3293 = vadd.f32 %v3173, %v3275
        %v3294 = vadd.f32 %v3174, %v3280
        %v3295 = vadd.f32 %v3175, %v3285
        %v3296 = vsel %vm229, %v169, 0
        %v3299 = vsel %vm246, %v195, 0
        %3301 = vmatprep.subr.mxu0 0.0
        %3302 = vmatpush1.msra.mxu0 0.0
        %3303 = vmatprep.subr.mxu0 0.0
        %3304 = vmatpush1.msra.mxu0 0.0
        %3305 = vmatprep.subr.mxu0 0.0
        %3306 = vmatpush1.msra.mxu0 0.0
        %3307 = vmatprep.subr.mxu0 0.0
        %3308 = vmatpush1.msra.mxu0 0.0
        %3309 = vmatprep.subr.mxu0 0.0
        %3310 = vmatpush1.msra.mxu0 0.0
        %3311 = vmatprep.subr.mxu0 0.0
        %3312 = vmatpush1.msra.mxu0 0.0
        %3313 = vmatprep.subr.mxu0 0.0
        %3314 = vmatpush1.msra.mxu0 0.0
        %3315 = vmatprep.subr.mxu0 0.0
        %3316 = vmatpush1.msra.mxu0 0.0
        %3317 = vmatprep.subr.mxu0 0.0
        %3318 = vmatpush1.msra.mxu0 0.0
        %3319 = vmatprep.subr.mxu0 0.0
        %3320 = vmatpush1.msra.mxu0 0.0
        %3321 = vmatprep.subr.mxu0 0.0
        %3322 = vmatpush1.msra.mxu0 0.0
        %3323 = vmatprep.subr.mxu0 0.0
        %3324 = vmatpush1.msra.mxu0 0.0
        %3325 = vmatprep.subr.mxu0 0.0
        %3326 = vmatpush1.msra.mxu0 0.0
        %3327 = vmatprep.subr.mxu0 0.0
        %3328 = vmatpush1.msra.mxu0 0.0
        %3329 = vmatprep.subr.mxu0 0.0
        %3330 = vmatpush1.msra.mxu0 0.0
        %3331 = vmatprep.subr.mxu0 0.0
        %3332 = vmatpush1.msra.mxu0 %v3299
        %3333 = vmatprep.subr.mxu0 0.0
        %3334 = vmatpush2.msra.mxu0 0.0
        %3335 = vmatprep.subr.mxu0 0.0
        %3336 = vmatpush2.msra.mxu0 0.0
        %3337 = vmatprep.subr.mxu0 0.0
        %3338 = vmatpush2.msra.mxu0 0.0
        %3339 = vmatprep.subr.mxu0 0.0
        %3340 = vmatpush2.msra.mxu0 0.0
        %3341 = vmatprep.subr.mxu0 0.0
        %3342 = vmatpush2.msra.mxu0 0.0
        %3343 = vmatprep.subr.mxu0 0.0
        %3344 = vmatpush2.msra.mxu0 0.0
        %3345 = vmatprep.subr.mxu0 0.0
        %3346 = vmatpush2.msra.mxu0 0.0
        %3347 = vmatprep.subr.mxu0 0.0
        %3348 = vmatpush2.msra.mxu0 0.0
        %3349 = vmatprep.subr.mxu0 0.0
        %3350 = vmatpush2.msra.mxu0 0.0
        %3351 = vmatprep.subr.mxu0 0.0
        %3352 = vmatpush2.msra.mxu0 0.0
        %3353 = vmatprep.subr.mxu0 0.0
        %3354 = vmatpush2.msra.mxu0 0.0
        %3355 = vmatprep.subr.mxu0 0.0
        %3356 = vmatpush2.msra.mxu0 0.0
        %3357 = vmatprep.subr.mxu0 0.0
        %3358 = vmatpush2.msra.mxu0 0.0
        %3359 = vmatprep.subr.mxu0 0.0
        %3360 = vmatpush2.msra.mxu0 0.0
        %3361 = vmatprep.subr.mxu0 0.0
        %3362 = vmatpush2.msra.mxu0 0.0
        %3363 = vmatprep.subr.mxu0 0.0
        %3364 = vmatpush2.msra.mxu0 0.0
        %3365 = vmatprep.mubr.f32.mxu0 0.0
        %3366 = vmatmul.mubr.f32.gmra.mxu0 %v361
        %v3367 = vpop.f32.mrf.mxu0
        %v3368 = vadd.f32 0.0, %v3367
        %v3369 = vpop.f32.mrf.mxu0
        %3370 = vmatprep.mubr.f32.mxu0 0.0
        %3371 = vmatmul.mubr.f32.gmra.mxu0 %v363
        %v3372 = vpop.f32.mrf.mxu0
        %v3373 = vadd.f32 0.0, %v3372
        %v3374 = vpop.f32.mrf.mxu0
        %3375 = vmatprep.mubr.f32.mxu0 0.0
        %3376 = vmatmul.mubr.f32.gmra.mxu0 %v365
        %v3377 = vpop.f32.mrf.mxu0
        %v3378 = vadd.f32 0.0, %v3377
        %v3379 = vpop.f32.mrf.mxu0
        %3380 = vmatprep.mubr.f32.mxu0 0.0
        %3381 = vmatmul.mubr.f32.gmra.mxu0 %v367
        %v3382 = vpop.f32.mrf.mxu0
        %v3383 = vadd.f32 0.0, %v3382
        %v3384 = vpop.f32.mrf.mxu0
        %3385 = vmatprep.mubr.f32.mxu0 0.0
        %3386 = vmatmul.mubr.f32.gmra.mxu0 %v369
        %v3387 = vpop.f32.mrf.mxu0
        %v3388 = vadd.f32 0.0, %v3387
        %v3389 = vpop.f32.mrf.mxu0
        %3390 = vmatprep.mubr.f32.mxu0 0.0
        %3391 = vmatmul.mubr.f32.gmra.mxu0 %v1378
        %v3392 = vpop.f32.mrf.mxu0
        %v3393 = vadd.f32 0.0, %v3392
        %v3394 = vpop.f32.mrf.mxu0
        %3395 = vmatprep.mubr.f32.mxu0 0.0
        %3396 = vmatmul.mubr.f32.gmra.mxu0 %v2337
        %v3397 = vpop.f32.mrf.mxu0
        %v3398 = vadd.f32 0.0, %v3397
        %v3399 = vpop.f32.mrf.mxu0
        %3400 = vmatprep.mubr.f32.mxu0 0.0
        %3401 = vmatmul.mubr.f32.gmra.mxu0 %v3296
        %v3402 = vpop.f32.mrf.mxu0
        %v3403 = vadd.f32 0.0, %v3402
        %v3404 = vpop.f32.mrf.mxu0
        %3405 = vdwg.mxu0
        %v3406 = vadd.f32 %v3288, %v3368
        %v3407 = vadd.f32 %v3289, %v3373
        %v3408 = vadd.f32 %v3290, %v3378
        %v3409 = vadd.f32 %v3291, %v3383
        %v3410 = vadd.f32 %v3292, %v3388
        %v3411 = vadd.f32 %v3293, %v3393
        %v3412 = vadd.f32 %v3294, %v3398
        %v3413 = vadd.f32 %v3295, %v3403
        %v3415 = vrot.slane %v170, 1
        %v3416 = vsel %vm211, %v2456, %v3415
        %v3417 = vsel %vm229, %v3416, 0
        %v3420 = vsel %vm246, %v196, 0
        %3422 = vmatprep.subr.mxu0 0.0
        %3423 = vmatpush1.msra.mxu0 0.0
        %3424 = vmatprep.subr.mxu0 0.0
        %3425 = vmatpush1.msra.mxu0 0.0
        %3426 = vmatprep.subr.mxu0 0.0
        %3427 = vmatpush1.msra.mxu0 0.0
        %3428 = vmatprep.subr.mxu0 0.0
        %3429 = vmatpush1.msra.mxu0 0.0
        %3430 = vmatprep.subr.mxu0 0.0
        %3431 = vmatpush1.msra.mxu0 0.0
        %3432 = vmatprep.subr.mxu0 0.0
        %3433 = vmatpush1.msra.mxu0 0.0
        %3434 = vmatprep.subr.mxu0 0.0
        %3435 = vmatpush1.msra.mxu0 0.0
        %3436 = vmatprep.subr.mxu0 0.0
        %3437 = vmatpush1.msra.mxu0 0.0
        %3438 = vmatprep.subr.mxu0 0.0
        %3439 = vmatpush1.msra.mxu0 0.0
        %3440 = vmatprep.subr.mxu0 0.0
        %3441 = vmatpush1.msra.mxu0 0.0
        %3442 = vmatprep.subr.mxu0 0.0
        %3443 = vmatpush1.msra.mxu0 0.0
        %3444 = vmatprep.subr.mxu0 0.0
        %3445 = vmatpush1.msra.mxu0 0.0
        %3446 = vmatprep.subr.mxu0 0.0
        %3447 = vmatpush1.msra.mxu0 0.0
        %3448 = vmatprep.subr.mxu0 0.0
        %3449 = vmatpush1.msra.mxu0 0.0
        %3450 = vmatprep.subr.mxu0 0.0
        %3451 = vmatpush1.msra.mxu0 0.0
        %3452 = vmatprep.subr.mxu0 0.0
        %3453 = vmatpush1.msra.mxu0 %v3420
        %3454 = vmatprep.subr.mxu0 0.0
        %3455 = vmatpush2.msra.mxu0 0.0
        %3456 = vmatprep.subr.mxu0 0.0
        %3457 = vmatpush2.msra.mxu0 0.0
        %3458 = vmatprep.subr.mxu0 0.0
        %3459 = vmatpush2.msra.mxu0 0.0
        %3460 = vmatprep.subr.mxu0 0.0
        %3461 = vmatpush2.msra.mxu0 0.0
        %3462 = vmatprep.subr.mxu0 0.0
        %3463 = vmatpush2.msra.mxu0 0.0
        %3464 = vmatprep.subr.mxu0 0.0
        %3465 = vmatpush2.msra.mxu0 0.0
        %3466 = vmatprep.subr.mxu0 0.0
        %3467 = vmatpush2.msra.mxu0 0.0
        %3468 = vmatprep.subr.mxu0 0.0
        %3469 = vmatpush2.msra.mxu0 0.0
        %3470 = vmatprep.subr.mxu0 0.0
        %3471 = vmatpush2.msra.mxu0 0.0
        %3472 = vmatprep.subr.mxu0 0.0
        %3473 = vmatpush2.msra.mxu0 0.0
        %3474 = vmatprep.subr.mxu0 0.0
        %3475 = vmatpush2.msra.mxu0 0.0
        %3476 = vmatprep.subr.mxu0 0.0
        %3477 = vmatpush2.msra.mxu0 0.0
        %3478 = vmatprep.subr.mxu0 0.0
        %3479 = vmatpush2.msra.mxu0 0.0
        %3480 = vmatprep.subr.mxu0 0.0
        %3481 = vmatpush2.msra.mxu0 0.0
        %3482 = vmatprep.subr.mxu0 0.0
        %3483 = vmatpush2.msra.mxu0 0.0
        %3484 = vmatprep.subr.mxu0 0.0
        %3485 = vmatpush2.msra.mxu0 0.0
        %3486 = vmatprep.mubr.f32.mxu0 0.0
        %3487 = vmatmul.mubr.f32.gmra.mxu0 %v236
        %v3488 = vpop.f32.mrf.mxu0
        %v3489 = vadd.f32 0.0, %v3488
        %v3490 = vpop.f32.mrf.mxu0
        %3491 = vmatprep.mubr.f32.mxu0 0.0
        %3492 = vmatmul.mubr.f32.gmra.mxu0 %v238
        %v3493 = vpop.f32.mrf.mxu0
        %v3494 = vadd.f32 0.0, %v3493
        %v3495 = vpop.f32.mrf.mxu0
        %3496 = vmatprep.mubr.f32.mxu0 0.0
        %3497 = vmatmul.mubr.f32.gmra.mxu0 %v240
        %v3498 = vpop.f32.mrf.mxu0
        %v3499 = vadd.f32 0.0, %v3498
        %v3500 = vpop.f32.mrf.mxu0
        %3501 = vmatprep.mubr.f32.mxu0 0.0
        %3502 = vmatmul.mubr.f32.gmra.mxu0 %v242
        %v3503 = vpop.f32.mrf.mxu0
        %v3504 = vadd.f32 0.0, %v3503
        %v3505 = vpop.f32.mrf.mxu0
        %3506 = vmatprep.mubr.f32.mxu0 0.0
        %3507 = vmatmul.mubr.f32.gmra.mxu0 %v244
        %v3508 = vpop.f32.mrf.mxu0
        %v3509 = vadd.f32 0.0, %v3508
        %v3510 = vpop.f32.mrf.mxu0
        %3511 = vmatprep.mubr.f32.mxu0 0.0
        %3512 = vmatmul.mubr.f32.gmra.mxu0 %v1499
        %v3513 = vpop.f32.mrf.mxu0
        %v3514 = vadd.f32 0.0, %v3513
        %v3515 = vpop.f32.mrf.mxu0
        %3516 = vmatprep.mubr.f32.mxu0 0.0
        %3517 = vmatmul.mubr.f32.gmra.mxu0 %v2458
        %v3518 = vpop.f32.mrf.mxu0
        %v3519 = vadd.f32 0.0, %v3518
        %v3520 = vpop.f32.mrf.mxu0
        %3521 = vmatprep.mubr.f32.mxu0 0.0
        %3522 = vmatmul.mubr.f32.gmra.mxu0 %v3417
        %v3523 = vpop.f32.mrf.mxu0
        %v3524 = vadd.f32 0.0, %v3523
        %v3525 = vpop.f32.mrf.mxu0
        %3526 = vdwg.mxu0
        %v3527 = vadd.f32 %v3406, %v3489
        %v3528 = vadd.f32 %v3407, %v3494
        %v3529 = vadd.f32 %v3408, %v3499
        %v3530 = vadd.f32 %v3409, %v3504
        %v3531 = vadd.f32 %v3410, %v3509
        %v3532 = vadd.f32 %v3411, %v3514
        %v3533 = vadd.f32 %v3412, %v3519
        %v3534 = vadd.f32 %v3413, %v3524
        %v3535 = vrot.slane %v170, 2
        %v3536 = vsel %vm479, %v2576, %v3535
        %v3537 = vsel %vm229, %v3536, 0
        %v3540 = vsel %vm246, %v197, 0
        %3542 = vmatprep.subr.mxu0 0.0
        %3543 = vmatpush1.msra.mxu0 0.0
        %3544 = vmatprep.subr.mxu0 0.0
        %3545 = vmatpush1.msra.mxu0 0.0
        %3546 = vmatprep.subr.mxu0 0.0
        %3547 = vmatpush1.msra.mxu0 0.0
        %3548 = vmatprep.subr.mxu0 0.0
        %3549 = vmatpush1.msra.mxu0 0.0
        %3550 = vmatprep.subr.mxu0 0.0
        %3551 = vmatpush1.msra.mxu0 0.0
        %3552 = vmatprep.subr.mxu0 0.0
        %3553 = vmatpush1.msra.mxu0 0.0
        %3554 = vmatprep.subr.mxu0 0.0
        %3555 = vmatpush1.msra.mxu0 0.0
        %3556 = vmatprep.subr.mxu0 0.0
        %3557 = vmatpush1.msra.mxu0 0.0
        %3558 = vmatprep.subr.mxu0 0.0
        %3559 = vmatpush1.msra.mxu0 0.0
        %3560 = vmatprep.subr.mxu0 0.0
        %3561 = vmatpush1.msra.mxu0 0.0
        %3562 = vmatprep.subr.mxu0 0.0
        %3563 = vmatpush1.msra.mxu0 0.0
        %3564 = vmatprep.subr.mxu0 0.0
        %3565 = vmatpush1.msra.mxu0 0.0
        %3566 = vmatprep.subr.mxu0 0.0
        %3567 = vmatpush1.msra.mxu0 0.0
        %3568 = vmatprep.subr.mxu0 0.0
        %3569 = vmatpush1.msra.mxu0 0.0
        %3570 = vmatprep.subr.mxu0 0.0
        %3571 = vmatpush1.msra.mxu0 0.0
        %3572 = vmatprep.subr.mxu0 0.0
        %3573 = vmatpush1.msra.mxu0 %v3540
        %3574 = vmatprep.subr.mxu0 0.0
        %3575 = vmatpush2.msra.mxu0 0.0
        %3576 = vmatprep.subr.mxu0 0.0
        %3577 = vmatpush2.msra.mxu0 0.0
        %3578 = vmatprep.subr.mxu0 0.0
        %3579 = vmatpush2.msra.mxu0 0.0
        %3580 = vmatprep.subr.mxu0 0.0
        %3581 = vmatpush2.msra.mxu0 0.0
        %3582 = vmatprep.subr.mxu0 0.0
        %3583 = vmatpush2.msra.mxu0 0.0
        %3584 = vmatprep.subr.mxu0 0.0
        %3585 = vmatpush2.msra.mxu0 0.0
        %3586 = vmatprep.subr.mxu0 0.0
        %3587 = vmatpush2.msra.mxu0 0.0
        %3588 = vmatprep.subr.mxu0 0.0
        %3589 = vmatpush2.msra.mxu0 0.0
        %3590 = vmatprep.subr.mxu0 0.0
        %3591 = vmatpush2.msra.mxu0 0.0
        %3592 = vmatprep.subr.mxu0 0.0
        %3593 = vmatpush2.msra.mxu0 0.0
        %3594 = vmatprep.subr.mxu0 0.0
        %3595 = vmatpush2.msra.mxu0 0.0
        %3596 = vmatprep.subr.mxu0 0.0
        %3597 = vmatpush2.msra.mxu0 0.0
        %3598 = vmatprep.subr.mxu0 0.0
        %3599 = vmatpush2.msra.mxu0 0.0
        %3600 = vmatprep.subr.mxu0 0.0
        %3601 = vmatpush2.msra.mxu0 0.0
        %3602 = vmatprep.subr.mxu0 0.0
        %3603 = vmatpush2.msra.mxu0 0.0
        %3604 = vmatprep.subr.mxu0 0.0
        %3605 = vmatpush2.msra.mxu0 0.0
        %3606 = vmatprep.mubr.f32.mxu0 0.0
        %3607 = vmatmul.mubr.f32.gmra.mxu0 %v503
        %v3608 = vpop.f32.mrf.mxu0
        %v3609 = vadd.f32 0.0, %v3608
        %v3610 = vpop.f32.mrf.mxu0
        %3611 = vmatprep.mubr.f32.mxu0 0.0
        %3612 = vmatmul.mubr.f32.gmra.mxu0 %v505
        %v3613 = vpop.f32.mrf.mxu0
        %v3614 = vadd.f32 0.0, %v3613
        %v3615 = vpop.f32.mrf.mxu0
        %3616 = vmatprep.mubr.f32.mxu0 0.0
        %3617 = vmatmul.mubr.f32.gmra.mxu0 %v507
        %v3618 = vpop.f32.mrf.mxu0
        %v3619 = vadd.f32 0.0, %v3618
        %v3620 = vpop.f32.mrf.mxu0
        %3621 = vmatprep.mubr.f32.mxu0 0.0
        %3622 = vmatmul.mubr.f32.gmra.mxu0 %v509
        %v3623 = vpop.f32.mrf.mxu0
        %v3624 = vadd.f32 0.0, %v3623
        %v3625 = vpop.f32.mrf.mxu0
        %3626 = vmatprep.mubr.f32.mxu0 0.0
        %3627 = vmatmul.mubr.f32.gmra.mxu0 %v511
        %v3628 = vpop.f32.mrf.mxu0
        %v3629 = vadd.f32 0.0, %v3628
        %v3630 = vpop.f32.mrf.mxu0
        %3631 = vmatprep.mubr.f32.mxu0 0.0
        %3632 = vmatmul.mubr.f32.gmra.mxu0 %v1619
        %v3633 = vpop.f32.mrf.mxu0
        %v3634 = vadd.f32 0.0, %v3633
        %v3635 = vpop.f32.mrf.mxu0
        %3636 = vmatprep.mubr.f32.mxu0 0.0
        %3637 = vmatmul.mubr.f32.gmra.mxu0 %v2578
        %v3638 = vpop.f32.mrf.mxu0
        %v3639 = vadd.f32 0.0, %v3638
        %v3640 = vpop.f32.mrf.mxu0
        %3641 = vmatprep.mubr.f32.mxu0 0.0
        %3642 = vmatmul.mubr.f32.gmra.mxu0 %v3537
        %v3643 = vpop.f32.mrf.mxu0
        %v3644 = vadd.f32 0.0, %v3643
        %v3645 = vpop.f32.mrf.mxu0
        %3646 = vdwg.mxu0
        %v3647 = vadd.f32 %v3527, %v3609
        %v3648 = vadd.f32 %v3528, %v3614
        %v3649 = vadd.f32 %v3529, %v3619
        %v3650 = vadd.f32 %v3530, %v3624
        %v3651 = vadd.f32 %v3531, %v3629
        %v3652 = vadd.f32 %v3532, %v3634
        %v3653 = vadd.f32 %v3533, %v3639
        %v3654 = vadd.f32 %v3534, %v3644
        %v3655 = vrot.slane %v170, 3
        %v3656 = vsel %vm629, %v2696, %v3655
        %v3657 = vsel %vm229, %v3656, 0
        %v3660 = vsel %vm246, %v198, 0
        %3662 = vmatprep.subr.mxu0 0.0
        %3663 = vmatpush1.msra.mxu0 0.0
        %3664 = vmatprep.subr.mxu0 0.0
        %3665 = vmatpush1.msra.mxu0 0.0
        %3666 = vmatprep.subr.mxu0 0.0
        %3667 = vmatpush1.msra.mxu0 0.0
        %3668 = vmatprep.subr.mxu0 0.0
        %3669 = vmatpush1.msra.mxu0 0.0
        %3670 = vmatprep.subr.mxu0 0.0
        %3671 = vmatpush1.msra.mxu0 0.0
        %3672 = vmatprep.subr.mxu0 0.0
        %3673 = vmatpush1.msra.mxu0 0.0
        %3674 = vmatprep.subr.mxu0 0.0
        %3675 = vmatpush1.msra.mxu0 0.0
        %3676 = vmatprep.subr.mxu0 0.0
        %3677 = vmatpush1.msra.mxu0 0.0
        %3678 = vmatprep.subr.mxu0 0.0
        %3679 = vmatpush1.msra.mxu0 0.0
        %3680 = vmatprep.subr.mxu0 0.0
        %3681 = vmatpush1.msra.mxu0 0.0
        %3682 = vmatprep.subr.mxu0 0.0
        %3683 = vmatpush1.msra.mxu0 0.0
        %3684 = vmatprep.subr.mxu0 0.0
        %3685 = vmatpush1.msra.mxu0 0.0
        %3686 = vmatprep.subr.mxu0 0.0
        %3687 = vmatpush1.msra.mxu0 0.0
        %3688 = vmatprep.subr.mxu0 0.0
        %3689 = vmatpush1.msra.mxu0 0.0
        %3690 = vmatprep.subr.mxu0 0.0
        %3691 = vmatpush1.msra.mxu0 0.0
        %3692 = vmatprep.subr.mxu0 0.0
        %3693 = vmatpush1.msra.mxu0 %v3660
        %3694 = vmatprep.subr.mxu0 0.0
        %3695 = vmatpush2.msra.mxu0 0.0
        %3696 = vmatprep.subr.mxu0 0.0
        %3697 = vmatpush2.msra.mxu0 0.0
        %3698 = vmatprep.subr.mxu0 0.0
        %3699 = vmatpush2.msra.mxu0 0.0
        %3700 = vmatprep.subr.mxu0 0.0
        %3701 = vmatpush2.msra.mxu0 0.0
        %3702 = vmatprep.subr.mxu0 0.0
        %3703 = vmatpush2.msra.mxu0 0.0
        %3704 = vmatprep.subr.mxu0 0.0
        %3705 = vmatpush2.msra.mxu0 0.0
        %3706 = vmatprep.subr.mxu0 0.0
        %3707 = vmatpush2.msra.mxu0 0.0
        %3708 = vmatprep.subr.mxu0 0.0
        %3709 = vmatpush2.msra.mxu0 0.0
        %3710 = vmatprep.subr.mxu0 0.0
        %3711 = vmatpush2.msra.mxu0 0.0
        %3712 = vmatprep.subr.mxu0 0.0
        %3713 = vmatpush2.msra.mxu0 0.0
        %3714 = vmatprep.subr.mxu0 0.0
        %3715 = vmatpush2.msra.mxu0 0.0
        %3716 = vmatprep.subr.mxu0 0.0
        %3717 = vmatpush2.msra.mxu0 0.0
        %3718 = vmatprep.subr.mxu0 0.0
        %3719 = vmatpush2.msra.mxu0 0.0
        %3720 = vmatprep.subr.mxu0 0.0
        %3721 = vmatpush2.msra.mxu0 0.0
        %3722 = vmatprep.subr.mxu0 0.0
        %3723 = vmatpush2.msra.mxu0 0.0
        %3724 = vmatprep.subr.mxu0 0.0
        %3725 = vmatpush2.msra.mxu0 0.0
        %3726 = vmatprep.mubr.f32.mxu0 0.0
        %3727 = vmatmul.mubr.f32.gmra.mxu0 %v653
        %v3728 = vpop.f32.mrf.mxu0
        %v3729 = vadd.f32 0.0, %v3728
        %v3730 = vpop.f32.mrf.mxu0
        %3731 = vmatprep.mubr.f32.mxu0 0.0
        %3732 = vmatmul.mubr.f32.gmra.mxu0 %v655
        %v3733 = vpop.f32.mrf.mxu0
        %v3734 = vadd.f32 0.0, %v3733
        %v3735 = vpop.f32.mrf.mxu0
        %3736 = vmatprep.mubr.f32.mxu0 0.0
        %3737 = vmatmul.mubr.f32.gmra.mxu0 %v657
        %v3738 = vpop.f32.mrf.mxu0
        %v3739 = vadd.f32 0.0, %v3738
        %v3740 = vpop.f32.mrf.mxu0
        %3741 = vmatprep.mubr.f32.mxu0 0.0
        %3742 = vmatmul.mubr.f32.gmra.mxu0 %v659
        %v3743 = vpop.f32.mrf.mxu0
        %v3744 = vadd.f32 0.0, %v3743
        %v3745 = vpop.f32.mrf.mxu0
        %3746 = vmatprep.mubr.f32.mxu0 0.0
        %3747 = vmatmul.mubr.f32.gmra.mxu0 %v661
        %v3748 = vpop.f32.mrf.mxu0
        %v3749 = vadd.f32 0.0, %v3748
        %v3750 = vpop.f32.mrf.mxu0
        %3751 = vmatprep.mubr.f32.mxu0 0.0
        %3752 = vmatmul.mubr.f32.gmra.mxu0 %v1739
        %v3753 = vpop.f32.mrf.mxu0
        %v3754 = vadd.f32 0.0, %v3753
        %v3755 = vpop.f32.mrf.mxu0
        %3756 = vmatprep.mubr.f32.mxu0 0.0
        %3757 = vmatmul.mubr.f32.gmra.mxu0 %v2698
        %v3758 = vpop.f32.mrf.mxu0
        %v3759 = vadd.f32 0.0, %v3758
        %v3760 = vpop.f32.mrf.mxu0
        %3761 = vmatprep.mubr.f32.mxu0 0.0
        %3762 = vmatmul.mubr.f32.gmra.mxu0 %v3657
        %v3763 = vpop.f32.mrf.mxu0
        %v3764 = vadd.f32 0.0, %v3763
        %v3765 = vpop.f32.mrf.mxu0
        %3766 = vdwg.mxu0
        %v3767 = vadd.f32 %v3647, %v3729
        %v3768 = vadd.f32 %v3648, %v3734
        %v3769 = vadd.f32 %v3649, %v3739
        %v3770 = vadd.f32 %v3650, %v3744
        %v3771 = vadd.f32 %v3651, %v3749
        %v3772 = vadd.f32 %v3652, %v3754
        %v3773 = vadd.f32 %v3653, %v3759
        %v3774 = vadd.f32 %v3654, %v3764
        %v3775 = vrot.slane %v170, 4
        %v3776 = vsel %vm779, %v2816, %v3775
        %v3777 = vsel %vm229, %v3776, 0
        %v3780 = vsel %vm246, %v199, 0
        %3782 = vmatprep.subr.mxu0 0.0
        %3783 = vmatpush1.msra.mxu0 0.0
        %3784 = vmatprep.subr.mxu0 0.0
        %3785 = vmatpush1.msra.mxu0 0.0
        %3786 = vmatprep.subr.mxu0 0.0
        %3787 = vmatpush1.msra.mxu0 0.0
        %3788 = vmatprep.subr.mxu0 0.0
        %3789 = vmatpush1.msra.mxu0 0.0
        %3790 = vmatprep.subr.mxu0 0.0
        %3791 = vmatpush1.msra.mxu0 0.0
        %3792 = vmatprep.subr.mxu0 0.0
        %3793 = vmatpush1.msra.mxu0 0.0
        %3794 = vmatprep.subr.mxu0 0.0
        %3795 = vmatpush1.msra.mxu0 0.0
        %3796 = vmatprep.subr.mxu0 0.0
        %3797 = vmatpush1.msra.mxu0 0.0
        %3798 = vmatprep.subr.mxu0 0.0
        %3799 = vmatpush1.msra.mxu0 0.0
        %3800 = vmatprep.subr.mxu0 0.0
        %3801 = vmatpush1.msra.mxu0 0.0
        %3802 = vmatprep.subr.mxu0 0.0
        %3803 = vmatpush1.msra.mxu0 0.0
        %3804 = vmatprep.subr.mxu0 0.0
        %3805 = vmatpush1.msra.mxu0 0.0
        %3806 = vmatprep.subr.mxu0 0.0
        %3807 = vmatpush1.msra.mxu0 0.0
        %3808 = vmatprep.subr.mxu0 0.0
        %3809 = vmatpush1.msra.mxu0 0.0
        %3810 = vmatprep.subr.mxu0 0.0
        %3811 = vmatpush1.msra.mxu0 0.0
        %3812 = vmatprep.subr.mxu0 0.0
        %3813 = vmatpush1.msra.mxu0 %v3780
        %3814 = vmatprep.subr.mxu0 0.0
        %3815 = vmatpush2.msra.mxu0 0.0
        %3816 = vmatprep.subr.mxu0 0.0
        %3817 = vmatpush2.msra.mxu0 0.0
        %3818 = vmatprep.subr.mxu0 0.0
        %3819 = vmatpush2.msra.mxu0 0.0
        %3820 = vmatprep.subr.mxu0 0.0
        %3821 = vmatpush2.msra.mxu0 0.0
        %3822 = vmatprep.subr.mxu0 0.0
        %3823 = vmatpush2.msra.mxu0 0.0
        %3824 = vmatprep.subr.mxu0 0.0
        %3825 = vmatpush2.msra.mxu0 0.0
        %3826 = vmatprep.subr.mxu0 0.0
        %3827 = vmatpush2.msra.mxu0 0.0
        %3828 = vmatprep.subr.mxu0 0.0
        %3829 = vmatpush2.msra.mxu0 0.0
        %3830 = vmatprep.subr.mxu0 0.0
        %3831 = vmatpush2.msra.mxu0 0.0
        %3832 = vmatprep.subr.mxu0 0.0
        %3833 = vmatpush2.msra.mxu0 0.0
        %3834 = vmatprep.subr.mxu0 0.0
        %3835 = vmatpush2.msra.mxu0 0.0
        %3836 = vmatprep.subr.mxu0 0.0
        %3837 = vmatpush2.msra.mxu0 0.0
        %3838 = vmatprep.subr.mxu0 0.0
        %3839 = vmatpush2.msra.mxu0 0.0
        %3840 = vmatprep.subr.mxu0 0.0
        %3841 = vmatpush2.msra.mxu0 0.0
        %3842 = vmatprep.subr.mxu0 0.0
        %3843 = vmatpush2.msra.mxu0 0.0
        %3844 = vmatprep.subr.mxu0 0.0
        %3845 = vmatpush2.msra.mxu0 0.0
        %3846 = vmatprep.mubr.f32.mxu0 0.0
        %3847 = vmatmul.mubr.f32.gmra.mxu0 %v803
        %v3848 = vpop.f32.mrf.mxu0
        %v3849 = vadd.f32 0.0, %v3848
        %v3850 = vpop.f32.mrf.mxu0
        %3851 = vmatprep.mubr.f32.mxu0 0.0
        %3852 = vmatmul.mubr.f32.gmra.mxu0 %v805
        %v3853 = vpop.f32.mrf.mxu0
        %v3854 = vadd.f32 0.0, %v3853
        %v3855 = vpop.f32.mrf.mxu0
        %3856 = vmatprep.mubr.f32.mxu0 0.0
        %3857 = vmatmul.mubr.f32.gmra.mxu0 %v807
        %v3858 = vpop.f32.mrf.mxu0
        %v3859 = vadd.f32 0.0, %v3858
        %v3860 = vpop.f32.mrf.mxu0
        %3861 = vmatprep.mubr.f32.mxu0 0.0
        %3862 = vmatmul.mubr.f32.gmra.mxu0 %v809
        %v3863 = vpop.f32.mrf.mxu0
        %v3864 = vadd.f32 0.0, %v3863
        %v3865 = vpop.f32.mrf.mxu0
        %3866 = vmatprep.mubr.f32.mxu0 0.0
        %3867 = vmatmul.mubr.f32.gmra.mxu0 %v811
        %v3868 = vpop.f32.mrf.mxu0
        %v3869 = vadd.f32 0.0, %v3868
        %v3870 = vpop.f32.mrf.mxu0
        %3871 = vmatprep.mubr.f32.mxu0 0.0
        %3872 = vmatmul.mubr.f32.gmra.mxu0 %v1859
        %v3873 = vpop.f32.mrf.mxu0
        %v3874 = vadd.f32 0.0, %v3873
        %v3875 = vpop.f32.mrf.mxu0
        %3876 = vmatprep.mubr.f32.mxu0 0.0
        %3877 = vmatmul.mubr.f32.gmra.mxu0 %v2818
        %v3878 = vpop.f32.mrf.mxu0
        %v3879 = vadd.f32 0.0, %v3878
        %v3880 = vpop.f32.mrf.mxu0
        %3881 = vmatprep.mubr.f32.mxu0 0.0
        %3882 = vmatmul.mubr.f32.gmra.mxu0 %v3777
        %v3883 = vpop.f32.mrf.mxu0
        %v3884 = vadd.f32 0.0, %v3883
        %v3885 = vpop.f32.mrf.mxu0
        %3886 = vdwg.mxu0
        %v3887 = vadd.f32 %v3767, %v3849
        %v3888 = vadd.f32 %v3768, %v3854
        %v3889 = vadd.f32 %v3769, %v3859
        %v3890 = vadd.f32 %v3770, %v3864
        %v3891 = vadd.f32 %v3771, %v3869
        %v3892 = vadd.f32 %v3772, %v3874
        %v3893 = vadd.f32 %v3773, %v3879
        %v3894 = vadd.f32 %v3774, %v3884
        %v3895 = vrot.slane %v170, 5
        %v3896 = vsel %vm929, %v2936, %v3895
        %v3897 = vsel %vm229, %v3896, 0
        %v3900 = vsel %vm246, %v200, 0
        %3902 = vmatprep.subr.mxu0 0.0
        %3903 = vmatpush1.msra.mxu0 0.0
        %3904 = vmatprep.subr.mxu0 0.0
        %3905 = vmatpush1.msra.mxu0 0.0
        %3906 = vmatprep.subr.mxu0 0.0
        %3907 = vmatpush1.msra.mxu0 0.0
        %3908 = vmatprep.subr.mxu0 0.0
        %3909 = vmatpush1.msra.mxu0 0.0
        %3910 = vmatprep.subr.mxu0 0.0
        %3911 = vmatpush1.msra.mxu0 0.0
        %3912 = vmatprep.subr.mxu0 0.0
        %3913 = vmatpush1.msra.mxu0 0.0
        %3914 = vmatprep.subr.mxu0 0.0
        %3915 = vmatpush1.msra.mxu0 0.0
        %3916 = vmatprep.subr.mxu0 0.0
        %3917 = vmatpush1.msra.mxu0 0.0
        %3918 = vmatprep.subr.mxu0 0.0
        %3919 = vmatpush1.msra.mxu0 0.0
        %3920 = vmatprep.subr.mxu0 0.0
        %3921 = vmatpush1.msra.mxu0 0.0
        %3922 = vmatprep.subr.mxu0 0.0
        %3923 = vmatpush1.msra.mxu0 0.0
        %3924 = vmatprep.subr.mxu0 0.0
        %3925 = vmatpush1.msra.mxu0 0.0
        %3926 = vmatprep.subr.mxu0 0.0
        %3927 = vmatpush1.msra.mxu0 0.0
        %3928 = vmatprep.subr.mxu0 0.0
        %3929 = vmatpush1.msra.mxu0 0.0
        %3930 = vmatprep.subr.mxu0 0.0
        %3931 = vmatpush1.msra.mxu0 0.0
        %3932 = vmatprep.subr.mxu0 0.0
        %3933 = vmatpush1.msra.mxu0 %v3900
        %3934 = vmatprep.subr.mxu0 0.0
        %3935 = vmatpush2.msra.mxu0 0.0
        %3936 = vmatprep.subr.mxu0 0.0
        %3937 = vmatpush2.msra.mxu0 0.0
        %3938 = vmatprep.subr.mxu0 0.0
        %3939 = vmatpush2.msra.mxu0 0.0
        %3940 = vmatprep.subr.mxu0 0.0
        %3941 = vmatpush2.msra.mxu0 0.0
        %3942 = vmatprep.subr.mxu0 0.0
        %3943 = vmatpush2.msra.mxu0 0.0
        %3944 = vmatprep.subr.mxu0 0.0
        %3945 = vmatpush2.msra.mxu0 0.0
        %3946 = vmatprep.subr.mxu0 0.0
        %3947 = vmatpush2.msra.mxu0 0.0
        %3948 = vmatprep.subr.mxu0 0.0
        %3949 = vmatpush2.msra.mxu0 0.0
        %3950 = vmatprep.subr.mxu0 0.0
        %3951 = vmatpush2.msra.mxu0 0.0
        %3952 = vmatprep.subr.mxu0 0.0
        %3953 = vmatpush2.msra.mxu0 0.0
        %3954 = vmatprep.subr.mxu0 0.0
        %3955 = vmatpush2.msra.mxu0 0.0
        %3956 = vmatprep.subr.mxu0 0.0
        %3957 = vmatpush2.msra.mxu0 0.0
        %3958 = vmatprep.subr.mxu0 0.0
        %3959 = vmatpush2.msra.mxu0 0.0
        %3960 = vmatprep.subr.mxu0 0.0
        %3961 = vmatpush2.msra.mxu0 0.0
        %3962 = vmatprep.subr.mxu0 0.0
        %3963 = vmatpush2.msra.mxu0 0.0
        %3964 = vmatprep.subr.mxu0 0.0
        %3965 = vmatpush2.msra.mxu0 0.0
        %3966 = vmatprep.mubr.f32.mxu0 0.0
        %3967 = vmatmul.mubr.f32.gmra.mxu0 %v953
        %v3968 = vpop.f32.mrf.mxu0
        %v3969 = vadd.f32 0.0, %v3968
        %v3970 = vpop.f32.mrf.mxu0
        %3971 = vmatprep.mubr.f32.mxu0 0.0
        %3972 = vmatmul.mubr.f32.gmra.mxu0 %v955
        %v3973 = vpop.f32.mrf.mxu0
        %v3974 = vadd.f32 0.0, %v3973
        %v3975 = vpop.f32.mrf.mxu0
        %3976 = vmatprep.mubr.f32.mxu0 0.0
        %3977 = vmatmul.mubr.f32.gmra.mxu0 %v957
        %v3978 = vpop.f32.mrf.mxu0
        %v3979 = vadd.f32 0.0, %v3978
        %v3980 = vpop.f32.mrf.mxu0
        %3981 = vmatprep.mubr.f32.mxu0 0.0
        %3982 = vmatmul.mubr.f32.gmra.mxu0 %v959
        %v3983 = vpop.f32.mrf.mxu0
        %v3984 = vadd.f32 0.0, %v3983
        %v3985 = vpop.f32.mrf.mxu0
        %3986 = vmatprep.mubr.f32.mxu0 0.0
        %3987 = vmatmul.mubr.f32.gmra.mxu0 %v961
        %v3988 = vpop.f32.mrf.mxu0
        %v3989 = vadd.f32 0.0, %v3988
        %v3990 = vpop.f32.mrf.mxu0
        %3991 = vmatprep.mubr.f32.mxu0 0.0
        %3992 = vmatmul.mubr.f32.gmra.mxu0 %v1979
        %v3993 = vpop.f32.mrf.mxu0
        %v3994 = vadd.f32 0.0, %v3993
        %v3995 = vpop.f32.mrf.mxu0
        %3996 = vmatprep.mubr.f32.mxu0 0.0
        %3997 = vmatmul.mubr.f32.gmra.mxu0 %v2938
        %v3998 = vpop.f32.mrf.mxu0
        %v3999 = vadd.f32 0.0, %v3998
        %v4000 = vpop.f32.mrf.mxu0
        %4001 = vmatprep.mubr.f32.mxu0 0.0
        %4002 = vmatmul.mubr.f32.gmra.mxu0 %v3897
        %v4003 = vpop.f32.mrf.mxu0
        %v4004 = vadd.f32 0.0, %v4003
        %v4005 = vpop.f32.mrf.mxu0
        %4006 = vdwg.mxu0
        %v4007 = vadd.f32 %v3887, %v3969
        %v4008 = vadd.f32 %v3888, %v3974
        %v4009 = vadd.f32 %v3889, %v3979
        %v4010 = vadd.f32 %v3890, %v3984
        %v4011 = vadd.f32 %v3891, %v3989
        %v4012 = vadd.f32 %v3892, %v3994
        %v4013 = vadd.f32 %v3893, %v3999
        %v4014 = vadd.f32 %v3894, %v4004
        %v4015 = vrot.slane %v170, 6
        %v4016 = vsel %vm246, %v3056, %v4015
        %v4017 = vsel %vm229, %v4016, 0
        %v4020 = vsel %vm246, %v201, 0
        %4022 = vmatprep.subr.mxu0 0.0
        %4023 = vmatpush1.msra.mxu0 0.0
        %4024 = vmatprep.subr.mxu0 0.0
        %4025 = vmatpush1.msra.mxu0 0.0
        %4026 = vmatprep.subr.mxu0 0.0
        %4027 = vmatpush1.msra.mxu0 0.0
        %4028 = vmatprep.subr.mxu0 0.0
        %4029 = vmatpush1.msra.mxu0 0.0
        %4030 = vmatprep.subr.mxu0 0.0
        %4031 = vmatpush1.msra.mxu0 0.0
        %4032 = vmatprep.subr.mxu0 0.0
        %4033 = vmatpush1.msra.mxu0 0.0
        %4034 = vmatprep.subr.mxu0 0.0
        %4035 = vmatpush1.msra.mxu0 0.0
        %4036 = vmatprep.subr.mxu0 0.0
        %4037 = vmatpush1.msra.mxu0 0.0
        %4038 = vmatprep.subr.mxu0 0.0
        %4039 = vmatpush1.msra.mxu0 0.0
        %4040 = vmatprep.subr.mxu0 0.0
        %4041 = vmatpush1.msra.mxu0 0.0
        %4042 = vmatprep.subr.mxu0 0.0
        %4043 = vmatpush1.msra.mxu0 0.0
        %4044 = vmatprep.subr.mxu0 0.0
        %4045 = vmatpush1.msra.mxu0 0.0
        %4046 = vmatprep.subr.mxu0 0.0
        %4047 = vmatpush1.msra.mxu0 0.0
        %4048 = vmatprep.subr.mxu0 0.0
        %4049 = vmatpush1.msra.mxu0 0.0
        %4050 = vmatprep.subr.mxu0 0.0
        %4051 = vmatpush1.msra.mxu0 0.0
        %4052 = vmatprep.subr.mxu0 0.0
        %4053 = vmatpush1.msra.mxu0 %v4020
        %4054 = vmatprep.subr.mxu0 0.0
        %4055 = vmatpush2.msra.mxu0 0.0
        %4056 = vmatprep.subr.mxu0 0.0
        %4057 = vmatpush2.msra.mxu0 0.0
        %4058 = vmatprep.subr.mxu0 0.0
        %4059 = vmatpush2.msra.mxu0 0.0
        %4060 = vmatprep.subr.mxu0 0.0
        %4061 = vmatpush2.msra.mxu0 0.0
        %4062 = vmatprep.subr.mxu0 0.0
        %4063 = vmatpush2.msra.mxu0 0.0
        %4064 = vmatprep.subr.mxu0 0.0
        %4065 = vmatpush2.msra.mxu0 0.0
        %4066 = vmatprep.subr.mxu0 0.0
        %4067 = vmatpush2.msra.mxu0 0.0
        %4068 = vmatprep.subr.mxu0 0.0
        %4069 = vmatpush2.msra.mxu0 0.0
        %4070 = vmatprep.subr.mxu0 0.0
        %4071 = vmatpush2.msra.mxu0 0.0
        %4072 = vmatprep.subr.mxu0 0.0
        %4073 = vmatpush2.msra.mxu0 0.0
        %4074 = vmatprep.subr.mxu0 0.0
        %4075 = vmatpush2.msra.mxu0 0.0
        %4076 = vmatprep.subr.mxu0 0.0
        %4077 = vmatpush2.msra.mxu0 0.0
        %4078 = vmatprep.subr.mxu0 0.0
        %4079 = vmatpush2.msra.mxu0 0.0
        %4080 = vmatprep.subr.mxu0 0.0
        %4081 = vmatpush2.msra.mxu0 0.0
        %4082 = vmatprep.subr.mxu0 0.0
        %4083 = vmatpush2.msra.mxu0 0.0
        %4084 = vmatprep.subr.mxu0 0.0
        %4085 = vmatpush2.msra.mxu0 0.0
        %4086 = vmatprep.mubr.f32.mxu0 0.0
        %4087 = vmatmul.mubr.f32.gmra.mxu0 %v1102
        %v4088 = vpop.f32.mrf.mxu0
        %v4089 = vadd.f32 0.0, %v4088
        %v4090 = vpop.f32.mrf.mxu0
        %4091 = vmatprep.mubr.f32.mxu0 0.0
        %4092 = vmatmul.mubr.f32.gmra.mxu0 %v1104
        %v4093 = vpop.f32.mrf.mxu0
        %v4094 = vadd.f32 0.0, %v4093
        %v4095 = vpop.f32.mrf.mxu0
        %4096 = vmatprep.mubr.f32.mxu0 0.0
        %4097 = vmatmul.mubr.f32.gmra.mxu0 %v1106
        %v4098 = vpop.f32.mrf.mxu0
        %v4099 = vadd.f32 0.0, %v4098
        %v4100 = vpop.f32.mrf.mxu0
        %4101 = vmatprep.mubr.f32.mxu0 0.0
        %4102 = vmatmul.mubr.f32.gmra.mxu0 %v1108
        %v4103 = vpop.f32.mrf.mxu0
        %v4104 = vadd.f32 0.0, %v4103
        %v4105 = vpop.f32.mrf.mxu0
        %4106 = vmatprep.mubr.f32.mxu0 0.0
        %4107 = vmatmul.mubr.f32.gmra.mxu0 %v1110
        %v4108 = vpop.f32.mrf.mxu0
        %v4109 = vadd.f32 0.0, %v4108
        %v4110 = vpop.f32.mrf.mxu0
        %4111 = vmatprep.mubr.f32.mxu0 0.0
        %4112 = vmatmul.mubr.f32.gmra.mxu0 %v2099
        %v4113 = vpop.f32.mrf.mxu0
        %v4114 = vadd.f32 0.0, %v4113
        %v4115 = vpop.f32.mrf.mxu0
        %4116 = vmatprep.mubr.f32.mxu0 0.0
        %4117 = vmatmul.mubr.f32.gmra.mxu0 %v3058
        %v4118 = vpop.f32.mrf.mxu0
        %v4119 = vadd.f32 0.0, %v4118
        %v4120 = vpop.f32.mrf.mxu0
        %4121 = vmatprep.mubr.f32.mxu0 0.0
        %4122 = vmatmul.mubr.f32.gmra.mxu0 %v4017
        %v4123 = vpop.f32.mrf.mxu0
        %v4124 = vadd.f32 0.0, %v4123
        %v4125 = vpop.f32.mrf.mxu0
        %4126 = vdwg.mxu0
        %v4127 = vadd.f32 %v4007, %v4089
        %v4128 = vadd.f32 %v4008, %v4094
        %v4129 = vadd.f32 %v4009, %v4099
        %v4130 = vadd.f32 %v4010, %v4104
        %v4131 = vadd.f32 %v4011, %v4109
        %v4132 = vadd.f32 %v4012, %v4114
        %v4133 = vadd.f32 %v4013, %v4119
        %v4134 = vadd.f32 %v4014, %v4124
        %4135 = vst [vmem:[%s150] sm:$0xff] %v4127
        %4136 = vst [vmem:[%s150 + $0x8] sm:$0xff] %v4128
        %4137 = vst [vmem:[%s150 + $0x10] sm:$0xff] %v4129
        %4138 = vst [vmem:[%s150 + $0x18] sm:$0xff] %v4130
        %4139 = vst [vmem:[%s150 + $0x20] sm:$0xff] %v4131
        %4140 = vst [vmem:[%s150 + $0x28] sm:$0xff] %v4132
        %4141 = vst [vmem:[%s150 + $0x30] sm:$0xff] %v4133
        %4142 = vst [vmem:[%s150 + $0x38] sm:$0xff] %v4134
        %s4143 = sand.u32 %s85, 1
        %s4144 = scalar_lea.sflag [#allocation3], %s4143
        %s4145 = sand.u32 %s85, 1
        %s4146 = smul.addr %s4145, 64
        %s4147 = scalar_lea.vmem [#allocation2], %s4146
        // Predicated region
        $region29: #{tpu_custom_call.1} parent=27 // pred_check
          %p4148 = pneg %p95
        $region30: #{tpu_custom_call.1} parent=27 // pred_check_branch
          %4150 = sbr.rel (%p4148) target = $region32
        $region31: #{tpu_custom_call.1} parent=27 // pred_region
          %s4151 = smul.u32 8, %s21
          %s4153 = ssub.s32 1024, 1024
          %4154 = vsyncadd %s4144, %s4153
          %s4155 = smul.addr %s20, 8
          %s4156 = sadd.s32 %s4151, %s4155
          %s4157 = smul.addr %s4156, 128
          %s4158 = scalar_lea.hbm %s2, %s4157
          %s4159 = sshll.u32 %s4147, 4
          %s4160 = int_to_ptr.vmem [resolvable:$true] %s4159
          %4165 = dma.vmem_to_hbm [thread:$0]  %s4160, 1024, %s4158, %s4144, 128, 128, 8
        $region32: #{tpu_custom_call.1} parent=27 // pred_fallthru
          _
      $region28: #{tpu_custom_call.1} parent=5 // pred_fallthru
        _
      %p4166 = scmp.le.s32.totalorder 2, %s11
      // Predicated region
      $region33: #{tpu_custom_call.1} parent=5 // pred_check
        %p4167 = pneg %p4166
      $region34: #{tpu_custom_call.1} parent=5 // pred_check_branch
        %4169 = sbr.rel (%p4167) target = $region36
      $region35: #{tpu_custom_call.1} parent=5 // pred_region
        %s4170 = ssub.s32 %s11, 2
        // Predicated region
        $region37: #{tpu_custom_call.1} parent=35 // pred_check
          %p4171 = pneg %p101
        $region38: #{tpu_custom_call.1} parent=35 // pred_check_branch
          %4173 = sbr.rel (%p4171) target = $region40
        $region39: #{tpu_custom_call.1} parent=35 // pred_region
          %s4174 = sand.u32 %s86, 1
          %s4175 = scalar_lea.sflag [#allocation3], %s4174
          %s4176 = sand.u32 %s86, 1
          %s4177 = smul.addr %s4176, 64
          %s4178 = scalar_lea.vmem [#allocation2], %s4177
          %4179 = dma.done %s4175, 1024
        $region40: #{tpu_custom_call.1} parent=35 // pred_fallthru
          _
      $region36: #{tpu_custom_call.1} parent=5 // pred_fallthru
        _
    $region6: #{tpu_custom_call.1} parent=1 // loop_footer
      %s15 = sadd.s32 1, %s11
    $region7: #{tpu_custom_call.1} parent=1 // loop_footer_branch
      %10 = sbr.rel target = $region3
    $region8: #{tpu_custom_call.1} parent=1 // loop_exit
      _
    %4180 = vsyncpa [#allocation3], 1
    %s4181 = scalar_lea.sflag [#allocation3], 1
    %4182 = vsyncpa %s4181, 1

</llo_original>
